<compile_context>
chip_gen: v7x
topology: tpu7x:2x2x1
jax: 0.10.0
libtpu: 0.0.40
codegen_flags: <defaults>
</compile_context>

<pallas_src>
import functools

import jax
import jax.numpy as jnp
from jax.experimental import pallas as pl
from jax.experimental.pallas import tpu as pltpu

# ----------------------------- model hyper-params ---------------------------
NUM_LAYERS = 2      # nn.LSTM(num_layers=2)
HIDDEN = 128        # lstm_size / embedding_dim (TPU-aligned stand-in for 200)
EMBED = HIDDEN
VOCAB = 256
SEQ_LEN = 8
BATCH = 8


# ----------------------------- fused forward kernel -------------------------
def _nlp_fused_kernel(tok_ref, emb_ref,
                      wih0_ref, whh0_ref, b0_ref,
                      w1cat_hbm, b1_ref,
                      fcw_hbm, fcb_ref,
                      h0_ref, c0_ref,
                      logits_ref, hN_ref, cN_ref,
                      g_scr, y_scr, w1_vmem, fcw_vmem, dma_sems,
                      *, seq_len, batch, hidden, vocab):
    """Whole forward in one kernel: embed -> wavefronted LSTM0/LSTM1 -> FC."""
    tb = seq_len * batch
    h_dim = hidden

    # ---- kick off deferred weight DMAs (overlap with embed + layer-0) ------
    w1_cp = pltpu.make_async_copy(w1cat_hbm, w1_vmem, dma_sems.at[0])
    fc_cp = pltpu.make_async_copy(fcw_hbm, fcw_vmem, dma_sems.at[1])
    w1_cp.start()
    fc_cp.start()

    # ---- embedding lookup as a bf16 one-hot matmul (exact row selection) ---
    tok = tok_ref[...]                                            # (T*B, 1) i32
    ids = jax.lax.broadcasted_iota(jnp.int32, (tb, vocab), 1)     # (T*B, V)
    onehot = (ids == tok).astype(jnp.bfloat16)                    # (T*B, V) bf16
    x = jnp.dot(onehot, emb_ref[...],
                preferred_element_type=jnp.float32)               # (T*B, E) f32

    # ---- layer-0 batched input projection for ALL timesteps (one matmul) ---
    g_scr[...] = (jnp.dot(x.astype(jnp.bfloat16), wih0_ref[...],
                          preferred_element_type=jnp.float32)
                  + b0_ref[...])                                  # (T*B, 4H) f32

    def gates_to_hc(gates, c):
        i_g = jax.nn.sigmoid(gates[:, 0 * h_dim:1 * h_dim])
        f_g = jax.nn.sigmoid(gates[:, 1 * h_dim:2 * h_dim])
        g_g = jnp.tanh(gates[:, 2 * h_dim:3 * h_dim])
        o_g = jax.nn.sigmoid(gates[:, 3 * h_dim:4 * h_dim])
        c_new = f_g * c + i_g * g_g
        h_new = o_g * jnp.tanh(c_new)
        return h_new, c_new

    def l0_step(t, h, c):
        # Read whh0_ref directly per step (no vreg hoist of the weight matrix).
        gates = g_scr[pl.ds(t * batch, batch), :] + jnp.dot(
            h.astype(jnp.bfloat16), whh0_ref[...],
            preferred_element_type=jnp.float32)                   # (B, 4H)
        return gates_to_hc(gates, c)

    def l1_step(x1, h, c):
        # One K=2H matmul: [x1, h] @ [[W_ih1],[W_hh1]]  (fills MXU depth on
        # v6e/v7x; on v5e this is 2 K-passes — acceptable for the shorter
        # dependent chain).
        xh = jnp.concatenate([x1, h], axis=-1).astype(jnp.bfloat16)  # (B, 2H)
        gates = (jnp.dot(xh, w1_vmem[...],
                         preferred_element_type=jnp.float32)
                 + b1_ref[...])                                   # (B, 4H)
        return gates_to_hc(gates, c)

    h0 = h0_ref[0]
    c0 = c0_ref[0]
    h1 = h0_ref[1]
    c1 = c0_ref[1]

    # ---- wavefront: layer-0 step t and layer-1 step t-1 per wave -----------
    h0, c0 = l0_step(0, h0, c0)          # prologue: layer-0 step 0
    y_prev = h0
    w1_cp.wait()                         # layer-1 weights needed from here on
    for t in range(1, seq_len):          # fully unrolled (T is static)
        h0n, c0n = l0_step(t, h0, c0)    # layer-0 step t      (independent of
        h1, c1 = l1_step(y_prev, h1, c1)  # layer-1 step t-1     each other)
        y_scr[pl.ds((t - 1) * batch, batch), :] = h1
        h0, c0 = h0n, c0n
        y_prev = h0
    h1, c1 = l1_step(y_prev, h1, c1)     # epilogue: layer-1 step T-1
    y_scr[pl.ds((seq_len - 1) * batch, batch), :] = h1

    # Final states written once per layer.
    hN_ref[0] = h0
    cN_ref[0] = c0
    hN_ref[1] = h1
    cN_ref[1] = c1

    # ---- vocab projection: one (T*B, H) @ (H, V) matmul, lane-dense store ---
    fc_cp.wait()
    logits_ref[...] = (jnp.dot(y_scr[...].astype(jnp.bfloat16), fcw_vmem[...],
                               preferred_element_type=jnp.float32)
                       + fcb_ref[...])


def nlp_model_forward(kparams, x_tokens, prev_state):
    """x_tokens: int32 (T, B); returns (logits (T,B,V), (h (L,B,H), c (L,B,H)))."""
    T, B = x_tokens.shape
    H, V, L = HIDDEN, VOCAB, NUM_LAYERS
    h0s, c0s = prev_state

    kernel = functools.partial(_nlp_fused_kernel,
                               seq_len=T, batch=B, hidden=H, vocab=V)
    vmem = pl.BlockSpec(memory_space=pltpu.MemorySpace.VMEM)
    hbm = pl.BlockSpec(memory_space=pl.ANY)   # stays in HBM; manual async DMA

    logits_flat, hN, cN = pl.pallas_call(
        kernel,
        out_shape=(jax.ShapeDtypeStruct((T * B, V), jnp.float32),
                   jax.ShapeDtypeStruct((L, B, H), jnp.float32),
                   jax.ShapeDtypeStruct((L, B, H), jnp.float32)),
        in_specs=[vmem,                 # tokens
                  vmem,                 # embedding table (bf16)
                  vmem, vmem, vmem,     # W_ih0, W_hh0, b0
                  hbm,                  # stacked [W_ih1; W_hh1]  (deferred DMA)
                  vmem,                 # b1
                  hbm,                  # fc_w                   (deferred DMA)
                  vmem,                 # fc_b
                  vmem, vmem],          # h0, c0
        scratch_shapes=[pltpu.VMEM((T * B, 4 * H), jnp.float32),   # layer-0 gate pre-acts
                        pltpu.VMEM((T * B, H), jnp.float32),       # layer-1 outputs
                        pltpu.VMEM((2 * H, 4 * H), jnp.bfloat16),  # staged layer-1 weights
                        pltpu.VMEM((H, V), jnp.bfloat16),          # staged fc weights
                        pltpu.SemaphoreType.DMA((2,))],
    )(x_tokens.reshape(T * B, 1),
      kparams["embedding"],
      kparams["w_ih_0"], kparams["w_hh_0"], kparams["b_0"],
      kparams["w_1_cat"], kparams["b_1"],
      kparams["fc_w"], kparams["fc_b"],
      h0s, c0s)
    return logits_flat.reshape(T, B, V), (hN, cN)


# ----------------------------- parameter init / prep ------------------------
def init_params(key, vocab, embed, hidden, num_layers):
    keys = jax.random.split(key, 3 + 4 * num_layers)
    params = {"embedding": jax.random.normal(keys[0], (vocab, embed), jnp.float32) * 0.1,
              "fc_w": jax.random.normal(keys[1], (hidden, vocab), jnp.float32) * 0.05,
              "fc_b": jax.random.normal(keys[2], (vocab,), jnp.float32) * 0.01}
    k = 3
    for l in range(num_layers):
        h_in = embed if l == 0 else hidden
        params[f"w_ih_{l}"] = jax.random.normal(keys[k + 0], (h_in, 4 * hidden), jnp.float32) * 0.05
        params[f"w_hh_{l}"] = jax.random.normal(keys[k + 1], (hidden, 4 * hidden), jnp.float32) * 0.05
        b_ih = jax.random.normal(keys[k + 2], (4 * hidden,), jnp.float32) * 0.01
        b_hh = jax.random.normal(keys[k + 3], (4 * hidden,), jnp.float32) * 0.01
        params[f"b_{l}"] = (b_ih + b_hh).reshape(1, 4 * hidden)   # PyTorch fuses b_ih+b_hh
        k += 4
    return params


def prepare_kernel_params(params):
    """bf16 matmul operands (f32 biases) + pre-stacked layer-1 weights."""
    return {
        "embedding": params["embedding"].astype(jnp.bfloat16),
        "w_ih_0": params["w_ih_0"].astype(jnp.bfloat16),
        "w_hh_0": params["w_hh_0"].astype(jnp.bfloat16),
        "b_0": params["b_0"],
        # [x; h] @ [[W_ih1],[W_hh1]] == x @ W_ih1 + h @ W_hh1
        "w_1_cat": jnp.concatenate([params["w_ih_1"], params["w_hh_1"]],
                                   axis=0).astype(jnp.bfloat16),
        "b_1": params["b_1"],
        "fc_w": params["fc_w"].astype(jnp.bfloat16),
        "fc_b": params["fc_b"].reshape(1, VOCAB),
    }


def init_state(batch=BATCH, num_layers=NUM_LAYERS, hidden=HIDDEN):
    # (the PyTorch module names this dim "sequence_length", but nn.LSTM treats
    #  it as the batch dimension of the state)
    return (jnp.zeros((num_layers, batch, hidden), jnp.float32),
            jnp.zeros((num_layers, batch, hidden), jnp.float32))


# ----------------------------- pure-JAX reference ----------------------------
def nlp_model_reference(kparams, x_tokens, prev_state):
    """Same math (bf16 matmul operands, f32 accumulate/elementwise) in plain JAX."""
    T, B = x_tokens.shape
    H = HIDDEN
    x = kparams["embedding"][x_tokens.reshape(-1)].astype(jnp.float32)   # (T*B, E)
    g0 = (jnp.dot(x.astype(jnp.bfloat16), kparams["w_ih_0"],
                  preferred_element_type=jnp.float32) + kparams["b_0"])

    def cell(gates, c):
        i_g = jax.nn.sigmoid(gates[:, 0 * H:1 * H])
        f_g = jax.nn.sigmoid(gates[:, 1 * H:2 * H])
        g_g = jnp.tanh(gates[:, 2 * H:3 * H])
        o_g = jax.nn.sigmoid(gates[:, 3 * H:4 * H])
        c_new = f_g * c + i_g * g_g
        return o_g * jnp.tanh(c_new), c_new

    h0s, c0s = prev_state
    h0, c0 = h0s[0], c0s[0]
    h1, c1 = h0s[1], c0s[1]
    ys = []
    for t in range(T):
        gates0 = g0[t * B:(t + 1) * B] + jnp.dot(
            h0.astype(jnp.bfloat16), kparams["w_hh_0"],
            preferred_element_type=jnp.float32)
        h0, c0 = cell(gates0, c0)
        xh = jnp.concatenate([h0, h1], axis=-1).astype(jnp.bfloat16)
        gates1 = jnp.dot(xh, kparams["w_1_cat"],
                         preferred_element_type=jnp.float32) + kparams["b_1"]
        h1, c1 = cell(gates1, c1)
        ys.append(h1)
    y = jnp.concatenate(ys, axis=0)                                      # (T*B, H)
    logits = (jnp.dot(y.astype(jnp.bfloat16), kparams["fc_w"],
                      preferred_element_type=jnp.float32) + kparams["fc_b"])
    return logits.reshape(T, B, VOCAB), (jnp.stack([h0, h1]), jnp.stack([c0, c1]))


# ----------------------------- main ------------------------------------------
if __name__ == "__main__":
    key = jax.random.PRNGKey(0)
    pkey, xkey = jax.random.split(key)
    raw_params = init_params(pkey, VOCAB, EMBED, HIDDEN, NUM_LAYERS)
    kparams = prepare_kernel_params(raw_params)

    x = jax.random.randint(xkey, (SEQ_LEN, BATCH), 0, VOCAB, dtype=jnp.int32)
    state0 = init_state()

    fwd = jax.jit(nlp_model_forward)
    logits, (h, c) = fwd(kparams, x, state0)
    jax.block_until_ready((logits, h, c))

    assert logits.shape == (SEQ_LEN, BATCH, VOCAB)
    assert h.shape == (NUM_LAYERS, BATCH, HIDDEN)
    assert c.shape == (NUM_LAYERS, BATCH, HIDDEN)

    # Correctness check against a pure-JAX reference of the same (bf16-operand,
    # f32-accumulate) math.  Tolerance loosened vs. the f32 version per review.
    ref_logits, (ref_h, ref_c) = nlp_model_reference(kparams, x, state0)
    assert bool(jnp.allclose(logits, ref_logits, atol=5e-3, rtol=5e-3)), \
        f"logits mismatch: {float(jnp.max(jnp.abs(logits - ref_logits)))}"
    assert bool(jnp.allclose(h, ref_h, atol=5e-3, rtol=5e-3)), \
        f"h mismatch: {float(jnp.max(jnp.abs(h - ref_h)))}"
    assert bool(jnp.allclose(c, ref_c, atol=5e-3, rtol=5e-3)), \
        f"c mismatch: {float(jnp.max(jnp.abs(c - ref_c)))}"

    print("KERNEL_OK")
</pallas_src>

<mosaic_0001>
module attributes {stable_mosaic.version = 11 : i64} {
  func.func @_nlp_fused_kernel(%arg0: memref<64x1xi32, #tpu.memory_space<vmem>>, %arg1: memref<256x128xbf16, #tpu.memory_space<vmem>>, %arg2: memref<128x512xbf16, #tpu.memory_space<vmem>>, %arg3: memref<128x512xbf16, #tpu.memory_space<vmem>>, %arg4: memref<1x512xf32, #tpu.memory_space<vmem>>, %arg5: memref<256x512xbf16, #tpu.memory_space<any>>, %arg6: memref<1x512xf32, #tpu.memory_space<vmem>>, %arg7: memref<128x256xbf16, #tpu.memory_space<any>>, %arg8: memref<1x256xf32, #tpu.memory_space<vmem>>, %arg9: memref<2x8x128xf32, #tpu.memory_space<vmem>>, %arg10: memref<2x8x128xf32, #tpu.memory_space<vmem>>, %arg11: memref<64x256xf32, #tpu.memory_space<vmem>>, %arg12: memref<2x8x128xf32, #tpu.memory_space<vmem>>, %arg13: memref<2x8x128xf32, #tpu.memory_space<vmem>>, %arg14: memref<64x512xf32, #tpu.memory_space<vmem>>, %arg15: memref<64x128xf32, #tpu.memory_space<vmem>>, %arg16: memref<256x512xbf16, #tpu.memory_space<vmem>>, %arg17: memref<128x256xbf16, #tpu.memory_space<vmem>>, %arg18: memref<2x!tpu.dma_semaphore, #tpu.memory_space<semaphore_mem>>) attributes {dimension_semantics = [], scalar_prefetch = 0 : i64, scratch_operands = 5 : i64, tpu.core_type = #tpu.core_type<tc>} {
    %c0_i32 = arith.constant 0 : i32
    %0 = tpu.memref_slice %arg18[%c0_i32] : memref<2x!tpu.dma_semaphore, #tpu.memory_space<semaphore_mem>> -> memref<1x!tpu.dma_semaphore, #tpu.memory_space<semaphore_mem>>
    %1 = tpu.memref_squeeze %0 : memref<1x!tpu.dma_semaphore, #tpu.memory_space<semaphore_mem>> -> memref<!tpu.dma_semaphore, #tpu.memory_space<semaphore_mem>>
    tpu.enqueue_dma source(%arg5 : memref<256x512xbf16, #tpu.memory_space<any>>) target(%arg16 : memref<256x512xbf16, #tpu.memory_space<vmem>>) target_semaphore(%1 : memref<!tpu.dma_semaphore, #tpu.memory_space<semaphore_mem>>)
    %c1_i32 = arith.constant 1 : i32
    %2 = tpu.memref_slice %arg18[%c1_i32] : memref<2x!tpu.dma_semaphore, #tpu.memory_space<semaphore_mem>> -> memref<1x!tpu.dma_semaphore, #tpu.memory_space<semaphore_mem>>
    %3 = tpu.memref_squeeze %2 : memref<1x!tpu.dma_semaphore, #tpu.memory_space<semaphore_mem>> -> memref<!tpu.dma_semaphore, #tpu.memory_space<semaphore_mem>>
    tpu.enqueue_dma source(%arg7 : memref<128x256xbf16, #tpu.memory_space<any>>) target(%arg17 : memref<128x256xbf16, #tpu.memory_space<vmem>>) target_semaphore(%3 : memref<!tpu.dma_semaphore, #tpu.memory_space<semaphore_mem>>)
    %c0 = arith.constant 0 : index
    %c0_0 = arith.constant 0 : index
    %4 = vector.load %arg0[%c0, %c0_0] : memref<64x1xi32, #tpu.memory_space<vmem>>, vector<64x1xi32>
    %5 = tpu.iota {dimensions = array<i32: 1>} : vector<64x256xi32>
    %6 = vector.broadcast %4 : vector<64x1xi32> to vector<64x256xi32>
    %7 = arith.cmpi eq, %5, %6 : vector<64x256xi32>
    %8 = arith.extui %7 : vector<64x256xi1> to vector<64x256xi32>
    %9 = arith.sitofp %8 : vector<64x256xi32> to vector<64x256xf32>
    %10 = arith.truncf %9 : vector<64x256xf32> to vector<64x256xbf16>
    %c0_1 = arith.constant 0 : index
    %c0_2 = arith.constant 0 : index
    %11 = vector.load %arg1[%c0_1, %c0_2] : memref<256x128xbf16, #tpu.memory_space<vmem>>, vector<256x128xbf16>
    %cst = arith.constant dense<0.000000e+00> : vector<64x128xf32>
    %12 = tpu.matmul %10, %11, %cst {dimension_numbers = #tpu.dot_dimension_numbers<[1], [0], [0], [1], [0, 0, 1, 1], [], []>} : vector<64x256xbf16>, vector<256x128xbf16>, vector<64x128xf32> -> vector<64x128xf32>
    %13 = arith.truncf %12 : vector<64x128xf32> to vector<64x128xbf16>
    %c0_3 = arith.constant 0 : index
    %c0_4 = arith.constant 0 : index
    %14 = vector.load %arg2[%c0_3, %c0_4] : memref<128x512xbf16, #tpu.memory_space<vmem>>, vector<128x512xbf16>
    %cst_5 = arith.constant dense<0.000000e+00> : vector<64x512xf32>
    %15 = tpu.matmul %13, %14, %cst_5 {dimension_numbers = #tpu.dot_dimension_numbers<[1], [0], [0], [1], [0, 0, 1, 1], [], []>} : vector<64x128xbf16>, vector<128x512xbf16>, vector<64x512xf32> -> vector<64x512xf32>
    %c0_6 = arith.constant 0 : index
    %c0_7 = arith.constant 0 : index
    %16 = vector.load %arg4[%c0_6, %c0_7] : memref<1x512xf32, #tpu.memory_space<vmem>>, vector<1x512xf32>
    %17 = vector.broadcast %16 : vector<1x512xf32> to vector<64x512xf32>
    %18 = arith.addf %15, %17 : vector<64x512xf32>
    %c0_8 = arith.constant 0 : index
    %c0_9 = arith.constant 0 : index
    %19 = vector.load %arg14[%c0_8, %c0_9] : memref<64x512xf32, #tpu.memory_space<vmem>>, vector<64x512xf32>
    tpu.vector_store %arg14[%c0_8, %c0_9], %18 {strides = array<i32>} : memref<64x512xf32, #tpu.memory_space<vmem>>, vector<64x512xf32>,
    %c0_10 = arith.constant 0 : index
    %c0_11 = arith.constant 0 : index
    %c0_12 = arith.constant 0 : index
    %20 = vector.load %arg9[%c0_10, %c0_11, %c0_12] : memref<2x8x128xf32, #tpu.memory_space<vmem>>, vector<1x8x128xf32>
    %21 = vector.shape_cast %20 : vector<1x8x128xf32> to vector<8x128xf32>
    %c0_13 = arith.constant 0 : index
    %c0_14 = arith.constant 0 : index
    %c0_15 = arith.constant 0 : index
    %22 = vector.load %arg10[%c0_13, %c0_14, %c0_15] : memref<2x8x128xf32, #tpu.memory_space<vmem>>, vector<1x8x128xf32>
    %23 = vector.shape_cast %22 : vector<1x8x128xf32> to vector<8x128xf32>
    %c1 = arith.constant 1 : index
    %c0_16 = arith.constant 0 : index
    %c0_17 = arith.constant 0 : index
    %24 = vector.load %arg9[%c1, %c0_16, %c0_17] : memref<2x8x128xf32, #tpu.memory_space<vmem>>, vector<1x8x128xf32>
    %25 = vector.shape_cast %24 : vector<1x8x128xf32> to vector<8x128xf32>
    %c1_18 = arith.constant 1 : index
    %c0_19 = arith.constant 0 : index
    %c0_20 = arith.constant 0 : index
    %26 = vector.load %arg10[%c1_18, %c0_19, %c0_20] : memref<2x8x128xf32, #tpu.memory_space<vmem>>, vector<1x8x128xf32>
    %27 = vector.shape_cast %26 : vector<1x8x128xf32> to vector<8x128xf32>
    %c0_21 = arith.constant 0 : index
    %c0_22 = arith.constant 0 : index
    %28 = vector.load %arg14[%c0_21, %c0_22] : memref<64x512xf32, #tpu.memory_space<vmem>>, vector<8x512xf32>
    %29 = arith.truncf %21 : vector<8x128xf32> to vector<8x128xbf16>
    %c0_23 = arith.constant 0 : index
    %c0_24 = arith.constant 0 : index
    %30 = vector.load %arg3[%c0_23, %c0_24] : memref<128x512xbf16, #tpu.memory_space<vmem>>, vector<128x512xbf16>
    %cst_25 = arith.constant dense<0.000000e+00> : vector<8x512xf32>
    %31 = tpu.matmul %29, %30, %cst_25 {dimension_numbers = #tpu.dot_dimension_numbers<[1], [0], [0], [1], [0, 0, 1, 1], [], []>} : vector<8x128xbf16>, vector<128x512xbf16>, vector<8x512xf32> -> vector<8x512xf32>
    %32 = arith.addf %28, %31 : vector<8x512xf32>
    %33 = vector.extract_strided_slice %32 {offsets = [0, 0], sizes = [8, 128], strides = [1, 1]} : vector<8x512xf32> to vector<8x128xf32>
    %34 = arith.negf %33 : vector<8x128xf32>
    %35 = math.exp %34 : vector<8x128xf32>
    %cst_26 = arith.constant 1.000000e+00 : f32
    %36 = vector.broadcast %cst_26 : f32 to vector<8x128xf32>
    %37 = arith.addf %36, %35 : vector<8x128xf32>
    %38 = arith.divf %36, %37 : vector<8x128xf32>
    %39 = vector.extract_strided_slice %32 {offsets = [0, 128], sizes = [8, 128], strides = [1, 1]} : vector<8x512xf32> to vector<8x128xf32>
    %40 = arith.negf %39 : vector<8x128xf32>
    %41 = math.exp %40 : vector<8x128xf32>
    %cst_27 = arith.constant 1.000000e+00 : f32
    %42 = vector.broadcast %cst_27 : f32 to vector<8x128xf32>
    %43 = arith.addf %42, %41 : vector<8x128xf32>
    %44 = arith.divf %42, %43 : vector<8x128xf32>
    %45 = vector.extract_strided_slice %32 {offsets = [0, 256], sizes = [8, 128], strides = [1, 1]} : vector<8x512xf32> to vector<8x128xf32>
    %46 = math.tanh %45 : vector<8x128xf32>
    %47 = vector.extract_strided_slice %32 {offsets = [0, 384], sizes = [8, 128], strides = [1, 1]} : vector<8x512xf32> to vector<8x128xf32>
    %48 = arith.negf %47 : vector<8x128xf32>
    %49 = math.exp %48 : vector<8x128xf32>
    %cst_28 = arith.constant 1.000000e+00 : f32
    %50 = vector.broadcast %cst_28 : f32 to vector<8x128xf32>
    %51 = arith.addf %50, %49 : vector<8x128xf32>
    %52 = arith.divf %50, %51 : vector<8x128xf32>
    %53 = arith.mulf %44, %23 : vector<8x128xf32>
    %54 = arith.mulf %38, %46 : vector<8x128xf32>
    %55 = arith.addf %53, %54 : vector<8x128xf32>
    %56 = math.tanh %55 : vector<8x128xf32>
    %57 = arith.mulf %52, %56 : vector<8x128xf32>
    %c0_i32_29 = arith.constant 0 : i32
    %58 = tpu.memref_slice %arg18[%c0_i32_29] : memref<2x!tpu.dma_semaphore, #tpu.memory_space<semaphore_mem>> -> memref<1x!tpu.dma_semaphore, #tpu.memory_space<semaphore_mem>>
    %59 = tpu.memref_squeeze %58 : memref<1x!tpu.dma_semaphore, #tpu.memory_space<semaphore_mem>> -> memref<!tpu.dma_semaphore, #tpu.memory_space<semaphore_mem>>
    tpu.wait_dma2 semaphore(%59 : memref<!tpu.dma_semaphore, #tpu.memory_space<semaphore_mem>>) src(%arg5 : memref<256x512xbf16, #tpu.memory_space<any>>) dst(%arg16 : memref<256x512xbf16, #tpu.memory_space<vmem>>)
    %c8 = arith.constant 8 : index
    %c0_30 = arith.constant 0 : index
    %60 = vector.load %arg14[%c8, %c0_30] : memref<64x512xf32, #tpu.memory_space<vmem>>, vector<8x512xf32>
    %61 = arith.truncf %57 : vector<8x128xf32> to vector<8x128xbf16>
    %c0_31 = arith.constant 0 : index
    %c0_32 = arith.constant 0 : index
    %62 = vector.load %arg3[%c0_31, %c0_32] : memref<128x512xbf16, #tpu.memory_space<vmem>>, vector<128x512xbf16>
    %cst_33 = arith.constant dense<0.000000e+00> : vector<8x512xf32>
    %63 = tpu.matmul %61, %62, %cst_33 {dimension_numbers = #tpu.dot_dimension_numbers<[1], [0], [0], [1], [0, 0, 1, 1], [], []>} : vector<8x128xbf16>, vector<128x512xbf16>, vector<8x512xf32> -> vector<8x512xf32>
    %64 = arith.addf %60, %63 : vector<8x512xf32>
    %65 = vector.extract_strided_slice %64 {offsets = [0, 0], sizes = [8, 128], strides = [1, 1]} : vector<8x512xf32> to vector<8x128xf32>
    %66 = arith.negf %65 : vector<8x128xf32>
    %67 = math.exp %66 : vector<8x128xf32>
    %cst_34 = arith.constant 1.000000e+00 : f32
    %68 = vector.broadcast %cst_34 : f32 to vector<8x128xf32>
    %69 = arith.addf %68, %67 : vector<8x128xf32>
    %70 = arith.divf %68, %69 : vector<8x128xf32>
    %71 = vector.extract_strided_slice %64 {offsets = [0, 128], sizes = [8, 128], strides = [1, 1]} : vector<8x512xf32> to vector<8x128xf32>
    %72 = arith.negf %71 : vector<8x128xf32>
    %73 = math.exp %72 : vector<8x128xf32>
    %cst_35 = arith.constant 1.000000e+00 : f32
    %74 = vector.broadcast %cst_35 : f32 to vector<8x128xf32>
    %75 = arith.addf %74, %73 : vector<8x128xf32>
    %76 = arith.divf %74, %75 : vector<8x128xf32>
    %77 = vector.extract_strided_slice %64 {offsets = [0, 256], sizes = [8, 128], strides = [1, 1]} : vector<8x512xf32> to vector<8x128xf32>
    %78 = math.tanh %77 : vector<8x128xf32>
    %79 = vector.extract_strided_slice %64 {offsets = [0, 384], sizes = [8, 128], strides = [1, 1]} : vector<8x512xf32> to vector<8x128xf32>
    %80 = arith.negf %79 : vector<8x128xf32>
    %81 = math.exp %80 : vector<8x128xf32>
    %cst_36 = arith.constant 1.000000e+00 : f32
    %82 = vector.broadcast %cst_36 : f32 to vector<8x128xf32>
    %83 = arith.addf %82, %81 : vector<8x128xf32>
    %84 = arith.divf %82, %83 : vector<8x128xf32>
    %85 = arith.mulf %76, %55 : vector<8x128xf32>
    %86 = arith.mulf %70, %78 : vector<8x128xf32>
    %87 = arith.addf %85, %86 : vector<8x128xf32>
    %88 = math.tanh %87 : vector<8x128xf32>
    %89 = arith.mulf %84, %88 : vector<8x128xf32>
    %90 = tpu.concatenate %57, %25 in 1 : vector<8x128xf32>, vector<8x128xf32> -> vector<8x256xf32>
    %91 = arith.truncf %90 : vector<8x256xf32> to vector<8x256xbf16>
    %c0_37 = arith.constant 0 : index
    %c0_38 = arith.constant 0 : index
    %92 = vector.load %arg16[%c0_37, %c0_38] : memref<256x512xbf16, #tpu.memory_space<vmem>>, vector<256x512xbf16>
    %cst_39 = arith.constant dense<0.000000e+00> : vector<8x512xf32>
    %93 = tpu.matmul %91, %92, %cst_39 {dimension_numbers = #tpu.dot_dimension_numbers<[1], [0], [0], [1], [0, 0, 1, 1], [], []>} : vector<8x256xbf16>, vector<256x512xbf16>, vector<8x512xf32> -> vector<8x512xf32>
    %c0_40 = arith.constant 0 : index
    %c0_41 = arith.constant 0 : index
    %94 = vector.load %arg6[%c0_40, %c0_41] : memref<1x512xf32, #tpu.memory_space<vmem>>, vector<1x512xf32>
    %95 = vector.broadcast %94 : vector<1x512xf32> to vector<8x512xf32>
    %96 = arith.addf %93, %95 : vector<8x512xf32>
    %97 = vector.extract_strided_slice %96 {offsets = [0, 0], sizes = [8, 128], strides = [1, 1]} : vector<8x512xf32> to vector<8x128xf32>
    %98 = arith.negf %97 : vector<8x128xf32>
    %99 = math.exp %98 : vector<8x128xf32>
    %cst_42 = arith.constant 1.000000e+00 : f32
    %100 = vector.broadcast %cst_42 : f32 to vector<8x128xf32>
    %101 = arith.addf %100, %99 : vector<8x128xf32>
    %102 = arith.divf %100, %101 : vector<8x128xf32>
    %103 = vector.extract_strided_slice %96 {offsets = [0, 128], sizes = [8, 128], strides = [1, 1]} : vector<8x512xf32> to vector<8x128xf32>
    %104 = arith.negf %103 : vector<8x128xf32>
    %105 = math.exp %104 : vector<8x128xf32>
    %cst_43 = arith.constant 1.000000e+00 : f32
    %106 = vector.broadcast %cst_43 : f32 to vector<8x128xf32>
    %107 = arith.addf %106, %105 : vector<8x128xf32>
    %108 = arith.divf %106, %107 : vector<8x128xf32>
    %109 = vector.extract_strided_slice %96 {offsets = [0, 256], sizes = [8, 128], strides = [1, 1]} : vector<8x512xf32> to vector<8x128xf32>
    %110 = math.tanh %109 : vector<8x128xf32>
    %111 = vector.extract_strided_slice %96 {offsets = [0, 384], sizes = [8, 128], strides = [1, 1]} : vector<8x512xf32> to vector<8x128xf32>
    %112 = arith.negf %111 : vector<8x128xf32>
    %113 = math.exp %112 : vector<8x128xf32>
    %cst_44 = arith.constant 1.000000e+00 : f32
    %114 = vector.broadcast %cst_44 : f32 to vector<8x128xf32>
    %115 = arith.addf %114, %113 : vector<8x128xf32>
    %116 = arith.divf %114, %115 : vector<8x128xf32>
    %117 = arith.mulf %108, %27 : vector<8x128xf32>
    %118 = arith.mulf %102, %110 : vector<8x128xf32>
    %119 = arith.addf %117, %118 : vector<8x128xf32>
    %120 = math.tanh %119 : vector<8x128xf32>
    %121 = arith.mulf %116, %120 : vector<8x128xf32>
    %c0_45 = arith.constant 0 : index
    %c0_46 = arith.constant 0 : index
    %122 = vector.load %arg15[%c0_45, %c0_46] : memref<64x128xf32, #tpu.memory_space<vmem>>, vector<8x128xf32>
    tpu.vector_store %arg15[%c0_45, %c0_46], %121 {strides = array<i32>} : memref<64x128xf32, #tpu.memory_space<vmem>>, vector<8x128xf32>,
    %c16 = arith.constant 16 : index
    %c0_47 = arith.constant 0 : index
    %123 = vector.load %arg14[%c16, %c0_47] : memref<64x512xf32, #tpu.memory_space<vmem>>, vector<8x512xf32>
    %124 = arith.truncf %89 : vector<8x128xf32> to vector<8x128xbf16>
    %c0_48 = arith.constant 0 : index
    %c0_49 = arith.constant 0 : index
    %125 = vector.load %arg3[%c0_48, %c0_49] : memref<128x512xbf16, #tpu.memory_space<vmem>>, vector<128x512xbf16>
    %cst_50 = arith.constant dense<0.000000e+00> : vector<8x512xf32>
    %126 = tpu.matmul %124, %125, %cst_50 {dimension_numbers = #tpu.dot_dimension_numbers<[1], [0], [0], [1], [0, 0, 1, 1], [], []>} : vector<8x128xbf16>, vector<128x512xbf16>, vector<8x512xf32> -> vector<8x512xf32>
    %127 = arith.addf %123, %126 : vector<8x512xf32>
    %128 = vector.extract_strided_slice %127 {offsets = [0, 0], sizes = [8, 128], strides = [1, 1]} : vector<8x512xf32> to vector<8x128xf32>
    %129 = arith.negf %128 : vector<8x128xf32>
    %130 = math.exp %129 : vector<8x128xf32>
    %cst_51 = arith.constant 1.000000e+00 : f32
    %131 = vector.broadcast %cst_51 : f32 to vector<8x128xf32>
    %132 = arith.addf %131, %130 : vector<8x128xf32>
    %133 = arith.divf %131, %132 : vector<8x128xf32>
    %134 = vector.extract_strided_slice %127 {offsets = [0, 128], sizes = [8, 128], strides = [1, 1]} : vector<8x512xf32> to vector<8x128xf32>
    %135 = arith.negf %134 : vector<8x128xf32>
    %136 = math.exp %135 : vector<8x128xf32>
    %cst_52 = arith.constant 1.000000e+00 : f32
    %137 = vector.broadcast %cst_52 : f32 to vector<8x128xf32>
    %138 = arith.addf %137, %136 : vector<8x128xf32>
    %139 = arith.divf %137, %138 : vector<8x128xf32>
    %140 = vector.extract_strided_slice %127 {offsets = [0, 256], sizes = [8, 128], strides = [1, 1]} : vector<8x512xf32> to vector<8x128xf32>
    %141 = math.tanh %140 : vector<8x128xf32>
    %142 = vector.extract_strided_slice %127 {offsets = [0, 384], sizes = [8, 128], strides = [1, 1]} : vector<8x512xf32> to vector<8x128xf32>
    %143 = arith.negf %142 : vector<8x128xf32>
    %144 = math.exp %143 : vector<8x128xf32>
    %cst_53 = arith.constant 1.000000e+00 : f32
    %145 = vector.broadcast %cst_53 : f32 to vector<8x128xf32>
    %146 = arith.addf %145, %144 : vector<8x128xf32>
    %147 = arith.divf %145, %146 : vector<8x128xf32>
    %148 = arith.mulf %139, %87 : vector<8x128xf32>
    %149 = arith.mulf %133, %141 : vector<8x128xf32>
    %150 = arith.addf %148, %149 : vector<8x128xf32>
    %151 = math.tanh %150 : vector<8x128xf32>
    %152 = arith.mulf %147, %151 : vector<8x128xf32>
    %153 = tpu.concatenate %89, %121 in 1 : vector<8x128xf32>, vector<8x128xf32> -> vector<8x256xf32>
    %154 = arith.truncf %153 : vector<8x256xf32> to vector<8x256xbf16>
    %c0_54 = arith.constant 0 : index
    %c0_55 = arith.constant 0 : index
    %155 = vector.load %arg16[%c0_54, %c0_55] : memref<256x512xbf16, #tpu.memory_space<vmem>>, vector<256x512xbf16>
    %cst_56 = arith.constant dense<0.000000e+00> : vector<8x512xf32>
    %156 = tpu.matmul %154, %155, %cst_56 {dimension_numbers = #tpu.dot_dimension_numbers<[1], [0], [0], [1], [0, 0, 1, 1], [], []>} : vector<8x256xbf16>, vector<256x512xbf16>, vector<8x512xf32> -> vector<8x512xf32>
    %c0_57 = arith.constant 0 : index
    %c0_58 = arith.constant 0 : index
    %157 = vector.load %arg6[%c0_57, %c0_58] : memref<1x512xf32, #tpu.memory_space<vmem>>, vector<1x512xf32>
    %158 = vector.broadcast %157 : vector<1x512xf32> to vector<8x512xf32>
    %159 = arith.addf %156, %158 : vector<8x512xf32>
    %160 = vector.extract_strided_slice %159 {offsets = [0, 0], sizes = [8, 128], strides = [1, 1]} : vector<8x512xf32> to vector<8x128xf32>
    %161 = arith.negf %160 : vector<8x128xf32>
    %162 = math.exp %161 : vector<8x128xf32>
    %cst_59 = arith.constant 1.000000e+00 : f32
    %163 = vector.broadcast %cst_59 : f32 to vector<8x128xf32>
    %164 = arith.addf %163, %162 : vector<8x128xf32>
    %165 = arith.divf %163, %164 : vector<8x128xf32>
    %166 = vector.extract_strided_slice %159 {offsets = [0, 128], sizes = [8, 128], strides = [1, 1]} : vector<8x512xf32> to vector<8x128xf32>
    %167 = arith.negf %166 : vector<8x128xf32>
    %168 = math.exp %167 : vector<8x128xf32>
    %cst_60 = arith.constant 1.000000e+00 : f32
    %169 = vector.broadcast %cst_60 : f32 to vector<8x128xf32>
    %170 = arith.addf %169, %168 : vector<8x128xf32>
    %171 = arith.divf %169, %170 : vector<8x128xf32>
    %172 = vector.extract_strided_slice %159 {offsets = [0, 256], sizes = [8, 128], strides = [1, 1]} : vector<8x512xf32> to vector<8x128xf32>
    %173 = math.tanh %172 : vector<8x128xf32>
    %174 = vector.extract_strided_slice %159 {offsets = [0, 384], sizes = [8, 128], strides = [1, 1]} : vector<8x512xf32> to vector<8x128xf32>
    %175 = arith.negf %174 : vector<8x128xf32>
    %176 = math.exp %175 : vector<8x128xf32>
    %cst_61 = arith.constant 1.000000e+00 : f32
    %177 = vector.broadcast %cst_61 : f32 to vector<8x128xf32>
    %178 = arith.addf %177, %176 : vector<8x128xf32>
    %179 = arith.divf %177, %178 : vector<8x128xf32>
    %180 = arith.mulf %171, %119 : vector<8x128xf32>
    %181 = arith.mulf %165, %173 : vector<8x128xf32>
    %182 = arith.addf %180, %181 : vector<8x128xf32>
    %183 = math.tanh %182 : vector<8x128xf32>
    %184 = arith.mulf %179, %183 : vector<8x128xf32>
    %c8_62 = arith.constant 8 : index
    %c0_63 = arith.constant 0 : index
    %185 = vector.load %arg15[%c8_62, %c0_63] : memref<64x128xf32, #tpu.memory_space<vmem>>, vector<8x128xf32>
    tpu.vector_store %arg15[%c8_62, %c0_63], %184 {strides = array<i32>} : memref<64x128xf32, #tpu.memory_space<vmem>>, vector<8x128xf32>,
    %c24 = arith.constant 24 : index
    %c0_64 = arith.constant 0 : index
    %186 = vector.load %arg14[%c24, %c0_64] : memref<64x512xf32, #tpu.memory_space<vmem>>, vector<8x512xf32>
    %187 = arith.truncf %152 : vector<8x128xf32> to vector<8x128xbf16>
    %c0_65 = arith.constant 0 : index
    %c0_66 = arith.constant 0 : index
    %188 = vector.load %arg3[%c0_65, %c0_66] : memref<128x512xbf16, #tpu.memory_space<vmem>>, vector<128x512xbf16>
    %cst_67 = arith.constant dense<0.000000e+00> : vector<8x512xf32>
    %189 = tpu.matmul %187, %188, %cst_67 {dimension_numbers = #tpu.dot_dimension_numbers<[1], [0], [0], [1], [0, 0, 1, 1], [], []>} : vector<8x128xbf16>, vector<128x512xbf16>, vector<8x512xf32> -> vector<8x512xf32>
    %190 = arith.addf %186, %189 : vector<8x512xf32>
    %191 = vector.extract_strided_slice %190 {offsets = [0, 0], sizes = [8, 128], strides = [1, 1]} : vector<8x512xf32> to vector<8x128xf32>
    %192 = arith.negf %191 : vector<8x128xf32>
    %193 = math.exp %192 : vector<8x128xf32>
    %cst_68 = arith.constant 1.000000e+00 : f32
    %194 = vector.broadcast %cst_68 : f32 to vector<8x128xf32>
    %195 = arith.addf %194, %193 : vector<8x128xf32>
    %196 = arith.divf %194, %195 : vector<8x128xf32>
    %197 = vector.extract_strided_slice %190 {offsets = [0, 128], sizes = [8, 128], strides = [1, 1]} : vector<8x512xf32> to vector<8x128xf32>
    %198 = arith.negf %197 : vector<8x128xf32>
    %199 = math.exp %198 : vector<8x128xf32>
    %cst_69 = arith.constant 1.000000e+00 : f32
    %200 = vector.broadcast %cst_69 : f32 to vector<8x128xf32>
    %201 = arith.addf %200, %199 : vector<8x128xf32>
    %202 = arith.divf %200, %201 : vector<8x128xf32>
    %203 = vector.extract_strided_slice %190 {offsets = [0, 256], sizes = [8, 128], strides = [1, 1]} : vector<8x512xf32> to vector<8x128xf32>
    %204 = math.tanh %203 : vector<8x128xf32>
    %205 = vector.extract_strided_slice %190 {offsets = [0, 384], sizes = [8, 128], strides = [1, 1]} : vector<8x512xf32> to vector<8x128xf32>
    %206 = arith.negf %205 : vector<8x128xf32>
    %207 = math.exp %206 : vector<8x128xf32>
    %cst_70 = arith.constant 1.000000e+00 : f32
    %208 = vector.broadcast %cst_70 : f32 to vector<8x128xf32>
    %209 = arith.addf %208, %207 : vector<8x128xf32>
    %210 = arith.divf %208, %209 : vector<8x128xf32>
    %211 = arith.mulf %202, %150 : vector<8x128xf32>
    %212 = arith.mulf %196, %204 : vector<8x128xf32>
    %213 = arith.addf %211, %212 : vector<8x128xf32>
    %214 = math.tanh %213 : vector<8x128xf32>
    %215 = arith.mulf %210, %214 : vector<8x128xf32>
    %216 = tpu.concatenate %152, %184 in 1 : vector<8x128xf32>, vector<8x128xf32> -> vector<8x256xf32>
    %217 = arith.truncf %216 : vector<8x256xf32> to vector<8x256xbf16>
    %c0_71 = arith.constant 0 : index
    %c0_72 = arith.constant 0 : index
    %218 = vector.load %arg16[%c0_71, %c0_72] : memref<256x512xbf16, #tpu.memory_space<vmem>>, vector<256x512xbf16>
    %cst_73 = arith.constant dense<0.000000e+00> : vector<8x512xf32>
    %219 = tpu.matmul %217, %218, %cst_73 {dimension_numbers = #tpu.dot_dimension_numbers<[1], [0], [0], [1], [0, 0, 1, 1], [], []>} : vector<8x256xbf16>, vector<256x512xbf16>, vector<8x512xf32> -> vector<8x512xf32>
    %c0_74 = arith.constant 0 : index
    %c0_75 = arith.constant 0 : index
    %220 = vector.load %arg6[%c0_74, %c0_75] : memref<1x512xf32, #tpu.memory_space<vmem>>, vector<1x512xf32>
    %221 = vector.broadcast %220 : vector<1x512xf32> to vector<8x512xf32>
    %222 = arith.addf %219, %221 : vector<8x512xf32>
    %223 = vector.extract_strided_slice %222 {offsets = [0, 0], sizes = [8, 128], strides = [1, 1]} : vector<8x512xf32> to vector<8x128xf32>
    %224 = arith.negf %223 : vector<8x128xf32>
    %225 = math.exp %224 : vector<8x128xf32>
    %cst_76 = arith.constant 1.000000e+00 : f32
    %226 = vector.broadcast %cst_76 : f32 to vector<8x128xf32>
    %227 = arith.addf %226, %225 : vector<8x128xf32>
    %228 = arith.divf %226, %227 : vector<8x128xf32>
    %229 = vector.extract_strided_slice %222 {offsets = [0, 128], sizes = [8, 128], strides = [1, 1]} : vector<8x512xf32> to vector<8x128xf32>
    %230 = arith.negf %229 : vector<8x128xf32>
    %231 = math.exp %230 : vector<8x128xf32>
    %cst_77 = arith.constant 1.000000e+00 : f32
    %232 = vector.broadcast %cst_77 : f32 to vector<8x128xf32>
    %233 = arith.addf %232, %231 : vector<8x128xf32>
    %234 = arith.divf %232, %233 : vector<8x128xf32>
    %235 = vector.extract_strided_slice %222 {offsets = [0, 256], sizes = [8, 128], strides = [1, 1]} : vector<8x512xf32> to vector<8x128xf32>
    %236 = math.tanh %235 : vector<8x128xf32>
    %237 = vector.extract_strided_slice %222 {offsets = [0, 384], sizes = [8, 128], strides = [1, 1]} : vector<8x512xf32> to vector<8x128xf32>
    %238 = arith.negf %237 : vector<8x128xf32>
    %239 = math.exp %238 : vector<8x128xf32>
    %cst_78 = arith.constant 1.000000e+00 : f32
    %240 = vector.broadcast %cst_78 : f32 to vector<8x128xf32>
    %241 = arith.addf %240, %239 : vector<8x128xf32>
    %242 = arith.divf %240, %241 : vector<8x128xf32>
    %243 = arith.mulf %234, %182 : vector<8x128xf32>
    %244 = arith.mulf %228, %236 : vector<8x128xf32>
    %245 = arith.addf %243, %244 : vector<8x128xf32>
    %246 = math.tanh %245 : vector<8x128xf32>
    %247 = arith.mulf %242, %246 : vector<8x128xf32>
    %c16_79 = arith.constant 16 : index
    %c0_80 = arith.constant 0 : index
    %248 = vector.load %arg15[%c16_79, %c0_80] : memref<64x128xf32, #tpu.memory_space<vmem>>, vector<8x128xf32>
    tpu.vector_store %arg15[%c16_79, %c0_80], %247 {strides = array<i32>} : memref<64x128xf32, #tpu.memory_space<vmem>>, vector<8x128xf32>,
    %c32 = arith.constant 32 : index
    %c0_81 = arith.constant 0 : index
    %249 = vector.load %arg14[%c32, %c0_81] : memref<64x512xf32, #tpu.memory_space<vmem>>, vector<8x512xf32>
    %250 = arith.truncf %215 : vector<8x128xf32> to vector<8x128xbf16>
    %c0_82 = arith.constant 0 : index
    %c0_83 = arith.constant 0 : index
    %251 = vector.load %arg3[%c0_82, %c0_83] : memref<128x512xbf16, #tpu.memory_space<vmem>>, vector<128x512xbf16>
    %cst_84 = arith.constant dense<0.000000e+00> : vector<8x512xf32>
    %252 = tpu.matmul %250, %251, %cst_84 {dimension_numbers = #tpu.dot_dimension_numbers<[1], [0], [0], [1], [0, 0, 1, 1], [], []>} : vector<8x128xbf16>, vector<128x512xbf16>, vector<8x512xf32> -> vector<8x512xf32>
    %253 = arith.addf %249, %252 : vector<8x512xf32>
    %254 = vector.extract_strided_slice %253 {offsets = [0, 0], sizes = [8, 128], strides = [1, 1]} : vector<8x512xf32> to vector<8x128xf32>
    %255 = arith.negf %254 : vector<8x128xf32>
    %256 = math.exp %255 : vector<8x128xf32>
    %cst_85 = arith.constant 1.000000e+00 : f32
    %257 = vector.broadcast %cst_85 : f32 to vector<8x128xf32>
    %258 = arith.addf %257, %256 : vector<8x128xf32>
    %259 = arith.divf %257, %258 : vector<8x128xf32>
    %260 = vector.extract_strided_slice %253 {offsets = [0, 128], sizes = [8, 128], strides = [1, 1]} : vector<8x512xf32> to vector<8x128xf32>
    %261 = arith.negf %260 : vector<8x128xf32>
    %262 = math.exp %261 : vector<8x128xf32>
    %cst_86 = arith.constant 1.000000e+00 : f32
    %263 = vector.broadcast %cst_86 : f32 to vector<8x128xf32>
    %264 = arith.addf %263, %262 : vector<8x128xf32>
    %265 = arith.divf %263, %264 : vector<8x128xf32>
    %266 = vector.extract_strided_slice %253 {offsets = [0, 256], sizes = [8, 128], strides = [1, 1]} : vector<8x512xf32> to vector<8x128xf32>
    %267 = math.tanh %266 : vector<8x128xf32>
    %268 = vector.extract_strided_slice %253 {offsets = [0, 384], sizes = [8, 128], strides = [1, 1]} : vector<8x512xf32> to vector<8x128xf32>
    %269 = arith.negf %268 : vector<8x128xf32>
    %270 = math.exp %269 : vector<8x128xf32>
    %cst_87 = arith.constant 1.000000e+00 : f32
    %271 = vector.broadcast %cst_87 : f32 to vector<8x128xf32>
    %272 = arith.addf %271, %270 : vector<8x128xf32>
    %273 = arith.divf %271, %272 : vector<8x128xf32>
    %274 = arith.mulf %265, %213 : vector<8x128xf32>
    %275 = arith.mulf %259, %267 : vector<8x128xf32>
    %276 = arith.addf %274, %275 : vector<8x128xf32>
    %277 = math.tanh %276 : vector<8x128xf32>
    %278 = arith.mulf %273, %277 : vector<8x128xf32>
    %279 = tpu.concatenate %215, %247 in 1 : vector<8x128xf32>, vector<8x128xf32> -> vector<8x256xf32>
    %280 = arith.truncf %279 : vector<8x256xf32> to vector<8x256xbf16>
    %c0_88 = arith.constant 0 : index
    %c0_89 = arith.constant 0 : index
    %281 = vector.load %arg16[%c0_88, %c0_89] : memref<256x512xbf16, #tpu.memory_space<vmem>>, vector<256x512xbf16>
    %cst_90 = arith.constant dense<0.000000e+00> : vector<8x512xf32>
    %282 = tpu.matmul %280, %281, %cst_90 {dimension_numbers = #tpu.dot_dimension_numbers<[1], [0], [0], [1], [0, 0, 1, 1], [], []>} : vector<8x256xbf16>, vector<256x512xbf16>, vector<8x512xf32> -> vector<8x512xf32>
    %c0_91 = arith.constant 0 : index
    %c0_92 = arith.constant 0 : index
    %283 = vector.load %arg6[%c0_91, %c0_92] : memref<1x512xf32, #tpu.memory_space<vmem>>, vector<1x512xf32>
    %284 = vector.broadcast %283 : vector<1x512xf32> to vector<8x512xf32>
    %285 = arith.addf %282, %284 : vector<8x512xf32>
    %286 = vector.extract_strided_slice %285 {offsets = [0, 0], sizes = [8, 128], strides = [1, 1]} : vector<8x512xf32> to vector<8x128xf32>
    %287 = arith.negf %286 : vector<8x128xf32>
    %288 = math.exp %287 : vector<8x128xf32>
    %cst_93 = arith.constant 1.000000e+00 : f32
    %289 = vector.broadcast %cst_93 : f32 to vector<8x128xf32>
    %290 = arith.addf %289, %288 : vector<8x128xf32>
    %291 = arith.divf %289, %290 : vector<8x128xf32>
    %292 = vector.extract_strided_slice %285 {offsets = [0, 128], sizes = [8, 128], strides = [1, 1]} : vector<8x512xf32> to vector<8x128xf32>
    %293 = arith.negf %292 : vector<8x128xf32>
    %294 = math.exp %293 : vector<8x128xf32>
    %cst_94 = arith.constant 1.000000e+00 : f32
    %295 = vector.broadcast %cst_94 : f32 to vector<8x128xf32>
    %296 = arith.addf %295, %294 : vector<8x128xf32>
    %297 = arith.divf %295, %296 : vector<8x128xf32>
    %298 = vector.extract_strided_slice %285 {offsets = [0, 256], sizes = [8, 128], strides = [1, 1]} : vector<8x512xf32> to vector<8x128xf32>
    %299 = math.tanh %298 : vector<8x128xf32>
    %300 = vector.extract_strided_slice %285 {offsets = [0, 384], sizes = [8, 128], strides = [1, 1]} : vector<8x512xf32> to vector<8x128xf32>
    %301 = arith.negf %300 : vector<8x128xf32>
    %302 = math.exp %301 : vector<8x128xf32>
    %cst_95 = arith.constant 1.000000e+00 : f32
    %303 = vector.broadcast %cst_95 : f32 to vector<8x128xf32>
    %304 = arith.addf %303, %302 : vector<8x128xf32>
    %305 = arith.divf %303, %304 : vector<8x128xf32>
    %306 = arith.mulf %297, %245 : vector<8x128xf32>
    %307 = arith.mulf %291, %299 : vector<8x128xf32>
    %308 = arith.addf %306, %307 : vector<8x128xf32>
    %309 = math.tanh %308 : vector<8x128xf32>
    %310 = arith.mulf %305, %309 : vector<8x128xf32>
    %c24_96 = arith.constant 24 : index
    %c0_97 = arith.constant 0 : index
    %311 = vector.load %arg15[%c24_96, %c0_97] : memref<64x128xf32, #tpu.memory_space<vmem>>, vector<8x128xf32>
    tpu.vector_store %arg15[%c24_96, %c0_97], %310 {strides = array<i32>} : memref<64x128xf32, #tpu.memory_space<vmem>>, vector<8x128xf32>,
    %c40 = arith.constant 40 : index
    %c0_98 = arith.constant 0 : index
    %312 = vector.load %arg14[%c40, %c0_98] : memref<64x512xf32, #tpu.memory_space<vmem>>, vector<8x512xf32>
    %313 = arith.truncf %278 : vector<8x128xf32> to vector<8x128xbf16>
    %c0_99 = arith.constant 0 : index
    %c0_100 = arith.constant 0 : index
    %314 = vector.load %arg3[%c0_99, %c0_100] : memref<128x512xbf16, #tpu.memory_space<vmem>>, vector<128x512xbf16>
    %cst_101 = arith.constant dense<0.000000e+00> : vector<8x512xf32>
    %315 = tpu.matmul %313, %314, %cst_101 {dimension_numbers = #tpu.dot_dimension_numbers<[1], [0], [0], [1], [0, 0, 1, 1], [], []>} : vector<8x128xbf16>, vector<128x512xbf16>, vector<8x512xf32> -> vector<8x512xf32>
    %316 = arith.addf %312, %315 : vector<8x512xf32>
    %317 = vector.extract_strided_slice %316 {offsets = [0, 0], sizes = [8, 128], strides = [1, 1]} : vector<8x512xf32> to vector<8x128xf32>
    %318 = arith.negf %317 : vector<8x128xf32>
    %319 = math.exp %318 : vector<8x128xf32>
    %cst_102 = arith.constant 1.000000e+00 : f32
    %320 = vector.broadcast %cst_102 : f32 to vector<8x128xf32>
    %321 = arith.addf %320, %319 : vector<8x128xf32>
    %322 = arith.divf %320, %321 : vector<8x128xf32>
    %323 = vector.extract_strided_slice %316 {offsets = [0, 128], sizes = [8, 128], strides = [1, 1]} : vector<8x512xf32> to vector<8x128xf32>
    %324 = arith.negf %323 : vector<8x128xf32>
    %325 = math.exp %324 : vector<8x128xf32>
    %cst_103 = arith.constant 1.000000e+00 : f32
    %326 = vector.broadcast %cst_103 : f32 to vector<8x128xf32>
    %327 = arith.addf %326, %325 : vector<8x128xf32>
    %328 = arith.divf %326, %327 : vector<8x128xf32>
    %329 = vector.extract_strided_slice %316 {offsets = [0, 256], sizes = [8, 128], strides = [1, 1]} : vector<8x512xf32> to vector<8x128xf32>
    %330 = math.tanh %329 : vector<8x128xf32>
    %331 = vector.extract_strided_slice %316 {offsets = [0, 384], sizes = [8, 128], strides = [1, 1]} : vector<8x512xf32> to vector<8x128xf32>
    %332 = arith.negf %331 : vector<8x128xf32>
    %333 = math.exp %332 : vector<8x128xf32>
    %cst_104 = arith.constant 1.000000e+00 : f32
    %334 = vector.broadcast %cst_104 : f32 to vector<8x128xf32>
    %335 = arith.addf %334, %333 : vector<8x128xf32>
    %336 = arith.divf %334, %335 : vector<8x128xf32>
    %337 = arith.mulf %328, %276 : vector<8x128xf32>
    %338 = arith.mulf %322, %330 : vector<8x128xf32>
    %339 = arith.addf %337, %338 : vector<8x128xf32>
    %340 = math.tanh %339 : vector<8x128xf32>
    %341 = arith.mulf %336, %340 : vector<8x128xf32>
    %342 = tpu.concatenate %278, %310 in 1 : vector<8x128xf32>, vector<8x128xf32> -> vector<8x256xf32>
    %343 = arith.truncf %342 : vector<8x256xf32> to vector<8x256xbf16>
    %c0_105 = arith.constant 0 : index
    %c0_106 = arith.constant 0 : index
    %344 = vector.load %arg16[%c0_105, %c0_106] : memref<256x512xbf16, #tpu.memory_space<vmem>>, vector<256x512xbf16>
    %cst_107 = arith.constant dense<0.000000e+00> : vector<8x512xf32>
    %345 = tpu.matmul %343, %344, %cst_107 {dimension_numbers = #tpu.dot_dimension_numbers<[1], [0], [0], [1], [0, 0, 1, 1], [], []>} : vector<8x256xbf16>, vector<256x512xbf16>, vector<8x512xf32> -> vector<8x512xf32>
    %c0_108 = arith.constant 0 : index
    %c0_109 = arith.constant 0 : index
    %346 = vector.load %arg6[%c0_108, %c0_109] : memref<1x512xf32, #tpu.memory_space<vmem>>, vector<1x512xf32>
    %347 = vector.broadcast %346 : vector<1x512xf32> to vector<8x512xf32>
    %348 = arith.addf %345, %347 : vector<8x512xf32>
    %349 = vector.extract_strided_slice %348 {offsets = [0, 0], sizes = [8, 128], strides = [1, 1]} : vector<8x512xf32> to vector<8x128xf32>
    %350 = arith.negf %349 : vector<8x128xf32>
    %351 = math.exp %350 : vector<8x128xf32>
    %cst_110 = arith.constant 1.000000e+00 : f32
    %352 = vector.broadcast %cst_110 : f32 to vector<8x128xf32>
    %353 = arith.addf %352, %351 : vector<8x128xf32>
    %354 = arith.divf %352, %353 : vector<8x128xf32>
    %355 = vector.extract_strided_slice %348 {offsets = [0, 128], sizes = [8, 128], strides = [1, 1]} : vector<8x512xf32> to vector<8x128xf32>
    %356 = arith.negf %355 : vector<8x128xf32>
    %357 = math.exp %356 : vector<8x128xf32>
    %cst_111 = arith.constant 1.000000e+00 : f32
    %358 = vector.broadcast %cst_111 : f32 to vector<8x128xf32>
    %359 = arith.addf %358, %357 : vector<8x128xf32>
    %360 = arith.divf %358, %359 : vector<8x128xf32>
    %361 = vector.extract_strided_slice %348 {offsets = [0, 256], sizes = [8, 128], strides = [1, 1]} : vector<8x512xf32> to vector<8x128xf32>
    %362 = math.tanh %361 : vector<8x128xf32>
    %363 = vector.extract_strided_slice %348 {offsets = [0, 384], sizes = [8, 128], strides = [1, 1]} : vector<8x512xf32> to vector<8x128xf32>
    %364 = arith.negf %363 : vector<8x128xf32>
    %365 = math.exp %364 : vector<8x128xf32>
    %cst_112 = arith.constant 1.000000e+00 : f32
    %366 = vector.broadcast %cst_112 : f32 to vector<8x128xf32>
    %367 = arith.addf %366, %365 : vector<8x128xf32>
    %368 = arith.divf %366, %367 : vector<8x128xf32>
    %369 = arith.mulf %360, %308 : vector<8x128xf32>
    %370 = arith.mulf %354, %362 : vector<8x128xf32>
    %371 = arith.addf %369, %370 : vector<8x128xf32>
    %372 = math.tanh %371 : vector<8x128xf32>
    %373 = arith.mulf %368, %372 : vector<8x128xf32>
    %c32_113 = arith.constant 32 : index
    %c0_114 = arith.constant 0 : index
    %374 = vector.load %arg15[%c32_113, %c0_114] : memref<64x128xf32, #tpu.memory_space<vmem>>, vector<8x128xf32>
    tpu.vector_store %arg15[%c32_113, %c0_114], %373 {strides = array<i32>} : memref<64x128xf32, #tpu.memory_space<vmem>>, vector<8x128xf32>,
    %c48 = arith.constant 48 : index
    %c0_115 = arith.constant 0 : index
    %375 = vector.load %arg14[%c48, %c0_115] : memref<64x512xf32, #tpu.memory_space<vmem>>, vector<8x512xf32>
    %376 = arith.truncf %341 : vector<8x128xf32> to vector<8x128xbf16>
    %c0_116 = arith.constant 0 : index
    %c0_117 = arith.constant 0 : index
    %377 = vector.load %arg3[%c0_116, %c0_117] : memref<128x512xbf16, #tpu.memory_space<vmem>>, vector<128x512xbf16>
    %cst_118 = arith.constant dense<0.000000e+00> : vector<8x512xf32>
    %378 = tpu.matmul %376, %377, %cst_118 {dimension_numbers = #tpu.dot_dimension_numbers<[1], [0], [0], [1], [0, 0, 1, 1], [], []>} : vector<8x128xbf16>, vector<128x512xbf16>, vector<8x512xf32> -> vector<8x512xf32>
    %379 = arith.addf %375, %378 : vector<8x512xf32>
    %380 = vector.extract_strided_slice %379 {offsets = [0, 0], sizes = [8, 128], strides = [1, 1]} : vector<8x512xf32> to vector<8x128xf32>
    %381 = arith.negf %380 : vector<8x128xf32>
    %382 = math.exp %381 : vector<8x128xf32>
    %cst_119 = arith.constant 1.000000e+00 : f32
    %383 = vector.broadcast %cst_119 : f32 to vector<8x128xf32>
    %384 = arith.addf %383, %382 : vector<8x128xf32>
    %385 = arith.divf %383, %384 : vector<8x128xf32>
    %386 = vector.extract_strided_slice %379 {offsets = [0, 128], sizes = [8, 128], strides = [1, 1]} : vector<8x512xf32> to vector<8x128xf32>
    %387 = arith.negf %386 : vector<8x128xf32>
    %388 = math.exp %387 : vector<8x128xf32>
    %cst_120 = arith.constant 1.000000e+00 : f32
    %389 = vector.broadcast %cst_120 : f32 to vector<8x128xf32>
    %390 = arith.addf %389, %388 : vector<8x128xf32>
    %391 = arith.divf %389, %390 : vector<8x128xf32>
    %392 = vector.extract_strided_slice %379 {offsets = [0, 256], sizes = [8, 128], strides = [1, 1]} : vector<8x512xf32> to vector<8x128xf32>
    %393 = math.tanh %392 : vector<8x128xf32>
    %394 = vector.extract_strided_slice %379 {offsets = [0, 384], sizes = [8, 128], strides = [1, 1]} : vector<8x512xf32> to vector<8x128xf32>
    %395 = arith.negf %394 : vector<8x128xf32>
    %396 = math.exp %395 : vector<8x128xf32>
    %cst_121 = arith.constant 1.000000e+00 : f32
    %397 = vector.broadcast %cst_121 : f32 to vector<8x128xf32>
    %398 = arith.addf %397, %396 : vector<8x128xf32>
    %399 = arith.divf %397, %398 : vector<8x128xf32>
    %400 = arith.mulf %391, %339 : vector<8x128xf32>
    %401 = arith.mulf %385, %393 : vector<8x128xf32>
    %402 = arith.addf %400, %401 : vector<8x128xf32>
    %403 = math.tanh %402 : vector<8x128xf32>
    %404 = arith.mulf %399, %403 : vector<8x128xf32>
    %405 = tpu.concatenate %341, %373 in 1 : vector<8x128xf32>, vector<8x128xf32> -> vector<8x256xf32>
    %406 = arith.truncf %405 : vector<8x256xf32> to vector<8x256xbf16>
    %c0_122 = arith.constant 0 : index
    %c0_123 = arith.constant 0 : index
    %407 = vector.load %arg16[%c0_122, %c0_123] : memref<256x512xbf16, #tpu.memory_space<vmem>>, vector<256x512xbf16>
    %cst_124 = arith.constant dense<0.000000e+00> : vector<8x512xf32>
    %408 = tpu.matmul %406, %407, %cst_124 {dimension_numbers = #tpu.dot_dimension_numbers<[1], [0], [0], [1], [0, 0, 1, 1], [], []>} : vector<8x256xbf16>, vector<256x512xbf16>, vector<8x512xf32> -> vector<8x512xf32>
    %c0_125 = arith.constant 0 : index
    %c0_126 = arith.constant 0 : index
    %409 = vector.load %arg6[%c0_125, %c0_126] : memref<1x512xf32, #tpu.memory_space<vmem>>, vector<1x512xf32>
    %410 = vector.broadcast %409 : vector<1x512xf32> to vector<8x512xf32>
    %411 = arith.addf %408, %410 : vector<8x512xf32>
    %412 = vector.extract_strided_slice %411 {offsets = [0, 0], sizes = [8, 128], strides = [1, 1]} : vector<8x512xf32> to vector<8x128xf32>
    %413 = arith.negf %412 : vector<8x128xf32>
    %414 = math.exp %413 : vector<8x128xf32>
    %cst_127 = arith.constant 1.000000e+00 : f32
    %415 = vector.broadcast %cst_127 : f32 to vector<8x128xf32>
    %416 = arith.addf %415, %414 : vector<8x128xf32>
    %417 = arith.divf %415, %416 : vector<8x128xf32>
    %418 = vector.extract_strided_slice %411 {offsets = [0, 128], sizes = [8, 128], strides = [1, 1]} : vector<8x512xf32> to vector<8x128xf32>
    %419 = arith.negf %418 : vector<8x128xf32>
    %420 = math.exp %419 : vector<8x128xf32>
    %cst_128 = arith.constant 1.000000e+00 : f32
    %421 = vector.broadcast %cst_128 : f32 to vector<8x128xf32>
    %422 = arith.addf %421, %420 : vector<8x128xf32>
    %423 = arith.divf %421, %422 : vector<8x128xf32>
    %424 = vector.extract_strided_slice %411 {offsets = [0, 256], sizes = [8, 128], strides = [1, 1]} : vector<8x512xf32> to vector<8x128xf32>
    %425 = math.tanh %424 : vector<8x128xf32>
    %426 = vector.extract_strided_slice %411 {offsets = [0, 384], sizes = [8, 128], strides = [1, 1]} : vector<8x512xf32> to vector<8x128xf32>
    %427 = arith.negf %426 : vector<8x128xf32>
    %428 = math.exp %427 : vector<8x128xf32>
    %cst_129 = arith.constant 1.000000e+00 : f32
    %429 = vector.broadcast %cst_129 : f32 to vector<8x128xf32>
    %430 = arith.addf %429, %428 : vector<8x128xf32>
    %431 = arith.divf %429, %430 : vector<8x128xf32>
    %432 = arith.mulf %423, %371 : vector<8x128xf32>
    %433 = arith.mulf %417, %425 : vector<8x128xf32>
    %434 = arith.addf %432, %433 : vector<8x128xf32>
    %435 = math.tanh %434 : vector<8x128xf32>
    %436 = arith.mulf %431, %435 : vector<8x128xf32>
    %c40_130 = arith.constant 40 : index
    %c0_131 = arith.constant 0 : index
    %437 = vector.load %arg15[%c40_130, %c0_131] : memref<64x128xf32, #tpu.memory_space<vmem>>, vector<8x128xf32>
    tpu.vector_store %arg15[%c40_130, %c0_131], %436 {strides = array<i32>} : memref<64x128xf32, #tpu.memory_space<vmem>>, vector<8x128xf32>,
    %c56 = arith.constant 56 : index
    %c0_132 = arith.constant 0 : index
    %438 = vector.load %arg14[%c56, %c0_132] : memref<64x512xf32, #tpu.memory_space<vmem>>, vector<8x512xf32>
    %439 = arith.truncf %404 : vector<8x128xf32> to vector<8x128xbf16>
    %c0_133 = arith.constant 0 : index
    %c0_134 = arith.constant 0 : index
    %440 = vector.load %arg3[%c0_133, %c0_134] : memref<128x512xbf16, #tpu.memory_space<vmem>>, vector<128x512xbf16>
    %cst_135 = arith.constant dense<0.000000e+00> : vector<8x512xf32>
    %441 = tpu.matmul %439, %440, %cst_135 {dimension_numbers = #tpu.dot_dimension_numbers<[1], [0], [0], [1], [0, 0, 1, 1], [], []>} : vector<8x128xbf16>, vector<128x512xbf16>, vector<8x512xf32> -> vector<8x512xf32>
    %442 = arith.addf %438, %441 : vector<8x512xf32>
    %443 = vector.extract_strided_slice %442 {offsets = [0, 0], sizes = [8, 128], strides = [1, 1]} : vector<8x512xf32> to vector<8x128xf32>
    %444 = arith.negf %443 : vector<8x128xf32>
    %445 = math.exp %444 : vector<8x128xf32>
    %cst_136 = arith.constant 1.000000e+00 : f32
    %446 = vector.broadcast %cst_136 : f32 to vector<8x128xf32>
    %447 = arith.addf %446, %445 : vector<8x128xf32>
    %448 = arith.divf %446, %447 : vector<8x128xf32>
    %449 = vector.extract_strided_slice %442 {offsets = [0, 128], sizes = [8, 128], strides = [1, 1]} : vector<8x512xf32> to vector<8x128xf32>
    %450 = arith.negf %449 : vector<8x128xf32>
    %451 = math.exp %450 : vector<8x128xf32>
    %cst_137 = arith.constant 1.000000e+00 : f32
    %452 = vector.broadcast %cst_137 : f32 to vector<8x128xf32>
    %453 = arith.addf %452, %451 : vector<8x128xf32>
    %454 = arith.divf %452, %453 : vector<8x128xf32>
    %455 = vector.extract_strided_slice %442 {offsets = [0, 256], sizes = [8, 128], strides = [1, 1]} : vector<8x512xf32> to vector<8x128xf32>
    %456 = math.tanh %455 : vector<8x128xf32>
    %457 = vector.extract_strided_slice %442 {offsets = [0, 384], sizes = [8, 128], strides = [1, 1]} : vector<8x512xf32> to vector<8x128xf32>
    %458 = arith.negf %457 : vector<8x128xf32>
    %459 = math.exp %458 : vector<8x128xf32>
    %cst_138 = arith.constant 1.000000e+00 : f32
    %460 = vector.broadcast %cst_138 : f32 to vector<8x128xf32>
    %461 = arith.addf %460, %459 : vector<8x128xf32>
    %462 = arith.divf %460, %461 : vector<8x128xf32>
    %463 = arith.mulf %454, %402 : vector<8x128xf32>
    %464 = arith.mulf %448, %456 : vector<8x128xf32>
    %465 = arith.addf %463, %464 : vector<8x128xf32>
    %466 = math.tanh %465 : vector<8x128xf32>
    %467 = arith.mulf %462, %466 : vector<8x128xf32>
    %468 = tpu.concatenate %404, %436 in 1 : vector<8x128xf32>, vector<8x128xf32> -> vector<8x256xf32>
    %469 = arith.truncf %468 : vector<8x256xf32> to vector<8x256xbf16>
    %c0_139 = arith.constant 0 : index
    %c0_140 = arith.constant 0 : index
    %470 = vector.load %arg16[%c0_139, %c0_140] : memref<256x512xbf16, #tpu.memory_space<vmem>>, vector<256x512xbf16>
    %cst_141 = arith.constant dense<0.000000e+00> : vector<8x512xf32>
    %471 = tpu.matmul %469, %470, %cst_141 {dimension_numbers = #tpu.dot_dimension_numbers<[1], [0], [0], [1], [0, 0, 1, 1], [], []>} : vector<8x256xbf16>, vector<256x512xbf16>, vector<8x512xf32> -> vector<8x512xf32>
    %c0_142 = arith.constant 0 : index
    %c0_143 = arith.constant 0 : index
    %472 = vector.load %arg6[%c0_142, %c0_143] : memref<1x512xf32, #tpu.memory_space<vmem>>, vector<1x512xf32>
    %473 = vector.broadcast %472 : vector<1x512xf32> to vector<8x512xf32>
    %474 = arith.addf %471, %473 : vector<8x512xf32>
    %475 = vector.extract_strided_slice %474 {offsets = [0, 0], sizes = [8, 128], strides = [1, 1]} : vector<8x512xf32> to vector<8x128xf32>
    %476 = arith.negf %475 : vector<8x128xf32>
    %477 = math.exp %476 : vector<8x128xf32>
    %cst_144 = arith.constant 1.000000e+00 : f32
    %478 = vector.broadcast %cst_144 : f32 to vector<8x128xf32>
    %479 = arith.addf %478, %477 : vector<8x128xf32>
    %480 = arith.divf %478, %479 : vector<8x128xf32>
    %481 = vector.extract_strided_slice %474 {offsets = [0, 128], sizes = [8, 128], strides = [1, 1]} : vector<8x512xf32> to vector<8x128xf32>
    %482 = arith.negf %481 : vector<8x128xf32>
    %483 = math.exp %482 : vector<8x128xf32>
    %cst_145 = arith.constant 1.000000e+00 : f32
    %484 = vector.broadcast %cst_145 : f32 to vector<8x128xf32>
    %485 = arith.addf %484, %483 : vector<8x128xf32>
    %486 = arith.divf %484, %485 : vector<8x128xf32>
    %487 = vector.extract_strided_slice %474 {offsets = [0, 256], sizes = [8, 128], strides = [1, 1]} : vector<8x512xf32> to vector<8x128xf32>
    %488 = math.tanh %487 : vector<8x128xf32>
    %489 = vector.extract_strided_slice %474 {offsets = [0, 384], sizes = [8, 128], strides = [1, 1]} : vector<8x512xf32> to vector<8x128xf32>
    %490 = arith.negf %489 : vector<8x128xf32>
    %491 = math.exp %490 : vector<8x128xf32>
    %cst_146 = arith.constant 1.000000e+00 : f32
    %492 = vector.broadcast %cst_146 : f32 to vector<8x128xf32>
    %493 = arith.addf %492, %491 : vector<8x128xf32>
    %494 = arith.divf %492, %493 : vector<8x128xf32>
    %495 = arith.mulf %486, %434 : vector<8x128xf32>
    %496 = arith.mulf %480, %488 : vector<8x128xf32>
    %497 = arith.addf %495, %496 : vector<8x128xf32>
    %498 = math.tanh %497 : vector<8x128xf32>
    %499 = arith.mulf %494, %498 : vector<8x128xf32>
    %c48_147 = arith.constant 48 : index
    %c0_148 = arith.constant 0 : index
    %500 = vector.load %arg15[%c48_147, %c0_148] : memref<64x128xf32, #tpu.memory_space<vmem>>, vector<8x128xf32>
    tpu.vector_store %arg15[%c48_147, %c0_148], %499 {strides = array<i32>} : memref<64x128xf32, #tpu.memory_space<vmem>>, vector<8x128xf32>,
    %501 = tpu.concatenate %467, %499 in 1 : vector<8x128xf32>, vector<8x128xf32> -> vector<8x256xf32>
    %502 = arith.truncf %501 : vector<8x256xf32> to vector<8x256xbf16>
    %c0_149 = arith.constant 0 : index
    %c0_150 = arith.constant 0 : index
    %503 = vector.load %arg16[%c0_149, %c0_150] : memref<256x512xbf16, #tpu.memory_space<vmem>>, vector<256x512xbf16>
    %cst_151 = arith.constant dense<0.000000e+00> : vector<8x512xf32>
    %504 = tpu.matmul %502, %503, %cst_151 {dimension_numbers = #tpu.dot_dimension_numbers<[1], [0], [0], [1], [0, 0, 1, 1], [], []>} : vector<8x256xbf16>, vector<256x512xbf16>, vector<8x512xf32> -> vector<8x512xf32>
    %c0_152 = arith.constant 0 : index
    %c0_153 = arith.constant 0 : index
    %505 = vector.load %arg6[%c0_152, %c0_153] : memref<1x512xf32, #tpu.memory_space<vmem>>, vector<1x512xf32>
    %506 = vector.broadcast %505 : vector<1x512xf32> to vector<8x512xf32>
    %507 = arith.addf %504, %506 : vector<8x512xf32>
    %508 = vector.extract_strided_slice %507 {offsets = [0, 0], sizes = [8, 128], strides = [1, 1]} : vector<8x512xf32> to vector<8x128xf32>
    %509 = arith.negf %508 : vector<8x128xf32>
    %510 = math.exp %509 : vector<8x128xf32>
    %cst_154 = arith.constant 1.000000e+00 : f32
    %511 = vector.broadcast %cst_154 : f32 to vector<8x128xf32>
    %512 = arith.addf %511, %510 : vector<8x128xf32>
    %513 = arith.divf %511, %512 : vector<8x128xf32>
    %514 = vector.extract_strided_slice %507 {offsets = [0, 128], sizes = [8, 128], strides = [1, 1]} : vector<8x512xf32> to vector<8x128xf32>
    %515 = arith.negf %514 : vector<8x128xf32>
    %516 = math.exp %515 : vector<8x128xf32>
    %cst_155 = arith.constant 1.000000e+00 : f32
    %517 = vector.broadcast %cst_155 : f32 to vector<8x128xf32>
    %518 = arith.addf %517, %516 : vector<8x128xf32>
    %519 = arith.divf %517, %518 : vector<8x128xf32>
    %520 = vector.extract_strided_slice %507 {offsets = [0, 256], sizes = [8, 128], strides = [1, 1]} : vector<8x512xf32> to vector<8x128xf32>
    %521 = math.tanh %520 : vector<8x128xf32>
    %522 = vector.extract_strided_slice %507 {offsets = [0, 384], sizes = [8, 128], strides = [1, 1]} : vector<8x512xf32> to vector<8x128xf32>
    %523 = arith.negf %522 : vector<8x128xf32>
    %524 = math.exp %523 : vector<8x128xf32>
    %cst_156 = arith.constant 1.000000e+00 : f32
    %525 = vector.broadcast %cst_156 : f32 to vector<8x128xf32>
    %526 = arith.addf %525, %524 : vector<8x128xf32>
    %527 = arith.divf %525, %526 : vector<8x128xf32>
    %528 = arith.mulf %519, %497 : vector<8x128xf32>
    %529 = arith.mulf %513, %521 : vector<8x128xf32>
    %530 = arith.addf %528, %529 : vector<8x128xf32>
    %531 = math.tanh %530 : vector<8x128xf32>
    %532 = arith.mulf %527, %531 : vector<8x128xf32>
    %c56_157 = arith.constant 56 : index
    %c0_158 = arith.constant 0 : index
    %533 = vector.load %arg15[%c56_157, %c0_158] : memref<64x128xf32, #tpu.memory_space<vmem>>, vector<8x128xf32>
    tpu.vector_store %arg15[%c56_157, %c0_158], %532 {strides = array<i32>} : memref<64x128xf32, #tpu.memory_space<vmem>>, vector<8x128xf32>,
    %c0_159 = arith.constant 0 : index
    %c0_160 = arith.constant 0 : index
    %c0_161 = arith.constant 0 : index
    %534 = vector.load %arg12[%c0_159, %c0_160, %c0_161] : memref<2x8x128xf32, #tpu.memory_space<vmem>>, vector<1x8x128xf32>
    %535 = vector.shape_cast %534 : vector<1x8x128xf32> to vector<8x128xf32>
    %536 = vector.shape_cast %467 : vector<8x128xf32> to vector<1x8x128xf32>
    tpu.vector_store %arg12[%c0_159, %c0_160, %c0_161], %536 {strides = array<i32>} : memref<2x8x128xf32, #tpu.memory_space<vmem>>, vector<1x8x128xf32>,
    %c0_162 = arith.constant 0 : index
    %c0_163 = arith.constant 0 : index
    %c0_164 = arith.constant 0 : index
    %537 = vector.load %arg13[%c0_162, %c0_163, %c0_164] : memref<2x8x128xf32, #tpu.memory_space<vmem>>, vector<1x8x128xf32>
    %538 = vector.shape_cast %537 : vector<1x8x128xf32> to vector<8x128xf32>
    %539 = vector.shape_cast %465 : vector<8x128xf32> to vector<1x8x128xf32>
    tpu.vector_store %arg13[%c0_162, %c0_163, %c0_164], %539 {strides = array<i32>} : memref<2x8x128xf32, #tpu.memory_space<vmem>>, vector<1x8x128xf32>,
    %c1_165 = arith.constant 1 : index
    %c0_166 = arith.constant 0 : index
    %c0_167 = arith.constant 0 : index
    %540 = vector.load %arg12[%c1_165, %c0_166, %c0_167] : memref<2x8x128xf32, #tpu.memory_space<vmem>>, vector<1x8x128xf32>
    %541 = vector.shape_cast %540 : vector<1x8x128xf32> to vector<8x128xf32>
    %542 = vector.shape_cast %532 : vector<8x128xf32> to vector<1x8x128xf32>
    tpu.vector_store %arg12[%c1_165, %c0_166, %c0_167], %542 {strides = array<i32>} : memref<2x8x128xf32, #tpu.memory_space<vmem>>, vector<1x8x128xf32>,
    %c1_168 = arith.constant 1 : index
    %c0_169 = arith.constant 0 : index
    %c0_170 = arith.constant 0 : index
    %543 = vector.load %arg13[%c1_168, %c0_169, %c0_170] : memref<2x8x128xf32, #tpu.memory_space<vmem>>, vector<1x8x128xf32>
    %544 = vector.shape_cast %543 : vector<1x8x128xf32> to vector<8x128xf32>
    %545 = vector.shape_cast %530 : vector<8x128xf32> to vector<1x8x128xf32>
    tpu.vector_store %arg13[%c1_168, %c0_169, %c0_170], %545 {strides = array<i32>} : memref<2x8x128xf32, #tpu.memory_space<vmem>>, vector<1x8x128xf32>,
    %c1_i32_171 = arith.constant 1 : i32
    %546 = tpu.memref_slice %arg18[%c1_i32_171] : memref<2x!tpu.dma_semaphore, #tpu.memory_space<semaphore_mem>> -> memref<1x!tpu.dma_semaphore, #tpu.memory_space<semaphore_mem>>
    %547 = tpu.memref_squeeze %546 : memref<1x!tpu.dma_semaphore, #tpu.memory_space<semaphore_mem>> -> memref<!tpu.dma_semaphore, #tpu.memory_space<semaphore_mem>>
    tpu.wait_dma2 semaphore(%547 : memref<!tpu.dma_semaphore, #tpu.memory_space<semaphore_mem>>) src(%arg7 : memref<128x256xbf16, #tpu.memory_space<any>>) dst(%arg17 : memref<128x256xbf16, #tpu.memory_space<vmem>>)
    %c0_172 = arith.constant 0 : index
    %c0_173 = arith.constant 0 : index
    %548 = vector.load %arg15[%c0_172, %c0_173] : memref<64x128xf32, #tpu.memory_space<vmem>>, vector<64x128xf32>
    %549 = arith.truncf %548 : vector<64x128xf32> to vector<64x128xbf16>
    %c0_174 = arith.constant 0 : index
    %c0_175 = arith.constant 0 : index
    %550 = vector.load %arg17[%c0_174, %c0_175] : memref<128x256xbf16, #tpu.memory_space<vmem>>, vector<128x256xbf16>
    %cst_176 = arith.constant dense<0.000000e+00> : vector<64x256xf32>
    %551 = tpu.matmul %549, %550, %cst_176 {dimension_numbers = #tpu.dot_dimension_numbers<[1], [0], [0], [1], [0, 0, 1, 1], [], []>} : vector<64x128xbf16>, vector<128x256xbf16>, vector<64x256xf32> -> vector<64x256xf32>
    %c0_177 = arith.constant 0 : index
    %c0_178 = arith.constant 0 : index
    %552 = vector.load %arg8[%c0_177, %c0_178] : memref<1x256xf32, #tpu.memory_space<vmem>>, vector<1x256xf32>
    %553 = vector.broadcast %552 : vector<1x256xf32> to vector<64x256xf32>
    %554 = arith.addf %551, %553 : vector<64x256xf32>
    %c0_179 = arith.constant 0 : index
    %c0_180 = arith.constant 0 : index
    %555 = vector.load %arg11[%c0_179, %c0_180] : memref<64x256xf32, #tpu.memory_space<vmem>>, vector<64x256xf32>
    tpu.vector_store %arg11[%c0_179, %c0_180], %554 {strides = array<i32>} : memref<64x256xf32, #tpu.memory_space<vmem>>, vector<64x256xf32>,
    return
  }
}

</mosaic_0001>

<llo_original>
// kernel: nlp_model_forward.1
$region0: #{nlp_model_forward.1}
  #allocation0 [shape = 'u32[]', space=smem, size = 0x4, offset = 0x4, fixed_abs, tag = 'smem constant byte address 0x4 - core index']
  #allocation1 [shape = 'u32[144,128]{1,0:T(1,128)}', space=vmem, size = 0x12000, scoped, tag = 'internal scratch']
  #allocation2 [shape = 'f32[64,512]{1,0:T(8,128)}', space=vmem, size = 0x20000, scoped, tag = 'scratch operand']
  #allocation3 [shape = 'f32[64,128]{1,0:T(8,128)}', space=vmem, size = 0x8000, scoped, tag = 'scratch operand']
  #allocation4 [shape = 'bf16[256,512]{1,0:T(16,128)(2,1)}', space=vmem, size = 0x40000, scoped, tag = 'scratch operand']
  #allocation5 [shape = 'bf16[128,256]{1,0:T(16,128)(2,1)}', space=vmem, size = 0x10000, scoped, tag = 'scratch operand']
  #allocation6 [shape = 's32[2]{0}', space=sflag, size = 0x8, scoped, tag = 'scratch operand']
  #allocation17 [shape = 's32[]', space=sflag, size = 0x4, offset = 0, fixed_abs, tag = 'sflag constant byte address 0x0 - dummy sync flag']
  #allocation19 [shape = 's32[]', space=sflag, size = 0x4, offset = 0, fixed_abs, tag = 'sflag constant byte address 0x0 - dummy sync flag']
  %s0 = inlined_call_operand.vmem [shape: s32[64,1], index: 0, kind: input, shape index: {}]
  %s1 = inlined_call_operand.hbm [shape: bf16[256,128], index: 1, kind: input, shape index: {}]
  %s2 = inlined_call_operand.hbm [shape: bf16[128,512], index: 2, kind: input, shape index: {}]
  %s3 = inlined_call_operand.hbm [shape: bf16[128,512], index: 3, kind: input, shape index: {}]
  %s4 = inlined_call_operand.vmem [shape: f32[1,512], index: 4, kind: input, shape index: {}]
  %s5 = inlined_call_operand.hbm [shape: bf16[256,512], index: 5, kind: input, shape index: {}]
  %s6 = inlined_call_operand.vmem [shape: f32[1,512], index: 6, kind: input, shape index: {}]
  %s7 = inlined_call_operand.hbm [shape: bf16[128,256], index: 7, kind: input, shape index: {}]
  %s8 = inlined_call_operand.vmem [shape: f32[1,256], index: 8, kind: input, shape index: {}]
  %s9 = inlined_call_operand.vmem [shape: f32[2,8,128], index: 9, kind: input, shape index: {}]
  %s10 = inlined_call_operand.vmem [shape: f32[2,8,128], index: 10, kind: input, shape index: {}]
  %s11 = inlined_call_operand.hbm [shape: f32[64,256], index: 11, kind: output, shape index: {0}]
  %s12 = inlined_call_operand.hbm [shape: f32[2,8,128], index: 12, kind: output, shape index: {1}]
  %s13 = inlined_call_operand.hbm [shape: f32[2,8,128], index: 13, kind: output, shape index: {2}]
  %14 = xla_tuple %s11, %s12, %s13
  %s15 = sld [smem:[#allocation0]]
  $region74: #{nlp_model_forward.1} parent=0
    _
  %s17 = ssub.s32 1, %s15
  %s18 = scalar_select 0, %s17, %s15
  $region1: #{nlp_model_forward.1} parent=0
    #allocation7 [shape = 'u8[65536]{0}', space=vmem, size = 0x10000, scoped, tag = 'input window, operand 1, single buffered']
    #allocation8 [shape = 's32[1]{0}', space=sflag, size = 0x4, scoped, tag = 'scoped memory for nlp_model_forward.1']
    #allocation9 [shape = 's32[1]{0}', space=sflag, size = 0x4, scoped, tag = 'scoped memory for nlp_model_forward.1']
    #allocation10 [shape = 'u8[131072]{0}', space=vmem, size = 0x20000, scoped, tag = 'input window, operand 2, single buffered']
    #allocation11 [shape = 's32[1]{0}', space=sflag, size = 0x4, scoped, tag = 'scoped memory for nlp_model_forward.1']
    #allocation12 [shape = 'u8[131072]{0}', space=vmem, size = 0x20000, scoped, tag = 'input window, operand 3, single buffered']
    #allocation13 [shape = 'u8[65536]{0}', space=vmem, size = 0x10000, scoped, tag = 'output window, operand 0, single buffered']
    #allocation14 [shape = 'u8[8192]{0}', space=vmem, size = 0x2000, scoped, tag = 'output window, operand 1, single buffered']
    #allocation15 [shape = 's32[1]{0}', space=sflag, size = 0x4, scoped, tag = 'scoped memory for nlp_model_forward.1']
    #allocation16 [shape = 'u8[8192]{0}', space=vmem, size = 0x2000, scoped, tag = 'output window, operand 2, single buffered']
    #allocation18 [shape = 'u32[9]{0}', space=smem, size = 0x24, scoped, tag = 'DMA stride descriptor']
    #allocation20 [shape = 'u32[9]{0}', space=smem, size = 0x24, scoped, tag = 'DMA stride descriptor']
    %19 = vsyncpa [#allocation8], 0
    %20 = vsyncpa [#allocation11], 0
    %21 = vsyncpa [#allocation9], 0
    %22 = vsyncpa [#allocation15], 0
    // Predicated region
    $region2: #{nlp_model_forward.1} parent=1 // pred_check
      _
    $region3: #{nlp_model_forward.1} parent=1 // pred_check_branch
      %24 = sbr.rel (0) target = $region5
    $region4: #{nlp_model_forward.1} parent=1 // pred_region
      _
    $region5: #{nlp_model_forward.1} parent=1 // pred_fallthru
      _
    // Predicated region
    $region6: #{nlp_model_forward.1} parent=1 // pred_check
      _
    $region7: #{nlp_model_forward.1} parent=1 // pred_check_branch
      %26 = sbr.rel (0) target = $region9
    $region8: #{nlp_model_forward.1} parent=1 // pred_region
      %s28 = ssub.s32 2048, 2048
      %29 = vsyncadd [#allocation8], %s28
      %s30 = sshll.u32 [#allocation7], 4
      %s31 = int_to_ptr.vmem [resolvable:$true] %s30
      %36 = dma.hbm_to_vmem [thread:$0]  %s1, 2048, %s31, [#allocation8], 64, 64, 4
    $region9: #{nlp_model_forward.1} parent=1 // pred_fallthru
      _
    // Predicated region
    $region10: #{nlp_model_forward.1} parent=1 // pred_check
      _
    $region11: #{nlp_model_forward.1} parent=1 // pred_check_branch
      %38 = sbr.rel (0) target = $region13
    $region12: #{nlp_model_forward.1} parent=1 // pred_region
      %s40 = ssub.s32 4096, 4096
      %41 = vsyncadd [#allocation11], %s40
      %s42 = sshll.u32 [#allocation10], 4
      %s43 = int_to_ptr.vmem [resolvable:$true] %s42
      %48 = dma.hbm_to_vmem [thread:$0]  %s2, 4096, %s43, [#allocation11], 256, 256, 16
    $region13: #{nlp_model_forward.1} parent=1 // pred_fallthru
      _
    // Predicated region
    $region14: #{nlp_model_forward.1} parent=1 // pred_check
      _
    $region15: #{nlp_model_forward.1} parent=1 // pred_check_branch
      %50 = sbr.rel (0) target = $region17
    $region16: #{nlp_model_forward.1} parent=1 // pred_region
      %s52 = ssub.s32 4096, 4096
      %53 = vsyncadd [#allocation11], %s52
      %s54 = sshll.u32 [#allocation12], 4
      %s55 = int_to_ptr.vmem [resolvable:$true] %s54
      %60 = dma.hbm_to_vmem [thread:$0]  %s3, 4096, %s55, [#allocation11], 256, 256, 16
    $region17: #{nlp_model_forward.1} parent=1 // pred_fallthru
      _
    // Predicated region
    $region18: #{nlp_model_forward.1} parent=1 // pred_check
      _
    $region19: #{nlp_model_forward.1} parent=1 // pred_check_branch
      %62 = sbr.rel (0) target = $region21
    $region20: #{nlp_model_forward.1} parent=1 // pred_region
      _
    $region21: #{nlp_model_forward.1} parent=1 // pred_fallthru
      _
    // Predicated region
    $region22: #{nlp_model_forward.1} parent=1 // pred_check
      _
    $region23: #{nlp_model_forward.1} parent=1 // pred_check_branch
      %64 = sbr.rel (0) target = $region25
    $region24: #{nlp_model_forward.1} parent=1 // pred_region
      _
    $region25: #{nlp_model_forward.1} parent=1 // pred_fallthru
      _
    // Predicated region
    $region26: #{nlp_model_forward.1} parent=1 // pred_check
      _
    $region27: #{nlp_model_forward.1} parent=1 // pred_check_branch
      %66 = sbr.rel (0) target = $region29
    $region28: #{nlp_model_forward.1} parent=1 // pred_region
      _
    $region29: #{nlp_model_forward.1} parent=1 // pred_fallthru
      _
    // Predicated region
    $region30: #{nlp_model_forward.1} parent=1 // pred_check
      _
    $region31: #{nlp_model_forward.1} parent=1 // pred_check_branch
      %68 = sbr.rel (0) target = $region33
    $region32: #{nlp_model_forward.1} parent=1 // pred_region
      _
    $region33: #{nlp_model_forward.1} parent=1 // pred_fallthru
      _
    // Predicated region
    $region34: #{nlp_model_forward.1} parent=1 // pred_check
      _
    $region35: #{nlp_model_forward.1} parent=1 // pred_check_branch
      %70 = sbr.rel (0) target = $region37
    $region36: #{nlp_model_forward.1} parent=1 // pred_region
      _
    $region37: #{nlp_model_forward.1} parent=1 // pred_fallthru
      _
    // Predicated region
    $region38: #{nlp_model_forward.1} parent=1 // pred_check
      _
    $region39: #{nlp_model_forward.1} parent=1 // pred_check_branch
      %72 = sbr.rel (0) target = $region41
    $region40: #{nlp_model_forward.1} parent=1 // pred_region
      %73 = dma.done [#allocation8], 2048
    $region41: #{nlp_model_forward.1} parent=1 // pred_fallthru
      _
    // Predicated region
    $region42: #{nlp_model_forward.1} parent=1 // pred_check
      _
    $region43: #{nlp_model_forward.1} parent=1 // pred_check_branch
      %75 = sbr.rel (0) target = $region45
    $region44: #{nlp_model_forward.1} parent=1 // pred_region
      %76 = dma.done [#allocation11], 4096
    $region45: #{nlp_model_forward.1} parent=1 // pred_fallthru
      _
    // Predicated region
    $region46: #{nlp_model_forward.1} parent=1 // pred_check
      _
    $region47: #{nlp_model_forward.1} parent=1 // pred_check_branch
      %78 = sbr.rel (0) target = $region49
    $region48: #{nlp_model_forward.1} parent=1 // pred_region
      %79 = dma.done [#allocation11], 4096
    $region49: #{nlp_model_forward.1} parent=1 // pred_fallthru
      _
    %s82 = sshll.u32 1, 14
    %s83 = sxor.u32 4294967295, %s82
    %s85 = sld [smem:[#allocation0]]
    %s86 = sadd.s32 2, %s85
    %s88 = sshll.u32 7, 26
    %s89 = sxor.u32 4294967295, %s88
    %s90 = sand.u32 0, %s89
    %s91 = sshll.u32 %s86, 26
    %s92 = sor.u32 %s90, %s91
    %s93 = sshll.u32 [#allocation4], 4
    %s94 = int_to_ptr.vmem [resolvable:$true] %s93
    %97 = sst [smem:[#allocation18]] 512
    %s98 = scalar_lea.smem [#allocation18], 1
    %99 = sst [smem:[%s98]] 512
    %s100 = scalar_lea.smem [#allocation18], 2
    %101 = sst [smem:[%s100]] 4
    %s102 = scalar_lea.smem [#allocation18], 3
    %103 = sst [smem:[%s102]] 64
    %s104 = scalar_lea.smem [#allocation18], 4
    %105 = sst [smem:[%s104]] 128
    %s106 = scalar_lea.smem [#allocation18], 5
    %107 = sst [smem:[%s106]] 2
    %s108 = scalar_lea.smem [#allocation18], 6
    %109 = sst [smem:[%s108]] 256
    %s110 = scalar_lea.smem [#allocation18], 7
    %111 = sst [smem:[%s110]] 64
    %s112 = scalar_lea.smem [#allocation18], 8
    %113 = sst [smem:[%s112]] 4
    %115 = dma.general %s5, 8192, %s94, [#allocation6], [#allocation17], [#allocation18], %s92, 0
    %s116 = scalar_lea.sflag [#allocation6], 1
    %s118 = sshll.u32 1, 14
    %s119 = sxor.u32 4294967295, %s118
    %s121 = sadd.s32 2, %s85
    %s123 = sshll.u32 7, 26
    %s124 = sxor.u32 4294967295, %s123
    %s125 = sand.u32 0, %s124
    %s126 = sshll.u32 %s121, 26
    %s127 = sor.u32 %s125, %s126
    %s128 = sshll.u32 [#allocation5], 4
    %s129 = int_to_ptr.vmem [resolvable:$true] %s128
    %132 = sst [smem:[#allocation20]] 256
    %s133 = scalar_lea.smem [#allocation20], 1
    %134 = sst [smem:[%s133]] 256
    %s135 = scalar_lea.smem [#allocation20], 2
    %136 = sst [smem:[%s135]] 2
    %s137 = scalar_lea.smem [#allocation20], 3
    %138 = sst [smem:[%s137]] 64
    %s139 = scalar_lea.smem [#allocation20], 4
    %140 = sst [smem:[%s139]] 128
    %s141 = scalar_lea.smem [#allocation20], 5
    %142 = sst [smem:[%s141]] 2
    %s143 = scalar_lea.smem [#allocation20], 6
    %144 = sst [smem:[%s143]] 128
    %s145 = scalar_lea.smem [#allocation20], 7
    %146 = sst [smem:[%s145]] 64
    %s147 = scalar_lea.smem [#allocation20], 8
    %148 = sst [smem:[%s147]] 4
    %150 = dma.general %s7, 2048, %s129, %s116, [#allocation19], [#allocation20], %s127, 0
    %v151 = vld [vmem:[%s0] sm:$0xff]
    %v152 = vld [vmem:[%s0 + $0x8] sm:$0xff]
    %v153 = vld [vmem:[%s0 + $0x10] sm:$0xff]
    %v154 = vld [vmem:[%s0 + $0x18] sm:$0xff]
    %v155 = vld [vmem:[%s0 + $0x20] sm:$0xff]
    %v156 = vld [vmem:[%s0 + $0x28] sm:$0xff]
    %v157 = vld [vmem:[%s0 + $0x30] sm:$0xff]
    %v158 = vld [vmem:[%s0 + $0x38] sm:$0xff]
    %v159 = vlaneseq
    %v160 = vand.u32 %v159, 127
    %v161 = vadd.s32 %v160, 128
    %162 = vset.pattern.permute.xlu0 0
    %163 = vperm.xlu0 %162, %v151
    %v164 = vpop.permute.xlu0 %163
    %165 = vset.pattern.permute.xlu0 0
    %166 = vperm.xlu0 %165, %v152
    %v167 = vpop.permute.xlu0 %166
    %168 = vset.pattern.permute.xlu0 0
    %169 = vperm.xlu0 %168, %v153
    %v170 = vpop.permute.xlu0 %169
    %171 = vset.pattern.permute.xlu0 0
    %172 = vperm.xlu0 %171, %v154
    %v173 = vpop.permute.xlu0 %172
    %174 = vset.pattern.permute.xlu0 0
    %175 = vperm.xlu0 %174, %v155
    %v176 = vpop.permute.xlu0 %175
    %177 = vset.pattern.permute.xlu0 0
    %178 = vperm.xlu0 %177, %v156
    %v179 = vpop.permute.xlu0 %178
    %180 = vset.pattern.permute.xlu0 0
    %181 = vperm.xlu0 %180, %v157
    %v182 = vpop.permute.xlu0 %181
    %183 = vset.pattern.permute.xlu0 0
    %184 = vperm.xlu0 %183, %v158
    %v185 = vpop.permute.xlu0 %184
    %vm186 = vcmp.eq.s32.totalorder %v160, %v164
    %vm187 = vcmp.eq.s32.totalorder %v161, %v164
    %vm188 = vcmp.eq.s32.totalorder %v160, %v167
    %vm189 = vcmp.eq.s32.totalorder %v161, %v167
    %vm190 = vcmp.eq.s32.totalorder %v160, %v170
    %vm191 = vcmp.eq.s32.totalorder %v161, %v170
    %vm192 = vcmp.eq.s32.totalorder %v160, %v173
    %vm193 = vcmp.eq.s32.totalorder %v161, %v173
    %vm194 = vcmp.eq.s32.totalorder %v160, %v176
    %vm195 = vcmp.eq.s32.totalorder %v161, %v176
    %vm196 = vcmp.eq.s32.totalorder %v160, %v179
    %vm197 = vcmp.eq.s32.totalorder %v161, %v179
    %vm198 = vcmp.eq.s32.totalorder %v160, %v182
    %vm199 = vcmp.eq.s32.totalorder %v161, %v182
    %vm200 = vcmp.eq.s32.totalorder %v160, %v185
    %vm201 = vcmp.eq.s32.totalorder %v161, %v185
    %v202 = vsel %vm186, 1, 0
    %v203 = vsel %vm187, 1, 0
    %v204 = vsel %vm188, 1, 0
    %v205 = vsel %vm189, 1, 0
    %v206 = vsel %vm190, 1, 0
    %v207 = vsel %vm191, 1, 0
    %v208 = vsel %vm192, 1, 0
    %v209 = vsel %vm193, 1, 0
    %v210 = vsel %vm194, 1, 0
    %v211 = vsel %vm195, 1, 0
    %v212 = vsel %vm196, 1, 0
    %v213 = vsel %vm197, 1, 0
    %v214 = vsel %vm198, 1, 0
    %v215 = vsel %vm199, 1, 0
    %v216 = vsel %vm200, 1, 0
    %v217 = vsel %vm201, 1, 0
    %v218 = vcvt.s32.f32 %v202
    %v219 = vcvt.s32.f32 %v203
    %v220 = vcvt.s32.f32 %v204
    %v221 = vcvt.s32.f32 %v205
    %v222 = vcvt.s32.f32 %v206
    %v223 = vcvt.s32.f32 %v207
    %v224 = vcvt.s32.f32 %v208
    %v225 = vcvt.s32.f32 %v209
    %v226 = vcvt.s32.f32 %v210
    %v227 = vcvt.s32.f32 %v211
    %v228 = vcvt.s32.f32 %v212
    %v229 = vcvt.s32.f32 %v213
    %v230 = vcvt.s32.f32 %v214
    %v231 = vcvt.s32.f32 %v215
    %v232 = vcvt.s32.f32 %v216
    %v233 = vcvt.s32.f32 %v217
    %v234 = vpack.c.bf16 %v220, %v218
    %v235 = vpack.c.bf16 %v221, %v219
    %v236 = vpack.c.bf16 %v224, %v222
    %v237 = vpack.c.bf16 %v225, %v223
    %v238 = vpack.c.bf16 %v228, %v226
    %v239 = vpack.c.bf16 %v229, %v227
    %v240 = vpack.c.bf16 %v232, %v230
    %v241 = vpack.c.bf16 %v233, %v231
    %v242 = vld [vmem:[#allocation7] sm:$0xf]
    %v243 = vld [vmem:[#allocation7 + $0x4] sm:$0xf]
    %v244 = vld [vmem:[#allocation7 + $0x8] sm:$0xf]
    %v245 = vld [vmem:[#allocation7 + $0xc] sm:$0xf]
    %v246 = vld [vmem:[#allocation7 + $0x10] sm:$0xf]
    %v247 = vld [vmem:[#allocation7 + $0x14] sm:$0xf]
    %v248 = vld [vmem:[#allocation7 + $0x18] sm:$0xf]
    %v249 = vld [vmem:[#allocation7 + $0x1c] sm:$0xf]
    %v250 = vld [vmem:[#allocation7 + $0x20] sm:$0xf]
    %v251 = vld [vmem:[#allocation7 + $0x24] sm:$0xf]
    %v252 = vld [vmem:[#allocation7 + $0x28] sm:$0xf]
    %v253 = vld [vmem:[#allocation7 + $0x2c] sm:$0xf]
    %v254 = vld [vmem:[#allocation7 + $0x30] sm:$0xf]
    %v255 = vld [vmem:[#allocation7 + $0x34] sm:$0xf]
    %v256 = vld [vmem:[#allocation7 + $0x38] sm:$0xf]
    %v257 = vld [vmem:[#allocation7 + $0x3c] sm:$0xf]
    %v258 = vld [vmem:[#allocation7 + $0x40] sm:$0xf]
    %v259 = vld [vmem:[#allocation7 + $0x44] sm:$0xf]
    %v260 = vld [vmem:[#allocation7 + $0x48] sm:$0xf]
    %v261 = vld [vmem:[#allocation7 + $0x4c] sm:$0xf]
    %v262 = vld [vmem:[#allocation7 + $0x50] sm:$0xf]
    %v263 = vld [vmem:[#allocation7 + $0x54] sm:$0xf]
    %v264 = vld [vmem:[#allocation7 + $0x58] sm:$0xf]
    %v265 = vld [vmem:[#allocation7 + $0x5c] sm:$0xf]
    %v266 = vld [vmem:[#allocation7 + $0x60] sm:$0xf]
    %v267 = vld [vmem:[#allocation7 + $0x64] sm:$0xf]
    %v268 = vld [vmem:[#allocation7 + $0x68] sm:$0xf]
    %v269 = vld [vmem:[#allocation7 + $0x6c] sm:$0xf]
    %v270 = vld [vmem:[#allocation7 + $0x70] sm:$0xf]
    %v271 = vld [vmem:[#allocation7 + $0x74] sm:$0xf]
    %v272 = vld [vmem:[#allocation7 + $0x78] sm:$0xf]
    %v273 = vld [vmem:[#allocation7 + $0x7c] sm:$0xf]
    %v306 = vunpack.c.l.b16 %v242
    %v307 = vunpack.c.l.b16 %v243
    %v308 = vunpack.c.l.b16 %v244
    %v309 = vunpack.c.l.b16 %v245
    %v310 = vunpack.c.l.b16 %v246
    %v311 = vunpack.c.l.b16 %v247
    %v312 = vunpack.c.l.b16 %v248
    %v313 = vunpack.c.l.b16 %v249
    %v314 = vunpack.c.l.b16 %v250
    %v315 = vunpack.c.l.b16 %v251
    %v316 = vunpack.c.l.b16 %v252
    %v317 = vunpack.c.l.b16 %v253
    %v318 = vunpack.c.l.b16 %v254
    %v319 = vunpack.c.l.b16 %v255
    %v320 = vunpack.c.l.b16 %v256
    %v321 = vunpack.c.l.b16 %v257
    %v322 = vunpack.c.l.b16 %v258
    %v323 = vunpack.c.l.b16 %v259
    %v324 = vunpack.c.l.b16 %v260
    %v325 = vunpack.c.l.b16 %v261
    %v326 = vunpack.c.l.b16 %v262
    %v327 = vunpack.c.l.b16 %v263
    %v328 = vunpack.c.l.b16 %v264
    %v329 = vunpack.c.l.b16 %v265
    %v330 = vunpack.c.l.b16 %v266
    %v331 = vunpack.c.l.b16 %v267
    %v332 = vunpack.c.l.b16 %v268
    %v333 = vunpack.c.l.b16 %v269
    %v334 = vunpack.c.l.b16 %v270
    %v335 = vunpack.c.l.b16 %v271
    %v336 = vunpack.c.l.b16 %v272
    %v337 = vunpack.c.l.b16 %v273
    %v338 = vpack.c.b16 %v307, %v306
    %v339 = vpack.c.b16 %v309, %v308
    %v340 = vpack.c.b16 %v311, %v310
    %v341 = vpack.c.b16 %v313, %v312
    %v342 = vpack.c.b16 %v315, %v314
    %v343 = vpack.c.b16 %v317, %v316
    %v344 = vpack.c.b16 %v319, %v318
    %v345 = vpack.c.b16 %v321, %v320
    %v346 = vpack.c.b16 %v323, %v322
    %v347 = vpack.c.b16 %v325, %v324
    %v348 = vpack.c.b16 %v327, %v326
    %v349 = vpack.c.b16 %v329, %v328
    %v350 = vpack.c.b16 %v331, %v330
    %v351 = vpack.c.b16 %v333, %v332
    %v352 = vpack.c.b16 %v335, %v334
    %v353 = vpack.c.b16 %v337, %v336
    %370 = vmatprep.subr.bf16.mxu0 0
    %371 = vmatpush1.bf16.msra.mxu0 %v338
    %372 = vmatprep.subr.bf16.mxu0 0
    %373 = vmatpush1.bf16.msra.mxu0 %v339
    %374 = vmatprep.subr.bf16.mxu0 0
    %375 = vmatpush1.bf16.msra.mxu0 %v340
    %376 = vmatprep.subr.bf16.mxu0 0
    %377 = vmatpush1.bf16.msra.mxu0 %v341
    %378 = vmatprep.subr.bf16.mxu0 0
    %379 = vmatpush1.bf16.msra.mxu0 %v342
    %380 = vmatprep.subr.bf16.mxu0 0
    %381 = vmatpush1.bf16.msra.mxu0 %v343
    %382 = vmatprep.subr.bf16.mxu0 0
    %383 = vmatpush1.bf16.msra.mxu0 %v344
    %384 = vmatprep.subr.bf16.mxu0 0
    %385 = vmatpush1.bf16.msra.mxu0 %v345
    %386 = vmatprep.subr.bf16.mxu0 0
    %387 = vmatpush1.bf16.msra.mxu0 %v346
    %388 = vmatprep.subr.bf16.mxu0 0
    %389 = vmatpush1.bf16.msra.mxu0 %v347
    %390 = vmatprep.subr.bf16.mxu0 0
    %391 = vmatpush1.bf16.msra.mxu0 %v348
    %392 = vmatprep.subr.bf16.mxu0 0
    %393 = vmatpush1.bf16.msra.mxu0 %v349
    %394 = vmatprep.subr.bf16.mxu0 0
    %395 = vmatpush1.bf16.msra.mxu0 %v350
    %396 = vmatprep.subr.bf16.mxu0 0
    %397 = vmatpush1.bf16.msra.mxu0 %v351
    %398 = vmatprep.subr.bf16.mxu0 0
    %399 = vmatpush1.bf16.msra.mxu0 %v352
    %400 = vmatprep.subr.bf16.mxu0 0
    %401 = vmatpush1.bf16.msra.mxu0 %v353
    %402 = vmatprep.mubr.bf16.mxu0 %v235
    %403 = vmatmul.mubr.bf16.gmra.mrb[0].mxu0 %v234
    %v404 = vpop.f32.mrb[0].mxu0
    %v405 = vadd.f32 0.0, %v404
    %v406 = vpop.f32.mrb[0].mxu0
    %v407 = vpop.f32.mrb[0].mxu0
    %v408 = vadd.f32 0.0, %v407
    %v409 = vpop.f32.mrb[0].mxu0
    %410 = vmatprep.mubr.bf16.mxu0 %v237
    %411 = vmatmul.mubr.bf16.gmra.mrb[0].mxu0 %v236
    %v412 = vpop.f32.mrb[0].mxu0
    %v413 = vadd.f32 0.0, %v412
    %v414 = vpop.f32.mrb[0].mxu0
    %v415 = vpop.f32.mrb[0].mxu0
    %v416 = vadd.f32 0.0, %v415
    %v417 = vpop.f32.mrb[0].mxu0
    %418 = vmatprep.mubr.bf16.mxu0 %v239
    %419 = vmatmul.mubr.bf16.gmra.mrb[0].mxu0 %v238
    %v420 = vpop.f32.mrb[0].mxu0
    %v421 = vadd.f32 0.0, %v420
    %v422 = vpop.f32.mrb[0].mxu0
    %v423 = vpop.f32.mrb[0].mxu0
    %v424 = vadd.f32 0.0, %v423
    %v425 = vpop.f32.mrb[0].mxu0
    %426 = vmatprep.mubr.bf16.mxu0 %v241
    %427 = vmatmul.mubr.bf16.gmra.mrb[0].mxu0 %v240
    %v428 = vpop.f32.mrb[0].mxu0
    %v429 = vadd.f32 0.0, %v428
    %v430 = vpop.f32.mrb[0].mxu0
    %v431 = vpop.f32.mrb[0].mxu0
    %v432 = vadd.f32 0.0, %v431
    %v433 = vpop.f32.mrb[0].mxu0
    %434 = vdwg.mxu0
    %v435 = vpack.c.bf16 %v408, %v405
    %v436 = vpack.c.bf16 %v416, %v413
    %v437 = vpack.c.bf16 %v424, %v421
    %v438 = vpack.c.bf16 %v432, %v429
    %v439 = vld [vmem:[#allocation10] sm:$0xff]
    %v440 = vld [vmem:[#allocation10 + $0x8] sm:$0xff]
    %v441 = vld [vmem:[#allocation10 + $0x10] sm:$0xff]
    %v442 = vld [vmem:[#allocation10 + $0x18] sm:$0xff]
    %v443 = vld [vmem:[#allocation10 + $0x20] sm:$0xff]
    %v444 = vld [vmem:[#allocation10 + $0x28] sm:$0xff]
    %v445 = vld [vmem:[#allocation10 + $0x30] sm:$0xff]
    %v446 = vld [vmem:[#allocation10 + $0x38] sm:$0xff]
    %v447 = vld [vmem:[#allocation10 + $0x40] sm:$0xff]
    %v448 = vld [vmem:[#allocation10 + $0x48] sm:$0xff]
    %v449 = vld [vmem:[#allocation10 + $0x50] sm:$0xff]
    %v450 = vld [vmem:[#allocation10 + $0x58] sm:$0xff]
    %v451 = vld [vmem:[#allocation10 + $0x60] sm:$0xff]
    %v452 = vld [vmem:[#allocation10 + $0x68] sm:$0xff]
    %v453 = vld [vmem:[#allocation10 + $0x70] sm:$0xff]
    %v454 = vld [vmem:[#allocation10 + $0x78] sm:$0xff]
    %v455 = vld [vmem:[#allocation10 + $0x80] sm:$0xff]
    %v456 = vld [vmem:[#allocation10 + $0x88] sm:$0xff]
    %v457 = vld [vmem:[#allocation10 + $0x90] sm:$0xff]
    %v458 = vld [vmem:[#allocation10 + $0x98] sm:$0xff]
    %v459 = vld [vmem:[#allocation10 + $0xa0] sm:$0xff]
    %v460 = vld [vmem:[#allocation10 + $0xa8] sm:$0xff]
    %v461 = vld [vmem:[#allocation10 + $0xb0] sm:$0xff]
    %v462 = vld [vmem:[#allocation10 + $0xb8] sm:$0xff]
    %v463 = vld [vmem:[#allocation10 + $0xc0] sm:$0xff]
    %v464 = vld [vmem:[#allocation10 + $0xc8] sm:$0xff]
    %v465 = vld [vmem:[#allocation10 + $0xd0] sm:$0xff]
    %v466 = vld [vmem:[#allocation10 + $0xd8] sm:$0xff]
    %v467 = vld [vmem:[#allocation10 + $0xe0] sm:$0xff]
    %v468 = vld [vmem:[#allocation10 + $0xe8] sm:$0xff]
    %v469 = vld [vmem:[#allocation10 + $0xf0] sm:$0xff]
    %v470 = vld [vmem:[#allocation10 + $0xf8] sm:$0xff]
    %v471 = vld [vmem:[%s4] sm:$0xf]
    %v473 = vlaneseq
    %v474 = vshrl.u32 %v473, 7
    %v475 = vsub.s32 0, %v474
    %v476 = vrot.slane %v471, %v475
    %v477 = vlaneseq
    %v478 = vshrl.u32 %v477, 7
    %v479 = vsub.s32 1, %v478
    %v480 = vrot.slane %v471, %v479
    %v481 = vlaneseq
    %v482 = vshrl.u32 %v481, 7
    %v483 = vsub.s32 2, %v482
    %v484 = vrot.slane %v471, %v483
    %v485 = vlaneseq
    %v486 = vshrl.u32 %v485, 7
    %v487 = vsub.s32 3, %v486
    %v488 = vrot.slane %v471, %v487
    %v525 = vunpack.c.l.b16 %v439
    %v526 = vunpack.c.h.b16 %v439
    %v527 = vunpack.c.l.b16 %v440
    %v528 = vunpack.c.h.b16 %v440
    %v529 = vunpack.c.l.b16 %v441
    %v530 = vunpack.c.h.b16 %v441
    %v531 = vunpack.c.l.b16 %v442
    %v532 = vunpack.c.h.b16 %v442
    %v533 = vunpack.c.l.b16 %v443
    %v534 = vunpack.c.h.b16 %v443
    %v535 = vunpack.c.l.b16 %v444
    %v536 = vunpack.c.h.b16 %v444
    %v537 = vunpack.c.l.b16 %v445
    %v538 = vunpack.c.h.b16 %v445
    %v539 = vunpack.c.l.b16 %v446
    %v540 = vunpack.c.h.b16 %v446
    %v541 = vunpack.c.l.b16 %v447
    %v542 = vunpack.c.h.b16 %v447
    %v543 = vunpack.c.l.b16 %v448
    %v544 = vunpack.c.h.b16 %v448
    %v545 = vunpack.c.l.b16 %v449
    %v546 = vunpack.c.h.b16 %v449
    %v547 = vunpack.c.l.b16 %v450
    %v548 = vunpack.c.h.b16 %v450
    %v549 = vunpack.c.l.b16 %v451
    %v550 = vunpack.c.h.b16 %v451
    %v551 = vunpack.c.l.b16 %v452
    %v552 = vunpack.c.h.b16 %v452
    %v553 = vunpack.c.l.b16 %v453
    %v554 = vunpack.c.h.b16 %v453
    %v555 = vunpack.c.l.b16 %v454
    %v556 = vunpack.c.h.b16 %v454
    %v557 = vunpack.c.l.b16 %v455
    %v558 = vunpack.c.h.b16 %v455
    %v559 = vunpack.c.l.b16 %v456
    %v560 = vunpack.c.h.b16 %v456
    %v561 = vunpack.c.l.b16 %v457
    %v562 = vunpack.c.h.b16 %v457
    %v563 = vunpack.c.l.b16 %v458
    %v564 = vunpack.c.h.b16 %v458
    %v565 = vunpack.c.l.b16 %v459
    %v566 = vunpack.c.h.b16 %v459
    %v567 = vunpack.c.l.b16 %v460
    %v568 = vunpack.c.h.b16 %v460
    %v569 = vunpack.c.l.b16 %v461
    %v570 = vunpack.c.h.b16 %v461
    %v571 = vunpack.c.l.b16 %v462
    %v572 = vunpack.c.h.b16 %v462
    %v573 = vunpack.c.l.b16 %v463
    %v574 = vunpack.c.h.b16 %v463
    %v575 = vunpack.c.l.b16 %v464
    %v576 = vunpack.c.h.b16 %v464
    %v577 = vunpack.c.l.b16 %v465
    %v578 = vunpack.c.h.b16 %v465
    %v579 = vunpack.c.l.b16 %v466
    %v580 = vunpack.c.h.b16 %v466
    %v581 = vunpack.c.l.b16 %v467
    %v582 = vunpack.c.h.b16 %v467
    %v583 = vunpack.c.l.b16 %v468
    %v584 = vunpack.c.h.b16 %v468
    %v585 = vunpack.c.l.b16 %v469
    %v586 = vunpack.c.h.b16 %v469
    %v587 = vunpack.c.l.b16 %v470
    %v588 = vunpack.c.h.b16 %v470
    %v589 = vpack.c.b16 %v529, %v525
    %v590 = vpack.c.b16 %v530, %v526
    %v591 = vpack.c.b16 %v531, %v527
    %v592 = vpack.c.b16 %v532, %v528
    %v593 = vpack.c.b16 %v537, %v533
    %v594 = vpack.c.b16 %v538, %v534
    %v595 = vpack.c.b16 %v539, %v535
    %v596 = vpack.c.b16 %v540, %v536
    %v597 = vpack.c.b16 %v545, %v541
    %v598 = vpack.c.b16 %v546, %v542
    %v599 = vpack.c.b16 %v547, %v543
    %v600 = vpack.c.b16 %v548, %v544
    %v601 = vpack.c.b16 %v553, %v549
    %v602 = vpack.c.b16 %v554, %v550
    %v603 = vpack.c.b16 %v555, %v551
    %v604 = vpack.c.b16 %v556, %v552
    %v605 = vpack.c.b16 %v561, %v557
    %v606 = vpack.c.b16 %v562, %v558
    %v607 = vpack.c.b16 %v563, %v559
    %v608 = vpack.c.b16 %v564, %v560
    %v609 = vpack.c.b16 %v569, %v565
    %v610 = vpack.c.b16 %v570, %v566
    %v611 = vpack.c.b16 %v571, %v567
    %v612 = vpack.c.b16 %v572, %v568
    %v613 = vpack.c.b16 %v577, %v573
    %v614 = vpack.c.b16 %v578, %v574
    %v615 = vpack.c.b16 %v579, %v575
    %v616 = vpack.c.b16 %v580, %v576
    %v617 = vpack.c.b16 %v585, %v581
    %v618 = vpack.c.b16 %v586, %v582
    %v619 = vpack.c.b16 %v587, %v583
    %v620 = vpack.c.b16 %v588, %v584
    %653 = vmatprep.subr.bf16.mxu0 %v590
    %654 = vmatpush1.bf16.msra.mxu0 %v589
    %655 = vmatprep.subr.bf16.mxu0 %v594
    %656 = vmatpush1.bf16.msra.mxu0 %v593
    %657 = vmatprep.subr.bf16.mxu0 %v598
    %658 = vmatpush1.bf16.msra.mxu0 %v597
    %659 = vmatprep.subr.bf16.mxu0 %v602
    %660 = vmatpush1.bf16.msra.mxu0 %v601
    %661 = vmatprep.subr.bf16.mxu0 %v606
    %662 = vmatpush1.bf16.msra.mxu0 %v605
    %663 = vmatprep.subr.bf16.mxu0 %v610
    %664 = vmatpush1.bf16.msra.mxu0 %v609
    %665 = vmatprep.subr.bf16.mxu0 %v614
    %666 = vmatpush1.bf16.msra.mxu0 %v613
    %667 = vmatprep.subr.bf16.mxu0 %v618
    %668 = vmatpush1.bf16.msra.mxu0 %v617
    %669 = vmatprep.subr.bf16.mxu0 0
    %670 = vmatpush1.bf16.msra.mxu0 0
    %671 = vmatprep.subr.bf16.mxu0 0
    %672 = vmatpush1.bf16.msra.mxu0 0
    %673 = vmatprep.subr.bf16.mxu0 0
    %674 = vmatpush1.bf16.msra.mxu0 0
    %675 = vmatprep.subr.bf16.mxu0 0
    %676 = vmatpush1.bf16.msra.mxu0 0
    %677 = vmatprep.subr.bf16.mxu0 0
    %678 = vmatpush1.bf16.msra.mxu0 0
    %679 = vmatprep.subr.bf16.mxu0 0
    %680 = vmatpush1.bf16.msra.mxu0 0
    %681 = vmatprep.subr.bf16.mxu0 0
    %682 = vmatpush1.bf16.msra.mxu0 0
    %683 = vmatprep.subr.bf16.mxu0 0
    %684 = vmatpush1.bf16.msra.mxu0 0
    %685 = vmatprep.mubr.bf16.mxu0 0
    %686 = vmatmul.mubr.bf16.gmra.mrb[0].mxu0 %v435
    %v687 = vpop.f32.mrb[0].mxu0
    %v688 = vadd.f32 %v476, %v687
    %v689 = vpop.f32.mrb[0].mxu0
    %v690 = vadd.f32 %v480, %v689
    %v691 = vpop.f32.mrb[0].mxu0
    %v692 = vadd.f32 %v476, %v691
    %v693 = vpop.f32.mrb[0].mxu0
    %v694 = vadd.f32 %v480, %v693
    %695 = vmatprep.mubr.bf16.mxu0 0
    %696 = vmatmul.mubr.bf16.gmra.mrb[0].mxu0 %v436
    %v697 = vpop.f32.mrb[0].mxu0
    %v698 = vadd.f32 %v476, %v697
    %v699 = vpop.f32.mrb[0].mxu0
    %v700 = vadd.f32 %v480, %v699
    %v701 = vpop.f32.mrb[0].mxu0
    %v702 = vadd.f32 %v476, %v701
    %v703 = vpop.f32.mrb[0].mxu0
    %v704 = vadd.f32 %v480, %v703
    %705 = vmatprep.mubr.bf16.mxu0 0
    %706 = vmatmul.mubr.bf16.gmra.mrb[0].mxu0 %v437
    %v707 = vpop.f32.mrb[0].mxu0
    %v708 = vadd.f32 %v476, %v707
    %v709 = vpop.f32.mrb[0].mxu0
    %v710 = vadd.f32 %v480, %v709
    %v711 = vpop.f32.mrb[0].mxu0
    %v712 = vadd.f32 %v476, %v711
    %v713 = vpop.f32.mrb[0].mxu0
    %v714 = vadd.f32 %v480, %v713
    %715 = vmatprep.mubr.bf16.mxu0 0
    %716 = vmatmul.mubr.bf16.gmra.mrb[0].mxu0 %v438
    %v717 = vpop.f32.mrb[0].mxu0
    %v718 = vadd.f32 %v476, %v717
    %v719 = vpop.f32.mrb[0].mxu0
    %v720 = vadd.f32 %v480, %v719
    %v721 = vpop.f32.mrb[0].mxu0
    %v722 = vadd.f32 %v476, %v721
    %v723 = vpop.f32.mrb[0].mxu0
    %v724 = vadd.f32 %v480, %v723
    %725 = vdwg.mxu0
    %726 = vmatprep.subr.bf16.mxu0 %v592
    %727 = vmatpush1.bf16.msra.mxu0 %v591
    %728 = vmatprep.subr.bf16.mxu0 %v596
    %729 = vmatpush1.bf16.msra.mxu0 %v595
    %730 = vmatprep.subr.bf16.mxu0 %v600
    %731 = vmatpush1.bf16.msra.mxu0 %v599
    %732 = vmatprep.subr.bf16.mxu0 %v604
    %733 = vmatpush1.bf16.msra.mxu0 %v603
    %734 = vmatprep.subr.bf16.mxu0 %v608
    %735 = vmatpush1.bf16.msra.mxu0 %v607
    %736 = vmatprep.subr.bf16.mxu0 %v612
    %737 = vmatpush1.bf16.msra.mxu0 %v611
    %738 = vmatprep.subr.bf16.mxu0 %v616
    %739 = vmatpush1.bf16.msra.mxu0 %v615
    %740 = vmatprep.subr.bf16.mxu0 %v620
    %741 = vmatpush1.bf16.msra.mxu0 %v619
    %742 = vmatprep.subr.bf16.mxu0 0
    %743 = vmatpush1.bf16.msra.mxu0 0
    %744 = vmatprep.subr.bf16.mxu0 0
    %745 = vmatpush1.bf16.msra.mxu0 0
    %746 = vmatprep.subr.bf16.mxu0 0
    %747 = vmatpush1.bf16.msra.mxu0 0
    %748 = vmatprep.subr.bf16.mxu0 0
    %749 = vmatpush1.bf16.msra.mxu0 0
    %750 = vmatprep.subr.bf16.mxu0 0
    %751 = vmatpush1.bf16.msra.mxu0 0
    %752 = vmatprep.subr.bf16.mxu0 0
    %753 = vmatpush1.bf16.msra.mxu0 0
    %754 = vmatprep.subr.bf16.mxu0 0
    %755 = vmatpush1.bf16.msra.mxu0 0
    %756 = vmatprep.subr.bf16.mxu0 0
    %757 = vmatpush1.bf16.msra.mxu0 0
    %758 = vmatprep.mubr.bf16.mxu0 0
    %759 = vmatmul.mubr.bf16.gmra.mrb[0].mxu0 %v435
    %v760 = vpop.f32.mrb[0].mxu0
    %v761 = vadd.f32 %v484, %v760
    %v762 = vpop.f32.mrb[0].mxu0
    %v763 = vadd.f32 %v488, %v762
    %v764 = vpop.f32.mrb[0].mxu0
    %v765 = vadd.f32 %v484, %v764
    %v766 = vpop.f32.mrb[0].mxu0
    %v767 = vadd.f32 %v488, %v766
    %768 = vmatprep.mubr.bf16.mxu0 0
    %769 = vmatmul.mubr.bf16.gmra.mrb[0].mxu0 %v436
    %v770 = vpop.f32.mrb[0].mxu0
    %v771 = vadd.f32 %v484, %v770
    %v772 = vpop.f32.mrb[0].mxu0
    %v773 = vadd.f32 %v488, %v772
    %v774 = vpop.f32.mrb[0].mxu0
    %v775 = vadd.f32 %v484, %v774
    %v776 = vpop.f32.mrb[0].mxu0
    %v777 = vadd.f32 %v488, %v776
    %778 = vmatprep.mubr.bf16.mxu0 0
    %779 = vmatmul.mubr.bf16.gmra.mrb[0].mxu0 %v437
    %v780 = vpop.f32.mrb[0].mxu0
    %v781 = vadd.f32 %v484, %v780
    %v782 = vpop.f32.mrb[0].mxu0
    %v783 = vadd.f32 %v488, %v782
    %v784 = vpop.f32.mrb[0].mxu0
    %v785 = vadd.f32 %v484, %v784
    %v786 = vpop.f32.mrb[0].mxu0
    %v787 = vadd.f32 %v488, %v786
    %788 = vmatprep.mubr.bf16.mxu0 0
    %789 = vmatmul.mubr.bf16.gmra.mrb[0].mxu0 %v438
    %v790 = vpop.f32.mrb[0].mxu0
    %v791 = vadd.f32 %v484, %v790
    %v792 = vpop.f32.mrb[0].mxu0
    %v793 = vadd.f32 %v488, %v792
    %v794 = vpop.f32.mrb[0].mxu0
    %v795 = vadd.f32 %v484, %v794
    %v796 = vpop.f32.mrb[0].mxu0
    %v797 = vadd.f32 %v488, %v796
    %798 = vdwg.mxu0
    %799 = vst [vmem:[#allocation2] sm:$0xff] %v688
    %800 = vst [vmem:[#allocation2 + $0x8] sm:$0xff] %v690
    %801 = vst [vmem:[#allocation2 + $0x10] sm:$0xff] %v761
    %802 = vst [vmem:[#allocation2 + $0x18] sm:$0xff] %v763
    %803 = vst [vmem:[#allocation2 + $0x20] sm:$0xff] %v692
    %804 = vst [vmem:[#allocation2 + $0x28] sm:$0xff] %v694
    %805 = vst [vmem:[#allocation2 + $0x30] sm:$0xff] %v765
    %806 = vst [vmem:[#allocation2 + $0x38] sm:$0xff] %v767
    %807 = vst [vmem:[#allocation2 + $0x40] sm:$0xff] %v698
    %808 = vst [vmem:[#allocation2 + $0x48] sm:$0xff] %v700
    %809 = vst [vmem:[#allocation2 + $0x50] sm:$0xff] %v771
    %810 = vst [vmem:[#allocation2 + $0x58] sm:$0xff] %v773
    %811 = vst [vmem:[#allocation2 + $0x60] sm:$0xff] %v702
    %812 = vst [vmem:[#allocation2 + $0x68] sm:$0xff] %v704
    %813 = vst [vmem:[#allocation2 + $0x70] sm:$0xff] %v775
    %814 = vst [vmem:[#allocation2 + $0x78] sm:$0xff] %v777
    %815 = vst [vmem:[#allocation2 + $0x80] sm:$0xff] %v708
    %816 = vst [vmem:[#allocation2 + $0x88] sm:$0xff] %v710
    %817 = vst [vmem:[#allocation2 + $0x90] sm:$0xff] %v781
    %818 = vst [vmem:[#allocation2 + $0x98] sm:$0xff] %v783
    %819 = vst [vmem:[#allocation2 + $0xa0] sm:$0xff] %v712
    %820 = vst [vmem:[#allocation2 + $0xa8] sm:$0xff] %v714
    %821 = vst [vmem:[#allocation2 + $0xb0] sm:$0xff] %v785
    %822 = vst [vmem:[#allocation2 + $0xb8] sm:$0xff] %v787
    %823 = vst [vmem:[#allocation2 + $0xc0] sm:$0xff] %v718
    %824 = vst [vmem:[#allocation2 + $0xc8] sm:$0xff] %v720
    %825 = vst [vmem:[#allocation2 + $0xd0] sm:$0xff] %v791
    %826 = vst [vmem:[#allocation2 + $0xd8] sm:$0xff] %v793
    %827 = vst [vmem:[#allocation2 + $0xe0] sm:$0xff] %v722
    %828 = vst [vmem:[#allocation2 + $0xe8] sm:$0xff] %v724
    %829 = vst [vmem:[#allocation2 + $0xf0] sm:$0xff] %v795
    %830 = vst [vmem:[#allocation2 + $0xf8] sm:$0xff] %v797
    %v831 = vld [vmem:[%s9] sm:$0xff]
    %v832 = vld [vmem:[%s10] sm:$0xff]
    %s833 = scalar_lea.vmem %s9, 8
    %v834 = vld [vmem:[%s833] sm:$0xff]
    %s835 = scalar_lea.vmem %s10, 8
    %v836 = vld [vmem:[%s835] sm:$0xff]
    %v837 = vld [vmem:[#allocation2] sm:$0xff]
    %v838 = vld [vmem:[#allocation2 + $0x8] sm:$0xff]
    %v839 = vld [vmem:[#allocation2 + $0x10] sm:$0xff]
    %v840 = vld [vmem:[#allocation2 + $0x18] sm:$0xff]
    %v841 = vpack.c.bf16 %v831, %v831
    %v842 = vld [vmem:[#allocation12] sm:$0xff]
    %v843 = vld [vmem:[#allocation12 + $0x8] sm:$0xff]
    %v844 = vld [vmem:[#allocation12 + $0x10] sm:$0xff]
    %v845 = vld [vmem:[#allocation12 + $0x18] sm:$0xff]
    %v846 = vld [vmem:[#allocation12 + $0x20] sm:$0xff]
    %v847 = vld [vmem:[#allocation12 + $0x28] sm:$0xff]
    %v848 = vld [vmem:[#allocation12 + $0x30] sm:$0xff]
    %v849 = vld [vmem:[#allocation12 + $0x38] sm:$0xff]
    %v850 = vld [vmem:[#allocation12 + $0x40] sm:$0xff]
    %v851 = vld [vmem:[#allocation12 + $0x48] sm:$0xff]
    %v852 = vld [vmem:[#allocation12 + $0x50] sm:$0xff]
    %v853 = vld [vmem:[#allocation12 + $0x58] sm:$0xff]
    %v854 = vld [vmem:[#allocation12 + $0x60] sm:$0xff]
    %v855 = vld [vmem:[#allocation12 + $0x68] sm:$0xff]
    %v856 = vld [vmem:[#allocation12 + $0x70] sm:$0xff]
    %v857 = vld [vmem:[#allocation12 + $0x78] sm:$0xff]
    %v858 = vld [vmem:[#allocation12 + $0x80] sm:$0xff]
    %v859 = vld [vmem:[#allocation12 + $0x88] sm:$0xff]
    %v860 = vld [vmem:[#allocation12 + $0x90] sm:$0xff]
    %v861 = vld [vmem:[#allocation12 + $0x98] sm:$0xff]
    %v862 = vld [vmem:[#allocation12 + $0xa0] sm:$0xff]
    %v863 = vld [vmem:[#allocation12 + $0xa8] sm:$0xff]
    %v864 = vld [vmem:[#allocation12 + $0xb0] sm:$0xff]
    %v865 = vld [vmem:[#allocation12 + $0xb8] sm:$0xff]
    %v866 = vld [vmem:[#allocation12 + $0xc0] sm:$0xff]
    %v867 = vld [vmem:[#allocation12 + $0xc8] sm:$0xff]
    %v868 = vld [vmem:[#allocation12 + $0xd0] sm:$0xff]
    %v869 = vld [vmem:[#allocation12 + $0xd8] sm:$0xff]
    %v870 = vld [vmem:[#allocation12 + $0xe0] sm:$0xff]
    %v871 = vld [vmem:[#allocation12 + $0xe8] sm:$0xff]
    %v872 = vld [vmem:[#allocation12 + $0xf0] sm:$0xff]
    %v873 = vld [vmem:[#allocation12 + $0xf8] sm:$0xff]
    %v906 = vunpack.c.l.b16 %v842
    %v907 = vunpack.c.h.b16 %v842
    %v908 = vunpack.c.l.b16 %v843
    %v909 = vunpack.c.h.b16 %v843
    %v910 = vunpack.c.l.b16 %v844
    %v911 = vunpack.c.h.b16 %v844
    %v912 = vunpack.c.l.b16 %v845
    %v913 = vunpack.c.h.b16 %v845
    %v914 = vunpack.c.l.b16 %v846
    %v915 = vunpack.c.h.b16 %v846
    %v916 = vunpack.c.l.b16 %v847
    %v917 = vunpack.c.h.b16 %v847
    %v918 = vunpack.c.l.b16 %v848
    %v919 = vunpack.c.h.b16 %v848
    %v920 = vunpack.c.l.b16 %v849
    %v921 = vunpack.c.h.b16 %v849
    %v922 = vunpack.c.l.b16 %v850
    %v923 = vunpack.c.h.b16 %v850
    %v924 = vunpack.c.l.b16 %v851
    %v925 = vunpack.c.h.b16 %v851
    %v926 = vunpack.c.l.b16 %v852
    %v927 = vunpack.c.h.b16 %v852
    %v928 = vunpack.c.l.b16 %v853
    %v929 = vunpack.c.h.b16 %v853
    %v930 = vunpack.c.l.b16 %v854
    %v931 = vunpack.c.h.b16 %v854
    %v932 = vunpack.c.l.b16 %v855
    %v933 = vunpack.c.h.b16 %v855
    %v934 = vunpack.c.l.b16 %v856
    %v935 = vunpack.c.h.b16 %v856
    %v936 = vunpack.c.l.b16 %v857
    %v937 = vunpack.c.h.b16 %v857
    %v938 = vunpack.c.l.b16 %v858
    %v939 = vunpack.c.h.b16 %v858
    %v940 = vunpack.c.l.b16 %v859
    %v941 = vunpack.c.h.b16 %v859
    %v942 = vunpack.c.l.b16 %v860
    %v943 = vunpack.c.h.b16 %v860
    %v944 = vunpack.c.l.b16 %v861
    %v945 = vunpack.c.h.b16 %v861
    %v946 = vunpack.c.l.b16 %v862
    %v947 = vunpack.c.h.b16 %v862
    %v948 = vunpack.c.l.b16 %v863
    %v949 = vunpack.c.h.b16 %v863
    %v950 = vunpack.c.l.b16 %v864
    %v951 = vunpack.c.h.b16 %v864
    %v952 = vunpack.c.l.b16 %v865
    %v953 = vunpack.c.h.b16 %v865
    %v954 = vunpack.c.l.b16 %v866
    %v955 = vunpack.c.h.b16 %v866
    %v956 = vunpack.c.l.b16 %v867
    %v957 = vunpack.c.h.b16 %v867
    %v958 = vunpack.c.l.b16 %v868
    %v959 = vunpack.c.h.b16 %v868
    %v960 = vunpack.c.l.b16 %v869
    %v961 = vunpack.c.h.b16 %v869
    %v962 = vunpack.c.l.b16 %v870
    %v963 = vunpack.c.h.b16 %v870
    %v964 = vunpack.c.l.b16 %v871
    %v965 = vunpack.c.h.b16 %v871
    %v966 = vunpack.c.l.b16 %v872
    %v967 = vunpack.c.h.b16 %v872
    %v968 = vunpack.c.l.b16 %v873
    %v969 = vunpack.c.h.b16 %v873
    %v970 = vpack.c.b16 %v910, %v906
    %v971 = vpack.c.b16 %v911, %v907
    %v972 = vpack.c.b16 %v912, %v908
    %v973 = vpack.c.b16 %v913, %v909
    %v974 = vpack.c.b16 %v918, %v914
    %v975 = vpack.c.b16 %v919, %v915
    %v976 = vpack.c.b16 %v920, %v916
    %v977 = vpack.c.b16 %v921, %v917
    %v978 = vpack.c.b16 %v926, %v922
    %v979 = vpack.c.b16 %v927, %v923
    %v980 = vpack.c.b16 %v928, %v924
    %v981 = vpack.c.b16 %v929, %v925
    %v982 = vpack.c.b16 %v934, %v930
    %v983 = vpack.c.b16 %v935, %v931
    %v984 = vpack.c.b16 %v936, %v932
    %v985 = vpack.c.b16 %v937, %v933
    %v986 = vpack.c.b16 %v942, %v938
    %v987 = vpack.c.b16 %v943, %v939
    %v988 = vpack.c.b16 %v944, %v940
    %v989 = vpack.c.b16 %v945, %v941
    %v990 = vpack.c.b16 %v950, %v946
    %v991 = vpack.c.b16 %v951, %v947
    %v992 = vpack.c.b16 %v952, %v948
    %v993 = vpack.c.b16 %v953, %v949
    %v994 = vpack.c.b16 %v958, %v954
    %v995 = vpack.c.b16 %v959, %v955
    %v996 = vpack.c.b16 %v960, %v956
    %v997 = vpack.c.b16 %v961, %v957
    %v998 = vpack.c.b16 %v966, %v962
    %v999 = vpack.c.b16 %v967, %v963
    %v1000 = vpack.c.b16 %v968, %v964
    %v1001 = vpack.c.b16 %v969, %v965
    %1034 = vmatprep.subr.bf16.mxu0 %v971
    %1035 = vmatpush1.bf16.msra.mxu0 %v970
    %1036 = vmatprep.subr.bf16.mxu0 %v975
    %1037 = vmatpush1.bf16.msra.mxu0 %v974
    %1038 = vmatprep.subr.bf16.mxu0 %v979
    %1039 = vmatpush1.bf16.msra.mxu0 %v978
    %1040 = vmatprep.subr.bf16.mxu0 %v983
    %1041 = vmatpush1.bf16.msra.mxu0 %v982
    %1042 = vmatprep.subr.bf16.mxu0 %v987
    %1043 = vmatpush1.bf16.msra.mxu0 %v986
    %1044 = vmatprep.subr.bf16.mxu0 %v991
    %1045 = vmatpush1.bf16.msra.mxu0 %v990
    %1046 = vmatprep.subr.bf16.mxu0 %v995
    %1047 = vmatpush1.bf16.msra.mxu0 %v994
    %1048 = vmatprep.subr.bf16.mxu0 %v999
    %1049 = vmatpush1.bf16.msra.mxu0 %v998
    %1050 = vmatprep.subr.bf16.mxu0 0
    %1051 = vmatpush1.bf16.msra.mxu0 0
    %1052 = vmatprep.subr.bf16.mxu0 0
    %1053 = vmatpush1.bf16.msra.mxu0 0
    %1054 = vmatprep.subr.bf16.mxu0 0
    %1055 = vmatpush1.bf16.msra.mxu0 0
    %1056 = vmatprep.subr.bf16.mxu0 0
    %1057 = vmatpush1.bf16.msra.mxu0 0
    %1058 = vmatprep.subr.bf16.mxu0 0
    %1059 = vmatpush1.bf16.msra.mxu0 0
    %1060 = vmatprep.subr.bf16.mxu0 0
    %1061 = vmatpush1.bf16.msra.mxu0 0
    %1062 = vmatprep.subr.bf16.mxu0 0
    %1063 = vmatpush1.bf16.msra.mxu0 0
    %1064 = vmatprep.subr.bf16.mxu0 0
    %1065 = vmatpush1.bf16.msra.mxu0 0
    %1066 = vmatprep.mubr.bf16.mxu0 0
    %1067 = vmatmul.mubr.bf16.gmra.mrb[0].mxu0 %v841
    %v1068 = vpop.f32.mrb[0].mxu0
    %v1069 = vadd.f32 0.0, %v1068
    %v1070 = vpop.f32.mrb[0].mxu0
    %v1071 = vadd.f32 0.0, %v1070
    %v1072 = vpop.f32.mrb[0].mxu0
    %v1073 = vpop.f32.mrb[0].mxu0
    %1074 = vdwg.mxu0
    %1075 = vmatprep.subr.bf16.mxu0 %v973
    %1076 = vmatpush1.bf16.msra.mxu0 %v972
    %1077 = vmatprep.subr.bf16.mxu0 %v977
    %1078 = vmatpush1.bf16.msra.mxu0 %v976
    %1079 = vmatprep.subr.bf16.mxu0 %v981
    %1080 = vmatpush1.bf16.msra.mxu0 %v980
    %1081 = vmatprep.subr.bf16.mxu0 %v985
    %1082 = vmatpush1.bf16.msra.mxu0 %v984
    %1083 = vmatprep.subr.bf16.mxu0 %v989
    %1084 = vmatpush1.bf16.msra.mxu0 %v988
    %1085 = vmatprep.subr.bf16.mxu0 %v993
    %1086 = vmatpush1.bf16.msra.mxu0 %v992
    %1087 = vmatprep.subr.bf16.mxu0 %v997
    %1088 = vmatpush1.bf16.msra.mxu0 %v996
    %1089 = vmatprep.subr.bf16.mxu0 %v1001
    %1090 = vmatpush1.bf16.msra.mxu0 %v1000
    %1091 = vmatprep.subr.bf16.mxu0 0
    %1092 = vmatpush1.bf16.msra.mxu0 0
    %1093 = vmatprep.subr.bf16.mxu0 0
    %1094 = vmatpush1.bf16.msra.mxu0 0
    %1095 = vmatprep.subr.bf16.mxu0 0
    %1096 = vmatpush1.bf16.msra.mxu0 0
    %1097 = vmatprep.subr.bf16.mxu0 0
    %1098 = vmatpush1.bf16.msra.mxu0 0
    %1099 = vmatprep.subr.bf16.mxu0 0
    %1100 = vmatpush1.bf16.msra.mxu0 0
    %1101 = vmatprep.subr.bf16.mxu0 0
    %1102 = vmatpush1.bf16.msra.mxu0 0
    %1103 = vmatprep.subr.bf16.mxu0 0
    %1104 = vmatpush1.bf16.msra.mxu0 0
    %1105 = vmatprep.subr.bf16.mxu0 0
    %1106 = vmatpush1.bf16.msra.mxu0 0
    %1107 = vmatprep.mubr.bf16.mxu0 0
    %1108 = vmatmul.mubr.bf16.gmra.mrb[0].mxu0 %v841
    %v1109 = vpop.f32.mrb[0].mxu0
    %v1110 = vadd.f32 0.0, %v1109
    %v1111 = vpop.f32.mrb[0].mxu0
    %v1112 = vadd.f32 0.0, %v1111
    %v1113 = vpop.f32.mrb[0].mxu0
    %v1114 = vpop.f32.mrb[0].mxu0
    %1115 = vdwg.mxu0
    %v1116 = vadd.f32 %v837, %v1069
    %v1117 = vadd.f32 %v838, %v1071
    %v1118 = vadd.f32 %v839, %v1110
    %v1119 = vadd.f32 %v840, %v1112
    %v1120 = vxor.u32 %v1116, 2147483648
    %v1121 = vmul.f32 %v1120, 1.442695
    %v1122 = vpow.pop %v1121
    %v1123 = vadd.f32 %v1122, 1.0
    %v1124 = vrcp.pop %v1123
    %v1125 = vmul.f32 1.0, %v1124
    %v1126 = vxor.u32 %v1117, 2147483648
    %v1127 = vmul.f32 %v1126, 1.442695
    %v1128 = vpow.pop %v1127
    %v1129 = vadd.f32 %v1128, 1.0
    %v1130 = vrcp.pop %v1129
    %v1131 = vmul.f32 1.0, %v1130
    %v1132 = vtanh.pop %v1118
    %v1133 = vxor.u32 %v1119, 2147483648
    %v1134 = vmul.f32 %v1133, 1.442695
    %v1135 = vpow.pop %v1134
    %v1136 = vadd.f32 %v1135, 1.0
    %v1137 = vrcp.pop %v1136
    %v1138 = vmul.f32 1.0, %v1137
    %v1139 = vmul.f32 %v1131, %v832
    %v1140 = vmul.f32 %v1125, %v1132
    %v1141 = vadd.f32 %v1139, %v1140
    %v1142 = vtanh.pop %v1141
    %v1143 = vmul.f32 %v1138, %v1142
    %s1144 = smul.u32 4, 32
    %s1145 = smul.u32 %s1144, 4
    %s1146 = sshll.u32 %s1145, 4
    %1147 = dma.done [#allocation6], %s1146
    %v1148 = vld [vmem:[#allocation2 + $0x20] sm:$0xff]
    %v1149 = vld [vmem:[#allocation2 + $0x28] sm:$0xff]
    %v1150 = vld [vmem:[#allocation2 + $0x30] sm:$0xff]
    %v1151 = vld [vmem:[#allocation2 + $0x38] sm:$0xff]
    %v1152 = vpack.c.bf16 %v1143, %v1143
    %v1153 = vld [vmem:[#allocation12] sm:$0xff]
    %v1154 = vld [vmem:[#allocation12 + $0x8] sm:$0xff]
    %v1155 = vld [vmem:[#allocation12 + $0x10] sm:$0xff]
    %v1156 = vld [vmem:[#allocation12 + $0x18] sm:$0xff]
    %v1157 = vld [vmem:[#allocation12 + $0x20] sm:$0xff]
    %v1158 = vld [vmem:[#allocation12 + $0x28] sm:$0xff]
    %v1159 = vld [vmem:[#allocation12 + $0x30] sm:$0xff]
    %v1160 = vld [vmem:[#allocation12 + $0x38] sm:$0xff]
    %v1161 = vld [vmem:[#allocation12 + $0x40] sm:$0xff]
    %v1162 = vld [vmem:[#allocation12 + $0x48] sm:$0xff]
    %v1163 = vld [vmem:[#allocation12 + $0x50] sm:$0xff]
    %v1164 = vld [vmem:[#allocation12 + $0x58] sm:$0xff]
    %v1165 = vld [vmem:[#allocation12 + $0x60] sm:$0xff]
    %v1166 = vld [vmem:[#allocation12 + $0x68] sm:$0xff]
    %v1167 = vld [vmem:[#allocation12 + $0x70] sm:$0xff]
    %v1168 = vld [vmem:[#allocation12 + $0x78] sm:$0xff]
    %v1169 = vld [vmem:[#allocation12 + $0x80] sm:$0xff]
    %v1170 = vld [vmem:[#allocation12 + $0x88] sm:$0xff]
    %v1171 = vld [vmem:[#allocation12 + $0x90] sm:$0xff]
    %v1172 = vld [vmem:[#allocation12 + $0x98] sm:$0xff]
    %v1173 = vld [vmem:[#allocation12 + $0xa0] sm:$0xff]
    %v1174 = vld [vmem:[#allocation12 + $0xa8] sm:$0xff]
    %v1175 = vld [vmem:[#allocation12 + $0xb0] sm:$0xff]
    %v1176 = vld [vmem:[#allocation12 + $0xb8] sm:$0xff]
    %v1177 = vld [vmem:[#allocation12 + $0xc0] sm:$0xff]
    %v1178 = vld [vmem:[#allocation12 + $0xc8] sm:$0xff]
    %v1179 = vld [vmem:[#allocation12 + $0xd0] sm:$0xff]
    %v1180 = vld [vmem:[#allocation12 + $0xd8] sm:$0xff]
    %v1181 = vld [vmem:[#allocation12 + $0xe0] sm:$0xff]
    %v1182 = vld [vmem:[#allocation12 + $0xe8] sm:$0xff]
    %v1183 = vld [vmem:[#allocation12 + $0xf0] sm:$0xff]
    %v1184 = vld [vmem:[#allocation12 + $0xf8] sm:$0xff]
    %v1217 = vunpack.c.l.b16 %v1153
    %v1218 = vunpack.c.h.b16 %v1153
    %v1219 = vunpack.c.l.b16 %v1154
    %v1220 = vunpack.c.h.b16 %v1154
    %v1221 = vunpack.c.l.b16 %v1155
    %v1222 = vunpack.c.h.b16 %v1155
    %v1223 = vunpack.c.l.b16 %v1156
    %v1224 = vunpack.c.h.b16 %v1156
    %v1225 = vunpack.c.l.b16 %v1157
    %v1226 = vunpack.c.h.b16 %v1157
    %v1227 = vunpack.c.l.b16 %v1158
    %v1228 = vunpack.c.h.b16 %v1158
    %v1229 = vunpack.c.l.b16 %v1159
    %v1230 = vunpack.c.h.b16 %v1159
    %v1231 = vunpack.c.l.b16 %v1160
    %v1232 = vunpack.c.h.b16 %v1160
    %v1233 = vunpack.c.l.b16 %v1161
    %v1234 = vunpack.c.h.b16 %v1161
    %v1235 = vunpack.c.l.b16 %v1162
    %v1236 = vunpack.c.h.b16 %v1162
    %v1237 = vunpack.c.l.b16 %v1163
    %v1238 = vunpack.c.h.b16 %v1163
    %v1239 = vunpack.c.l.b16 %v1164
    %v1240 = vunpack.c.h.b16 %v1164
    %v1241 = vunpack.c.l.b16 %v1165
    %v1242 = vunpack.c.h.b16 %v1165
    %v1243 = vunpack.c.l.b16 %v1166
    %v1244 = vunpack.c.h.b16 %v1166
    %v1245 = vunpack.c.l.b16 %v1167
    %v1246 = vunpack.c.h.b16 %v1167
    %v1247 = vunpack.c.l.b16 %v1168
    %v1248 = vunpack.c.h.b16 %v1168
    %v1249 = vunpack.c.l.b16 %v1169
    %v1250 = vunpack.c.h.b16 %v1169
    %v1251 = vunpack.c.l.b16 %v1170
    %v1252 = vunpack.c.h.b16 %v1170
    %v1253 = vunpack.c.l.b16 %v1171
    %v1254 = vunpack.c.h.b16 %v1171
    %v1255 = vunpack.c.l.b16 %v1172
    %v1256 = vunpack.c.h.b16 %v1172
    %v1257 = vunpack.c.l.b16 %v1173
    %v1258 = vunpack.c.h.b16 %v1173
    %v1259 = vunpack.c.l.b16 %v1174
    %v1260 = vunpack.c.h.b16 %v1174
    %v1261 = vunpack.c.l.b16 %v1175
    %v1262 = vunpack.c.h.b16 %v1175
    %v1263 = vunpack.c.l.b16 %v1176
    %v1264 = vunpack.c.h.b16 %v1176
    %v1265 = vunpack.c.l.b16 %v1177
    %v1266 = vunpack.c.h.b16 %v1177
    %v1267 = vunpack.c.l.b16 %v1178
    %v1268 = vunpack.c.h.b16 %v1178
    %v1269 = vunpack.c.l.b16 %v1179
    %v1270 = vunpack.c.h.b16 %v1179
    %v1271 = vunpack.c.l.b16 %v1180
    %v1272 = vunpack.c.h.b16 %v1180
    %v1273 = vunpack.c.l.b16 %v1181
    %v1274 = vunpack.c.h.b16 %v1181
    %v1275 = vunpack.c.l.b16 %v1182
    %v1276 = vunpack.c.h.b16 %v1182
    %v1277 = vunpack.c.l.b16 %v1183
    %v1278 = vunpack.c.h.b16 %v1183
    %v1279 = vunpack.c.l.b16 %v1184
    %v1280 = vunpack.c.h.b16 %v1184
    %v1281 = vpack.c.b16 %v1221, %v1217
    %v1282 = vpack.c.b16 %v1222, %v1218
    %v1283 = vpack.c.b16 %v1223, %v1219
    %v1284 = vpack.c.b16 %v1224, %v1220
    %v1285 = vpack.c.b16 %v1229, %v1225
    %v1286 = vpack.c.b16 %v1230, %v1226
    %v1287 = vpack.c.b16 %v1231, %v1227
    %v1288 = vpack.c.b16 %v1232, %v1228
    %v1289 = vpack.c.b16 %v1237, %v1233
    %v1290 = vpack.c.b16 %v1238, %v1234
    %v1291 = vpack.c.b16 %v1239, %v1235
    %v1292 = vpack.c.b16 %v1240, %v1236
    %v1293 = vpack.c.b16 %v1245, %v1241
    %v1294 = vpack.c.b16 %v1246, %v1242
    %v1295 = vpack.c.b16 %v1247, %v1243
    %v1296 = vpack.c.b16 %v1248, %v1244
    %v1297 = vpack.c.b16 %v1253, %v1249
    %v1298 = vpack.c.b16 %v1254, %v1250
    %v1299 = vpack.c.b16 %v1255, %v1251
    %v1300 = vpack.c.b16 %v1256, %v1252
    %v1301 = vpack.c.b16 %v1261, %v1257
    %v1302 = vpack.c.b16 %v1262, %v1258
    %v1303 = vpack.c.b16 %v1263, %v1259
    %v1304 = vpack.c.b16 %v1264, %v1260
    %v1305 = vpack.c.b16 %v1269, %v1265
    %v1306 = vpack.c.b16 %v1270, %v1266
    %v1307 = vpack.c.b16 %v1271, %v1267
    %v1308 = vpack.c.b16 %v1272, %v1268
    %v1309 = vpack.c.b16 %v1277, %v1273
    %v1310 = vpack.c.b16 %v1278, %v1274
    %v1311 = vpack.c.b16 %v1279, %v1275
    %v1312 = vpack.c.b16 %v1280, %v1276
    %1345 = vmatprep.subr.bf16.mxu0 %v1282
    %1346 = vmatpush1.bf16.msra.mxu0 %v1281
    %1347 = vmatprep.subr.bf16.mxu0 %v1286
    %1348 = vmatpush1.bf16.msra.mxu0 %v1285
    %1349 = vmatprep.subr.bf16.mxu0 %v1290
    %1350 = vmatpush1.bf16.msra.mxu0 %v1289
    %1351 = vmatprep.subr.bf16.mxu0 %v1294
    %1352 = vmatpush1.bf16.msra.mxu0 %v1293
    %1353 = vmatprep.subr.bf16.mxu0 %v1298
    %1354 = vmatpush1.bf16.msra.mxu0 %v1297
    %1355 = vmatprep.subr.bf16.mxu0 %v1302
    %1356 = vmatpush1.bf16.msra.mxu0 %v1301
    %1357 = vmatprep.subr.bf16.mxu0 %v1306
    %1358 = vmatpush1.bf16.msra.mxu0 %v1305
    %1359 = vmatprep.subr.bf16.mxu0 %v1310
    %1360 = vmatpush1.bf16.msra.mxu0 %v1309
    %1361 = vmatprep.subr.bf16.mxu0 0
    %1362 = vmatpush1.bf16.msra.mxu0 0
    %1363 = vmatprep.subr.bf16.mxu0 0
    %1364 = vmatpush1.bf16.msra.mxu0 0
    %1365 = vmatprep.subr.bf16.mxu0 0
    %1366 = vmatpush1.bf16.msra.mxu0 0
    %1367 = vmatprep.subr.bf16.mxu0 0
    %1368 = vmatpush1.bf16.msra.mxu0 0
    %1369 = vmatprep.subr.bf16.mxu0 0
    %1370 = vmatpush1.bf16.msra.mxu0 0
    %1371 = vmatprep.subr.bf16.mxu0 0
    %1372 = vmatpush1.bf16.msra.mxu0 0
    %1373 = vmatprep.subr.bf16.mxu0 0
    %1374 = vmatpush1.bf16.msra.mxu0 0
    %1375 = vmatprep.subr.bf16.mxu0 0
    %1376 = vmatpush1.bf16.msra.mxu0 0
    %1377 = vmatprep.mubr.bf16.mxu0 0
    %1378 = vmatmul.mubr.bf16.gmra.mrb[0].mxu0 %v1152
    %v1379 = vpop.f32.mrb[0].mxu0
    %v1380 = vadd.f32 0.0, %v1379
    %v1381 = vpop.f32.mrb[0].mxu0
    %v1382 = vadd.f32 0.0, %v1381
    %v1383 = vpop.f32.mrb[0].mxu0
    %v1384 = vpop.f32.mrb[0].mxu0
    %1385 = vdwg.mxu0
    %1386 = vmatprep.subr.bf16.mxu0 %v1284
    %1387 = vmatpush1.bf16.msra.mxu0 %v1283
    %1388 = vmatprep.subr.bf16.mxu0 %v1288
    %1389 = vmatpush1.bf16.msra.mxu0 %v1287
    %1390 = vmatprep.subr.bf16.mxu0 %v1292
    %1391 = vmatpush1.bf16.msra.mxu0 %v1291
    %1392 = vmatprep.subr.bf16.mxu0 %v1296
    %1393 = vmatpush1.bf16.msra.mxu0 %v1295
    %1394 = vmatprep.subr.bf16.mxu0 %v1300
    %1395 = vmatpush1.bf16.msra.mxu0 %v1299
    %1396 = vmatprep.subr.bf16.mxu0 %v1304
    %1397 = vmatpush1.bf16.msra.mxu0 %v1303
    %1398 = vmatprep.subr.bf16.mxu0 %v1308
    %1399 = vmatpush1.bf16.msra.mxu0 %v1307
    %1400 = vmatprep.subr.bf16.mxu0 %v1312
    %1401 = vmatpush1.bf16.msra.mxu0 %v1311
    %1402 = vmatprep.subr.bf16.mxu0 0
    %1403 = vmatpush1.bf16.msra.mxu0 0
    %1404 = vmatprep.subr.bf16.mxu0 0
    %1405 = vmatpush1.bf16.msra.mxu0 0
    %1406 = vmatprep.subr.bf16.mxu0 0
    %1407 = vmatpush1.bf16.msra.mxu0 0
    %1408 = vmatprep.subr.bf16.mxu0 0
    %1409 = vmatpush1.bf16.msra.mxu0 0
    %1410 = vmatprep.subr.bf16.mxu0 0
    %1411 = vmatpush1.bf16.msra.mxu0 0
    %1412 = vmatprep.subr.bf16.mxu0 0
    %1413 = vmatpush1.bf16.msra.mxu0 0
    %1414 = vmatprep.subr.bf16.mxu0 0
    %1415 = vmatpush1.bf16.msra.mxu0 0
    %1416 = vmatprep.subr.bf16.mxu0 0
    %1417 = vmatpush1.bf16.msra.mxu0 0
    %1418 = vmatprep.mubr.bf16.mxu0 0
    %1419 = vmatmul.mubr.bf16.gmra.mrb[0].mxu0 %v1152
    %v1420 = vpop.f32.mrb[0].mxu0
    %v1421 = vadd.f32 0.0, %v1420
    %v1422 = vpop.f32.mrb[0].mxu0
    %v1423 = vadd.f32 0.0, %v1422
    %v1424 = vpop.f32.mrb[0].mxu0
    %v1425 = vpop.f32.mrb[0].mxu0
    %1426 = vdwg.mxu0
    %v1427 = vadd.f32 %v1148, %v1380
    %v1428 = vadd.f32 %v1149, %v1382
    %v1429 = vadd.f32 %v1150, %v1421
    %v1430 = vadd.f32 %v1151, %v1423
    %v1431 = vxor.u32 %v1427, 2147483648
    %v1432 = vmul.f32 %v1431, 1.442695
    %v1433 = vpow.pop %v1432
    %v1434 = vadd.f32 %v1433, 1.0
    %v1435 = vrcp.pop %v1434
    %v1436 = vmul.f32 1.0, %v1435
    %v1437 = vxor.u32 %v1428, 2147483648
    %v1438 = vmul.f32 %v1437, 1.442695
    %v1439 = vpow.pop %v1438
    %v1440 = vadd.f32 %v1439, 1.0
    %v1441 = vrcp.pop %v1440
    %v1442 = vmul.f32 1.0, %v1441
    %v1443 = vtanh.pop %v1429
    %v1444 = vxor.u32 %v1430, 2147483648
    %v1445 = vmul.f32 %v1444, 1.442695
    %v1446 = vpow.pop %v1445
    %v1447 = vadd.f32 %v1446, 1.0
    %v1448 = vrcp.pop %v1447
    %v1449 = vmul.f32 1.0, %v1448
    %v1450 = vmul.f32 %v1442, %v1141
    %v1451 = vmul.f32 %v1436, %v1443
    %v1452 = vadd.f32 %v1450, %v1451
    %v1453 = vtanh.pop %v1452
    %v1454 = vmul.f32 %v1449, %v1453
    %v1455 = vpack.c.bf16 %v834, %v834
    %v1456 = vld [vmem:[#allocation4] sm:$0xff]
    %v1457 = vld [vmem:[#allocation4 + $0x8] sm:$0xff]
    %v1458 = vld [vmem:[#allocation4 + $0x10] sm:$0xff]
    %v1459 = vld [vmem:[#allocation4 + $0x18] sm:$0xff]
    %v1460 = vld [vmem:[#allocation4 + $0x20] sm:$0xff]
    %v1461 = vld [vmem:[#allocation4 + $0x28] sm:$0xff]
    %v1462 = vld [vmem:[#allocation4 + $0x30] sm:$0xff]
    %v1463 = vld [vmem:[#allocation4 + $0x38] sm:$0xff]
    %v1464 = vld [vmem:[#allocation4 + $0x40] sm:$0xff]
    %v1465 = vld [vmem:[#allocation4 + $0x48] sm:$0xff]
    %v1466 = vld [vmem:[#allocation4 + $0x50] sm:$0xff]
    %v1467 = vld [vmem:[#allocation4 + $0x58] sm:$0xff]
    %v1468 = vld [vmem:[#allocation4 + $0x60] sm:$0xff]
    %v1469 = vld [vmem:[#allocation4 + $0x68] sm:$0xff]
    %v1470 = vld [vmem:[#allocation4 + $0x70] sm:$0xff]
    %v1471 = vld [vmem:[#allocation4 + $0x78] sm:$0xff]
    %v1472 = vld [vmem:[#allocation4 + $0x80] sm:$0xff]
    %v1473 = vld [vmem:[#allocation4 + $0x88] sm:$0xff]
    %v1474 = vld [vmem:[#allocation4 + $0x90] sm:$0xff]
    %v1475 = vld [vmem:[#allocation4 + $0x98] sm:$0xff]
    %v1476 = vld [vmem:[#allocation4 + $0xa0] sm:$0xff]
    %v1477 = vld [vmem:[#allocation4 + $0xa8] sm:$0xff]
    %v1478 = vld [vmem:[#allocation4 + $0xb0] sm:$0xff]
    %v1479 = vld [vmem:[#allocation4 + $0xb8] sm:$0xff]
    %v1480 = vld [vmem:[#allocation4 + $0xc0] sm:$0xff]
    %v1481 = vld [vmem:[#allocation4 + $0xc8] sm:$0xff]
    %v1482 = vld [vmem:[#allocation4 + $0xd0] sm:$0xff]
    %v1483 = vld [vmem:[#allocation4 + $0xd8] sm:$0xff]
    %v1484 = vld [vmem:[#allocation4 + $0xe0] sm:$0xff]
    %v1485 = vld [vmem:[#allocation4 + $0xe8] sm:$0xff]
    %v1486 = vld [vmem:[#allocation4 + $0xf0] sm:$0xff]
    %v1487 = vld [vmem:[#allocation4 + $0xf8] sm:$0xff]
    %v1488 = vld [vmem:[#allocation4 + $0x100] sm:$0xff]
    %v1489 = vld [vmem:[#allocation4 + $0x108] sm:$0xff]
    %v1490 = vld [vmem:[#allocation4 + $0x110] sm:$0xff]
    %v1491 = vld [vmem:[#allocation4 + $0x118] sm:$0xff]
    %v1492 = vld [vmem:[#allocation4 + $0x120] sm:$0xff]
    %v1493 = vld [vmem:[#allocation4 + $0x128] sm:$0xff]
    %v1494 = vld [vmem:[#allocation4 + $0x130] sm:$0xff]
    %v1495 = vld [vmem:[#allocation4 + $0x138] sm:$0xff]
    %v1496 = vld [vmem:[#allocation4 + $0x140] sm:$0xff]
    %v1497 = vld [vmem:[#allocation4 + $0x148] sm:$0xff]
    %v1498 = vld [vmem:[#allocation4 + $0x150] sm:$0xff]
    %v1499 = vld [vmem:[#allocation4 + $0x158] sm:$0xff]
    %v1500 = vld [vmem:[#allocation4 + $0x160] sm:$0xff]
    %v1501 = vld [vmem:[#allocation4 + $0x168] sm:$0xff]
    %v1502 = vld [vmem:[#allocation4 + $0x170] sm:$0xff]
    %v1503 = vld [vmem:[#allocation4 + $0x178] sm:$0xff]
    %v1504 = vld [vmem:[#allocation4 + $0x180] sm:$0xff]
    %v1505 = vld [vmem:[#allocation4 + $0x188] sm:$0xff]
    %v1506 = vld [vmem:[#allocation4 + $0x190] sm:$0xff]
    %v1507 = vld [vmem:[#allocation4 + $0x198] sm:$0xff]
    %v1508 = vld [vmem:[#allocation4 + $0x1a0] sm:$0xff]
    %v1509 = vld [vmem:[#allocation4 + $0x1a8] sm:$0xff]
    %v1510 = vld [vmem:[#allocation4 + $0x1b0] sm:$0xff]
    %v1511 = vld [vmem:[#allocation4 + $0x1b8] sm:$0xff]
    %v1512 = vld [vmem:[#allocation4 + $0x1c0] sm:$0xff]
    %v1513 = vld [vmem:[#allocation4 + $0x1c8] sm:$0xff]
    %v1514 = vld [vmem:[#allocation4 + $0x1d0] sm:$0xff]
    %v1515 = vld [vmem:[#allocation4 + $0x1d8] sm:$0xff]
    %v1516 = vld [vmem:[#allocation4 + $0x1e0] sm:$0xff]
    %v1517 = vld [vmem:[#allocation4 + $0x1e8] sm:$0xff]
    %v1518 = vld [vmem:[#allocation4 + $0x1f0] sm:$0xff]
    %v1519 = vld [vmem:[#allocation4 + $0x1f8] sm:$0xff]
    %v1520 = vld [vmem:[%s6] sm:$0xf]
    %v1522 = vlaneseq
    %v1523 = vshrl.u32 %v1522, 7
    %v1524 = vsub.s32 0, %v1523
    %v1525 = vrot.slane %v1520, %v1524
    %v1526 = vlaneseq
    %v1527 = vshrl.u32 %v1526, 7
    %v1528 = vsub.s32 1, %v1527
    %v1529 = vrot.slane %v1520, %v1528
    %v1530 = vlaneseq
    %v1531 = vshrl.u32 %v1530, 7
    %v1532 = vsub.s32 2, %v1531
    %v1533 = vrot.slane %v1520, %v1532
    %v1534 = vlaneseq
    %v1535 = vshrl.u32 %v1534, 7
    %v1536 = vsub.s32 3, %v1535
    %v1537 = vrot.slane %v1520, %v1536
    %1542 = vmatprep.subr.bf16.mxu0 %v1457
    %1543 = vmatpush1.bf16.msra.mxu0 %v1456
    %1544 = vmatprep.subr.bf16.mxu0 %v1461
    %1545 = vmatpush1.bf16.msra.mxu0 %v1460
    %1546 = vmatprep.subr.bf16.mxu0 %v1465
    %1547 = vmatpush1.bf16.msra.mxu0 %v1464
    %1548 = vmatprep.subr.bf16.mxu0 %v1469
    %1549 = vmatpush1.bf16.msra.mxu0 %v1468
    %1550 = vmatprep.subr.bf16.mxu0 %v1473
    %1551 = vmatpush1.bf16.msra.mxu0 %v1472
    %1552 = vmatprep.subr.bf16.mxu0 %v1477
    %1553 = vmatpush1.bf16.msra.mxu0 %v1476
    %1554 = vmatprep.subr.bf16.mxu0 %v1481
    %1555 = vmatpush1.bf16.msra.mxu0 %v1480
    %1556 = vmatprep.subr.bf16.mxu0 %v1485
    %1557 = vmatpush1.bf16.msra.mxu0 %v1484
    %1558 = vmatprep.subr.bf16.mxu0 %v1489
    %1559 = vmatpush1.bf16.msra.mxu0 %v1488
    %1560 = vmatprep.subr.bf16.mxu0 %v1493
    %1561 = vmatpush1.bf16.msra.mxu0 %v1492
    %1562 = vmatprep.subr.bf16.mxu0 %v1497
    %1563 = vmatpush1.bf16.msra.mxu0 %v1496
    %1564 = vmatprep.subr.bf16.mxu0 %v1501
    %1565 = vmatpush1.bf16.msra.mxu0 %v1500
    %1566 = vmatprep.subr.bf16.mxu0 %v1505
    %1567 = vmatpush1.bf16.msra.mxu0 %v1504
    %1568 = vmatprep.subr.bf16.mxu0 %v1509
    %1569 = vmatpush1.bf16.msra.mxu0 %v1508
    %1570 = vmatprep.subr.bf16.mxu0 %v1513
    %1571 = vmatpush1.bf16.msra.mxu0 %v1512
    %1572 = vmatprep.subr.bf16.mxu0 %v1517
    %1573 = vmatpush1.bf16.msra.mxu0 %v1516
    %1574 = vmatprep.mubr.bf16.mxu0 %v1455
    %1575 = vmatmul.mubr.bf16.gmra.mrb[0].mxu0 %v1152
    %v1576 = vpop.f32.mrb[0].mxu0
    %v1577 = vadd.f32 %v1525, %v1576
    %v1578 = vpop.f32.mrb[0].mxu0
    %v1579 = vadd.f32 %v1529, %v1578
    %v1580 = vpop.f32.mrb[0].mxu0
    %v1581 = vpop.f32.mrb[0].mxu0
    %1582 = vdwg.mxu0
    %1583 = vmatprep.subr.bf16.mxu0 %v1459
    %1584 = vmatpush1.bf16.msra.mxu0 %v1458
    %1585 = vmatprep.subr.bf16.mxu0 %v1463
    %1586 = vmatpush1.bf16.msra.mxu0 %v1462
    %1587 = vmatprep.subr.bf16.mxu0 %v1467
    %1588 = vmatpush1.bf16.msra.mxu0 %v1466
    %1589 = vmatprep.subr.bf16.mxu0 %v1471
    %1590 = vmatpush1.bf16.msra.mxu0 %v1470
    %1591 = vmatprep.subr.bf16.mxu0 %v1475
    %1592 = vmatpush1.bf16.msra.mxu0 %v1474
    %1593 = vmatprep.subr.bf16.mxu0 %v1479
    %1594 = vmatpush1.bf16.msra.mxu0 %v1478
    %1595 = vmatprep.subr.bf16.mxu0 %v1483
    %1596 = vmatpush1.bf16.msra.mxu0 %v1482
    %1597 = vmatprep.subr.bf16.mxu0 %v1487
    %1598 = vmatpush1.bf16.msra.mxu0 %v1486
    %1599 = vmatprep.subr.bf16.mxu0 %v1491
    %1600 = vmatpush1.bf16.msra.mxu0 %v1490
    %1601 = vmatprep.subr.bf16.mxu0 %v1495
    %1602 = vmatpush1.bf16.msra.mxu0 %v1494
    %1603 = vmatprep.subr.bf16.mxu0 %v1499
    %1604 = vmatpush1.bf16.msra.mxu0 %v1498
    %1605 = vmatprep.subr.bf16.mxu0 %v1503
    %1606 = vmatpush1.bf16.msra.mxu0 %v1502
    %1607 = vmatprep.subr.bf16.mxu0 %v1507
    %1608 = vmatpush1.bf16.msra.mxu0 %v1506
    %1609 = vmatprep.subr.bf16.mxu0 %v1511
    %1610 = vmatpush1.bf16.msra.mxu0 %v1510
    %1611 = vmatprep.subr.bf16.mxu0 %v1515
    %1612 = vmatpush1.bf16.msra.mxu0 %v1514
    %1613 = vmatprep.subr.bf16.mxu0 %v1519
    %1614 = vmatpush1.bf16.msra.mxu0 %v1518
    %1615 = vmatprep.mubr.bf16.mxu0 %v1455
    %1616 = vmatmul.mubr.bf16.gmra.mrb[0].mxu0 %v1152
    %v1617 = vpop.f32.mrb[0].mxu0
    %v1618 = vadd.f32 %v1533, %v1617
    %v1619 = vpop.f32.mrb[0].mxu0
    %v1620 = vadd.f32 %v1537, %v1619
    %v1621 = vpop.f32.mrb[0].mxu0
    %v1622 = vpop.f32.mrb[0].mxu0
    %1623 = vdwg.mxu0
    %v1624 = vxor.u32 %v1577, 2147483648
    %v1625 = vmul.f32 %v1624, 1.442695
    %v1626 = vpow.pop %v1625
    %v1627 = vadd.f32 %v1626, 1.0
    %v1628 = vrcp.pop %v1627
    %v1629 = vmul.f32 1.0, %v1628
    %v1630 = vxor.u32 %v1579, 2147483648
    %v1631 = vmul.f32 %v1630, 1.442695
    %v1632 = vpow.pop %v1631
    %v1633 = vadd.f32 %v1632, 1.0
    %v1634 = vrcp.pop %v1633
    %v1635 = vmul.f32 1.0, %v1634
    %v1636 = vtanh.pop %v1618
    %v1637 = vxor.u32 %v1620, 2147483648
    %v1638 = vmul.f32 %v1637, 1.442695
    %v1639 = vpow.pop %v1638
    %v1640 = vadd.f32 %v1639, 1.0
    %v1641 = vrcp.pop %v1640
    %v1642 = vmul.f32 1.0, %v1641
    %v1643 = vmul.f32 %v1635, %v836
    %v1644 = vmul.f32 %v1629, %v1636
    %v1645 = vadd.f32 %v1643, %v1644
    %v1646 = vtanh.pop %v1645
    %v1647 = vmul.f32 %v1642, %v1646
    %1648 = vst [vmem:[#allocation3] sm:$0xff] %v1647
    %v1649 = vld [vmem:[#allocation2 + $0x40] sm:$0xff]
    %v1650 = vld [vmem:[#allocation2 + $0x48] sm:$0xff]
    %v1651 = vld [vmem:[#allocation2 + $0x50] sm:$0xff]
    %v1652 = vld [vmem:[#allocation2 + $0x58] sm:$0xff]
    %v1653 = vpack.c.bf16 %v1454, %v1454
    %v1654 = vld [vmem:[#allocation12] sm:$0xff]
    %v1655 = vld [vmem:[#allocation12 + $0x8] sm:$0xff]
    %v1656 = vld [vmem:[#allocation12 + $0x10] sm:$0xff]
    %v1657 = vld [vmem:[#allocation12 + $0x18] sm:$0xff]
    %v1658 = vld [vmem:[#allocation12 + $0x20] sm:$0xff]
    %v1659 = vld [vmem:[#allocation12 + $0x28] sm:$0xff]
    %v1660 = vld [vmem:[#allocation12 + $0x30] sm:$0xff]
    %v1661 = vld [vmem:[#allocation12 + $0x38] sm:$0xff]
    %v1662 = vld [vmem:[#allocation12 + $0x40] sm:$0xff]
    %v1663 = vld [vmem:[#allocation12 + $0x48] sm:$0xff]
    %v1664 = vld [vmem:[#allocation12 + $0x50] sm:$0xff]
    %v1665 = vld [vmem:[#allocation12 + $0x58] sm:$0xff]
    %v1666 = vld [vmem:[#allocation12 + $0x60] sm:$0xff]
    %v1667 = vld [vmem:[#allocation12 + $0x68] sm:$0xff]
    %v1668 = vld [vmem:[#allocation12 + $0x70] sm:$0xff]
    %v1669 = vld [vmem:[#allocation12 + $0x78] sm:$0xff]
    %v1670 = vld [vmem:[#allocation12 + $0x80] sm:$0xff]
    %v1671 = vld [vmem:[#allocation12 + $0x88] sm:$0xff]
    %v1672 = vld [vmem:[#allocation12 + $0x90] sm:$0xff]
    %v1673 = vld [vmem:[#allocation12 + $0x98] sm:$0xff]
    %v1674 = vld [vmem:[#allocation12 + $0xa0] sm:$0xff]
    %v1675 = vld [vmem:[#allocation12 + $0xa8] sm:$0xff]
    %v1676 = vld [vmem:[#allocation12 + $0xb0] sm:$0xff]
    %v1677 = vld [vmem:[#allocation12 + $0xb8] sm:$0xff]
    %v1678 = vld [vmem:[#allocation12 + $0xc0] sm:$0xff]
    %v1679 = vld [vmem:[#allocation12 + $0xc8] sm:$0xff]
    %v1680 = vld [vmem:[#allocation12 + $0xd0] sm:$0xff]
    %v1681 = vld [vmem:[#allocation12 + $0xd8] sm:$0xff]
    %v1682 = vld [vmem:[#allocation12 + $0xe0] sm:$0xff]
    %v1683 = vld [vmem:[#allocation12 + $0xe8] sm:$0xff]
    %v1684 = vld [vmem:[#allocation12 + $0xf0] sm:$0xff]
    %v1685 = vld [vmem:[#allocation12 + $0xf8] sm:$0xff]
    %v1718 = vunpack.c.l.b16 %v1654
    %v1719 = vunpack.c.h.b16 %v1654
    %v1720 = vunpack.c.l.b16 %v1655
    %v1721 = vunpack.c.h.b16 %v1655
    %v1722 = vunpack.c.l.b16 %v1656
    %v1723 = vunpack.c.h.b16 %v1656
    %v1724 = vunpack.c.l.b16 %v1657
    %v1725 = vunpack.c.h.b16 %v1657
    %v1726 = vunpack.c.l.b16 %v1658
    %v1727 = vunpack.c.h.b16 %v1658
    %v1728 = vunpack.c.l.b16 %v1659
    %v1729 = vunpack.c.h.b16 %v1659
    %v1730 = vunpack.c.l.b16 %v1660
    %v1731 = vunpack.c.h.b16 %v1660
    %v1732 = vunpack.c.l.b16 %v1661
    %v1733 = vunpack.c.h.b16 %v1661
    %v1734 = vunpack.c.l.b16 %v1662
    %v1735 = vunpack.c.h.b16 %v1662
    %v1736 = vunpack.c.l.b16 %v1663
    %v1737 = vunpack.c.h.b16 %v1663
    %v1738 = vunpack.c.l.b16 %v1664
    %v1739 = vunpack.c.h.b16 %v1664
    %v1740 = vunpack.c.l.b16 %v1665
    %v1741 = vunpack.c.h.b16 %v1665
    %v1742 = vunpack.c.l.b16 %v1666
    %v1743 = vunpack.c.h.b16 %v1666
    %v1744 = vunpack.c.l.b16 %v1667
    %v1745 = vunpack.c.h.b16 %v1667
    %v1746 = vunpack.c.l.b16 %v1668
    %v1747 = vunpack.c.h.b16 %v1668
    %v1748 = vunpack.c.l.b16 %v1669
    %v1749 = vunpack.c.h.b16 %v1669
    %v1750 = vunpack.c.l.b16 %v1670
    %v1751 = vunpack.c.h.b16 %v1670
    %v1752 = vunpack.c.l.b16 %v1671
    %v1753 = vunpack.c.h.b16 %v1671
    %v1754 = vunpack.c.l.b16 %v1672
    %v1755 = vunpack.c.h.b16 %v1672
    %v1756 = vunpack.c.l.b16 %v1673
    %v1757 = vunpack.c.h.b16 %v1673
    %v1758 = vunpack.c.l.b16 %v1674
    %v1759 = vunpack.c.h.b16 %v1674
    %v1760 = vunpack.c.l.b16 %v1675
    %v1761 = vunpack.c.h.b16 %v1675
    %v1762 = vunpack.c.l.b16 %v1676
    %v1763 = vunpack.c.h.b16 %v1676
    %v1764 = vunpack.c.l.b16 %v1677
    %v1765 = vunpack.c.h.b16 %v1677
    %v1766 = vunpack.c.l.b16 %v1678
    %v1767 = vunpack.c.h.b16 %v1678
    %v1768 = vunpack.c.l.b16 %v1679
    %v1769 = vunpack.c.h.b16 %v1679
    %v1770 = vunpack.c.l.b16 %v1680
    %v1771 = vunpack.c.h.b16 %v1680
    %v1772 = vunpack.c.l.b16 %v1681
    %v1773 = vunpack.c.h.b16 %v1681
    %v1774 = vunpack.c.l.b16 %v1682
    %v1775 = vunpack.c.h.b16 %v1682
    %v1776 = vunpack.c.l.b16 %v1683
    %v1777 = vunpack.c.h.b16 %v1683
    %v1778 = vunpack.c.l.b16 %v1684
    %v1779 = vunpack.c.h.b16 %v1684
    %v1780 = vunpack.c.l.b16 %v1685
    %v1781 = vunpack.c.h.b16 %v1685
    %v1782 = vpack.c.b16 %v1722, %v1718
    %v1783 = vpack.c.b16 %v1723, %v1719
    %v1784 = vpack.c.b16 %v1724, %v1720
    %v1785 = vpack.c.b16 %v1725, %v1721
    %v1786 = vpack.c.b16 %v1730, %v1726
    %v1787 = vpack.c.b16 %v1731, %v1727
    %v1788 = vpack.c.b16 %v1732, %v1728
    %v1789 = vpack.c.b16 %v1733, %v1729
    %v1790 = vpack.c.b16 %v1738, %v1734
    %v1791 = vpack.c.b16 %v1739, %v1735
    %v1792 = vpack.c.b16 %v1740, %v1736
    %v1793 = vpack.c.b16 %v1741, %v1737
    %v1794 = vpack.c.b16 %v1746, %v1742
    %v1795 = vpack.c.b16 %v1747, %v1743
    %v1796 = vpack.c.b16 %v1748, %v1744
    %v1797 = vpack.c.b16 %v1749, %v1745
    %v1798 = vpack.c.b16 %v1754, %v1750
    %v1799 = vpack.c.b16 %v1755, %v1751
    %v1800 = vpack.c.b16 %v1756, %v1752
    %v1801 = vpack.c.b16 %v1757, %v1753
    %v1802 = vpack.c.b16 %v1762, %v1758
    %v1803 = vpack.c.b16 %v1763, %v1759
    %v1804 = vpack.c.b16 %v1764, %v1760
    %v1805 = vpack.c.b16 %v1765, %v1761
    %v1806 = vpack.c.b16 %v1770, %v1766
    %v1807 = vpack.c.b16 %v1771, %v1767
    %v1808 = vpack.c.b16 %v1772, %v1768
    %v1809 = vpack.c.b16 %v1773, %v1769
    %v1810 = vpack.c.b16 %v1778, %v1774
    %v1811 = vpack.c.b16 %v1779, %v1775
    %v1812 = vpack.c.b16 %v1780, %v1776
    %v1813 = vpack.c.b16 %v1781, %v1777
    %1846 = vmatprep.subr.bf16.mxu0 %v1783
    %1847 = vmatpush1.bf16.msra.mxu0 %v1782
    %1848 = vmatprep.subr.bf16.mxu0 %v1787
    %1849 = vmatpush1.bf16.msra.mxu0 %v1786
    %1850 = vmatprep.subr.bf16.mxu0 %v1791
    %1851 = vmatpush1.bf16.msra.mxu0 %v1790
    %1852 = vmatprep.subr.bf16.mxu0 %v1795
    %1853 = vmatpush1.bf16.msra.mxu0 %v1794
    %1854 = vmatprep.subr.bf16.mxu0 %v1799
    %1855 = vmatpush1.bf16.msra.mxu0 %v1798
    %1856 = vmatprep.subr.bf16.mxu0 %v1803
    %1857 = vmatpush1.bf16.msra.mxu0 %v1802
    %1858 = vmatprep.subr.bf16.mxu0 %v1807
    %1859 = vmatpush1.bf16.msra.mxu0 %v1806
    %1860 = vmatprep.subr.bf16.mxu0 %v1811
    %1861 = vmatpush1.bf16.msra.mxu0 %v1810
    %1862 = vmatprep.subr.bf16.mxu0 0
    %1863 = vmatpush1.bf16.msra.mxu0 0
    %1864 = vmatprep.subr.bf16.mxu0 0
    %1865 = vmatpush1.bf16.msra.mxu0 0
    %1866 = vmatprep.subr.bf16.mxu0 0
    %1867 = vmatpush1.bf16.msra.mxu0 0
    %1868 = vmatprep.subr.bf16.mxu0 0
    %1869 = vmatpush1.bf16.msra.mxu0 0
    %1870 = vmatprep.subr.bf16.mxu0 0
    %1871 = vmatpush1.bf16.msra.mxu0 0
    %1872 = vmatprep.subr.bf16.mxu0 0
    %1873 = vmatpush1.bf16.msra.mxu0 0
    %1874 = vmatprep.subr.bf16.mxu0 0
    %1875 = vmatpush1.bf16.msra.mxu0 0
    %1876 = vmatprep.subr.bf16.mxu0 0
    %1877 = vmatpush1.bf16.msra.mxu0 0
    %1878 = vmatprep.mubr.bf16.mxu0 0
    %1879 = vmatmul.mubr.bf16.gmra.mrb[0].mxu0 %v1653
    %v1880 = vpop.f32.mrb[0].mxu0
    %v1881 = vadd.f32 0.0, %v1880
    %v1882 = vpop.f32.mrb[0].mxu0
    %v1883 = vadd.f32 0.0, %v1882
    %v1884 = vpop.f32.mrb[0].mxu0
    %v1885 = vpop.f32.mrb[0].mxu0
    %1886 = vdwg.mxu0
    %1887 = vmatprep.subr.bf16.mxu0 %v1785
    %1888 = vmatpush1.bf16.msra.mxu0 %v1784
    %1889 = vmatprep.subr.bf16.mxu0 %v1789
    %1890 = vmatpush1.bf16.msra.mxu0 %v1788
    %1891 = vmatprep.subr.bf16.mxu0 %v1793
    %1892 = vmatpush1.bf16.msra.mxu0 %v1792
    %1893 = vmatprep.subr.bf16.mxu0 %v1797
    %1894 = vmatpush1.bf16.msra.mxu0 %v1796
    %1895 = vmatprep.subr.bf16.mxu0 %v1801
    %1896 = vmatpush1.bf16.msra.mxu0 %v1800
    %1897 = vmatprep.subr.bf16.mxu0 %v1805
    %1898 = vmatpush1.bf16.msra.mxu0 %v1804
    %1899 = vmatprep.subr.bf16.mxu0 %v1809
    %1900 = vmatpush1.bf16.msra.mxu0 %v1808
    %1901 = vmatprep.subr.bf16.mxu0 %v1813
    %1902 = vmatpush1.bf16.msra.mxu0 %v1812
    %1903 = vmatprep.subr.bf16.mxu0 0
    %1904 = vmatpush1.bf16.msra.mxu0 0
    %1905 = vmatprep.subr.bf16.mxu0 0
    %1906 = vmatpush1.bf16.msra.mxu0 0
    %1907 = vmatprep.subr.bf16.mxu0 0
    %1908 = vmatpush1.bf16.msra.mxu0 0
    %1909 = vmatprep.subr.bf16.mxu0 0
    %1910 = vmatpush1.bf16.msra.mxu0 0
    %1911 = vmatprep.subr.bf16.mxu0 0
    %1912 = vmatpush1.bf16.msra.mxu0 0
    %1913 = vmatprep.subr.bf16.mxu0 0
    %1914 = vmatpush1.bf16.msra.mxu0 0
    %1915 = vmatprep.subr.bf16.mxu0 0
    %1916 = vmatpush1.bf16.msra.mxu0 0
    %1917 = vmatprep.subr.bf16.mxu0 0
    %1918 = vmatpush1.bf16.msra.mxu0 0
    %1919 = vmatprep.mubr.bf16.mxu0 0
    %1920 = vmatmul.mubr.bf16.gmra.mrb[0].mxu0 %v1653
    %v1921 = vpop.f32.mrb[0].mxu0
    %v1922 = vadd.f32 0.0, %v1921
    %v1923 = vpop.f32.mrb[0].mxu0
    %v1924 = vadd.f32 0.0, %v1923
    %v1925 = vpop.f32.mrb[0].mxu0
    %v1926 = vpop.f32.mrb[0].mxu0
    %1927 = vdwg.mxu0
    %v1928 = vadd.f32 %v1649, %v1881
    %v1929 = vadd.f32 %v1650, %v1883
    %v1930 = vadd.f32 %v1651, %v1922
    %v1931 = vadd.f32 %v1652, %v1924
    %v1932 = vxor.u32 %v1928, 2147483648
    %v1933 = vmul.f32 %v1932, 1.442695
    %v1934 = vpow.pop %v1933
    %v1935 = vadd.f32 %v1934, 1.0
    %v1936 = vrcp.pop %v1935
    %v1937 = vmul.f32 1.0, %v1936
    %v1938 = vxor.u32 %v1929, 2147483648
    %v1939 = vmul.f32 %v1938, 1.442695
    %v1940 = vpow.pop %v1939
    %v1941 = vadd.f32 %v1940, 1.0
    %v1942 = vrcp.pop %v1941
    %v1943 = vmul.f32 1.0, %v1942
    %v1944 = vtanh.pop %v1930
    %v1945 = vxor.u32 %v1931, 2147483648
    %v1946 = vmul.f32 %v1945, 1.442695
    %v1947 = vpow.pop %v1946
    %v1948 = vadd.f32 %v1947, 1.0
    %v1949 = vrcp.pop %v1948
    %v1950 = vmul.f32 1.0, %v1949
    %v1951 = vmul.f32 %v1943, %v1452
    %v1952 = vmul.f32 %v1937, %v1944
    %v1953 = vadd.f32 %v1951, %v1952
    %v1954 = vtanh.pop %v1953
    %v1955 = vmul.f32 %v1950, %v1954
    %v1956 = vpack.c.bf16 %v1647, %v1647
    %v1957 = vld [vmem:[#allocation4] sm:$0xff]
    %v1958 = vld [vmem:[#allocation4 + $0x8] sm:$0xff]
    %v1959 = vld [vmem:[#allocation4 + $0x10] sm:$0xff]
    %v1960 = vld [vmem:[#allocation4 + $0x18] sm:$0xff]
    %v1961 = vld [vmem:[#allocation4 + $0x20] sm:$0xff]
    %v1962 = vld [vmem:[#allocation4 + $0x28] sm:$0xff]
    %v1963 = vld [vmem:[#allocation4 + $0x30] sm:$0xff]
    %v1964 = vld [vmem:[#allocation4 + $0x38] sm:$0xff]
    %v1965 = vld [vmem:[#allocation4 + $0x40] sm:$0xff]
    %v1966 = vld [vmem:[#allocation4 + $0x48] sm:$0xff]
    %v1967 = vld [vmem:[#allocation4 + $0x50] sm:$0xff]
    %v1968 = vld [vmem:[#allocation4 + $0x58] sm:$0xff]
    %v1969 = vld [vmem:[#allocation4 + $0x60] sm:$0xff]
    %v1970 = vld [vmem:[#allocation4 + $0x68] sm:$0xff]
    %v1971 = vld [vmem:[#allocation4 + $0x70] sm:$0xff]
    %v1972 = vld [vmem:[#allocation4 + $0x78] sm:$0xff]
    %v1973 = vld [vmem:[#allocation4 + $0x80] sm:$0xff]
    %v1974 = vld [vmem:[#allocation4 + $0x88] sm:$0xff]
    %v1975 = vld [vmem:[#allocation4 + $0x90] sm:$0xff]
    %v1976 = vld [vmem:[#allocation4 + $0x98] sm:$0xff]
    %v1977 = vld [vmem:[#allocation4 + $0xa0] sm:$0xff]
    %v1978 = vld [vmem:[#allocation4 + $0xa8] sm:$0xff]
    %v1979 = vld [vmem:[#allocation4 + $0xb0] sm:$0xff]
    %v1980 = vld [vmem:[#allocation4 + $0xb8] sm:$0xff]
    %v1981 = vld [vmem:[#allocation4 + $0xc0] sm:$0xff]
    %v1982 = vld [vmem:[#allocation4 + $0xc8] sm:$0xff]
    %v1983 = vld [vmem:[#allocation4 + $0xd0] sm:$0xff]
    %v1984 = vld [vmem:[#allocation4 + $0xd8] sm:$0xff]
    %v1985 = vld [vmem:[#allocation4 + $0xe0] sm:$0xff]
    %v1986 = vld [vmem:[#allocation4 + $0xe8] sm:$0xff]
    %v1987 = vld [vmem:[#allocation4 + $0xf0] sm:$0xff]
    %v1988 = vld [vmem:[#allocation4 + $0xf8] sm:$0xff]
    %v1989 = vld [vmem:[#allocation4 + $0x100] sm:$0xff]
    %v1990 = vld [vmem:[#allocation4 + $0x108] sm:$0xff]
    %v1991 = vld [vmem:[#allocation4 + $0x110] sm:$0xff]
    %v1992 = vld [vmem:[#allocation4 + $0x118] sm:$0xff]
    %v1993 = vld [vmem:[#allocation4 + $0x120] sm:$0xff]
    %v1994 = vld [vmem:[#allocation4 + $0x128] sm:$0xff]
    %v1995 = vld [vmem:[#allocation4 + $0x130] sm:$0xff]
    %v1996 = vld [vmem:[#allocation4 + $0x138] sm:$0xff]
    %v1997 = vld [vmem:[#allocation4 + $0x140] sm:$0xff]
    %v1998 = vld [vmem:[#allocation4 + $0x148] sm:$0xff]
    %v1999 = vld [vmem:[#allocation4 + $0x150] sm:$0xff]
    %v2000 = vld [vmem:[#allocation4 + $0x158] sm:$0xff]
    %v2001 = vld [vmem:[#allocation4 + $0x160] sm:$0xff]
    %v2002 = vld [vmem:[#allocation4 + $0x168] sm:$0xff]
    %v2003 = vld [vmem:[#allocation4 + $0x170] sm:$0xff]
    %v2004 = vld [vmem:[#allocation4 + $0x178] sm:$0xff]
    %v2005 = vld [vmem:[#allocation4 + $0x180] sm:$0xff]
    %v2006 = vld [vmem:[#allocation4 + $0x188] sm:$0xff]
    %v2007 = vld [vmem:[#allocation4 + $0x190] sm:$0xff]
    %v2008 = vld [vmem:[#allocation4 + $0x198] sm:$0xff]
    %v2009 = vld [vmem:[#allocation4 + $0x1a0] sm:$0xff]
    %v2010 = vld [vmem:[#allocation4 + $0x1a8] sm:$0xff]
    %v2011 = vld [vmem:[#allocation4 + $0x1b0] sm:$0xff]
    %v2012 = vld [vmem:[#allocation4 + $0x1b8] sm:$0xff]
    %v2013 = vld [vmem:[#allocation4 + $0x1c0] sm:$0xff]
    %v2014 = vld [vmem:[#allocation4 + $0x1c8] sm:$0xff]
    %v2015 = vld [vmem:[#allocation4 + $0x1d0] sm:$0xff]
    %v2016 = vld [vmem:[#allocation4 + $0x1d8] sm:$0xff]
    %v2017 = vld [vmem:[#allocation4 + $0x1e0] sm:$0xff]
    %v2018 = vld [vmem:[#allocation4 + $0x1e8] sm:$0xff]
    %v2019 = vld [vmem:[#allocation4 + $0x1f0] sm:$0xff]
    %v2020 = vld [vmem:[#allocation4 + $0x1f8] sm:$0xff]
    %v2021 = vld [vmem:[%s6] sm:$0xf]
    %v2023 = vlaneseq
    %v2024 = vshrl.u32 %v2023, 7
    %v2025 = vsub.s32 0, %v2024
    %v2026 = vrot.slane %v2021, %v2025
    %v2027 = vlaneseq
    %v2028 = vshrl.u32 %v2027, 7
    %v2029 = vsub.s32 1, %v2028
    %v2030 = vrot.slane %v2021, %v2029
    %v2031 = vlaneseq
    %v2032 = vshrl.u32 %v2031, 7
    %v2033 = vsub.s32 2, %v2032
    %v2034 = vrot.slane %v2021, %v2033
    %v2035 = vlaneseq
    %v2036 = vshrl.u32 %v2035, 7
    %v2037 = vsub.s32 3, %v2036
    %v2038 = vrot.slane %v2021, %v2037
    %2043 = vmatprep.subr.bf16.mxu0 %v1958
    %2044 = vmatpush1.bf16.msra.mxu0 %v1957
    %2045 = vmatprep.subr.bf16.mxu0 %v1962
    %2046 = vmatpush1.bf16.msra.mxu0 %v1961
    %2047 = vmatprep.subr.bf16.mxu0 %v1966
    %2048 = vmatpush1.bf16.msra.mxu0 %v1965
    %2049 = vmatprep.subr.bf16.mxu0 %v1970
    %2050 = vmatpush1.bf16.msra.mxu0 %v1969
    %2051 = vmatprep.subr.bf16.mxu0 %v1974
    %2052 = vmatpush1.bf16.msra.mxu0 %v1973
    %2053 = vmatprep.subr.bf16.mxu0 %v1978
    %2054 = vmatpush1.bf16.msra.mxu0 %v1977
    %2055 = vmatprep.subr.bf16.mxu0 %v1982
    %2056 = vmatpush1.bf16.msra.mxu0 %v1981
    %2057 = vmatprep.subr.bf16.mxu0 %v1986
    %2058 = vmatpush1.bf16.msra.mxu0 %v1985
    %2059 = vmatprep.subr.bf16.mxu0 %v1990
    %2060 = vmatpush1.bf16.msra.mxu0 %v1989
    %2061 = vmatprep.subr.bf16.mxu0 %v1994
    %2062 = vmatpush1.bf16.msra.mxu0 %v1993
    %2063 = vmatprep.subr.bf16.mxu0 %v1998
    %2064 = vmatpush1.bf16.msra.mxu0 %v1997
    %2065 = vmatprep.subr.bf16.mxu0 %v2002
    %2066 = vmatpush1.bf16.msra.mxu0 %v2001
    %2067 = vmatprep.subr.bf16.mxu0 %v2006
    %2068 = vmatpush1.bf16.msra.mxu0 %v2005
    %2069 = vmatprep.subr.bf16.mxu0 %v2010
    %2070 = vmatpush1.bf16.msra.mxu0 %v2009
    %2071 = vmatprep.subr.bf16.mxu0 %v2014
    %2072 = vmatpush1.bf16.msra.mxu0 %v2013
    %2073 = vmatprep.subr.bf16.mxu0 %v2018
    %2074 = vmatpush1.bf16.msra.mxu0 %v2017
    %2075 = vmatprep.mubr.bf16.mxu0 %v1956
    %2076 = vmatmul.mubr.bf16.gmra.mrb[0].mxu0 %v1653
    %v2077 = vpop.f32.mrb[0].mxu0
    %v2078 = vadd.f32 %v2026, %v2077
    %v2079 = vpop.f32.mrb[0].mxu0
    %v2080 = vadd.f32 %v2030, %v2079
    %v2081 = vpop.f32.mrb[0].mxu0
    %v2082 = vpop.f32.mrb[0].mxu0
    %2083 = vdwg.mxu0
    %2084 = vmatprep.subr.bf16.mxu0 %v1960
    %2085 = vmatpush1.bf16.msra.mxu0 %v1959
    %2086 = vmatprep.subr.bf16.mxu0 %v1964
    %2087 = vmatpush1.bf16.msra.mxu0 %v1963
    %2088 = vmatprep.subr.bf16.mxu0 %v1968
    %2089 = vmatpush1.bf16.msra.mxu0 %v1967
    %2090 = vmatprep.subr.bf16.mxu0 %v1972
    %2091 = vmatpush1.bf16.msra.mxu0 %v1971
    %2092 = vmatprep.subr.bf16.mxu0 %v1976
    %2093 = vmatpush1.bf16.msra.mxu0 %v1975
    %2094 = vmatprep.subr.bf16.mxu0 %v1980
    %2095 = vmatpush1.bf16.msra.mxu0 %v1979
    %2096 = vmatprep.subr.bf16.mxu0 %v1984
    %2097 = vmatpush1.bf16.msra.mxu0 %v1983
    %2098 = vmatprep.subr.bf16.mxu0 %v1988
    %2099 = vmatpush1.bf16.msra.mxu0 %v1987
    %2100 = vmatprep.subr.bf16.mxu0 %v1992
    %2101 = vmatpush1.bf16.msra.mxu0 %v1991
    %2102 = vmatprep.subr.bf16.mxu0 %v1996
    %2103 = vmatpush1.bf16.msra.mxu0 %v1995
    %2104 = vmatprep.subr.bf16.mxu0 %v2000
    %2105 = vmatpush1.bf16.msra.mxu0 %v1999
    %2106 = vmatprep.subr.bf16.mxu0 %v2004
    %2107 = vmatpush1.bf16.msra.mxu0 %v2003
    %2108 = vmatprep.subr.bf16.mxu0 %v2008
    %2109 = vmatpush1.bf16.msra.mxu0 %v2007
    %2110 = vmatprep.subr.bf16.mxu0 %v2012
    %2111 = vmatpush1.bf16.msra.mxu0 %v2011
    %2112 = vmatprep.subr.bf16.mxu0 %v2016
    %2113 = vmatpush1.bf16.msra.mxu0 %v2015
    %2114 = vmatprep.subr.bf16.mxu0 %v2020
    %2115 = vmatpush1.bf16.msra.mxu0 %v2019
    %2116 = vmatprep.mubr.bf16.mxu0 %v1956
    %2117 = vmatmul.mubr.bf16.gmra.mrb[0].mxu0 %v1653
    %v2118 = vpop.f32.mrb[0].mxu0
    %v2119 = vadd.f32 %v2034, %v2118
    %v2120 = vpop.f32.mrb[0].mxu0
    %v2121 = vadd.f32 %v2038, %v2120
    %v2122 = vpop.f32.mrb[0].mxu0
    %v2123 = vpop.f32.mrb[0].mxu0
    %2124 = vdwg.mxu0
    %v2125 = vxor.u32 %v2078, 2147483648
    %v2126 = vmul.f32 %v2125, 1.442695
    %v2127 = vpow.pop %v2126
    %v2128 = vadd.f32 %v2127, 1.0
    %v2129 = vrcp.pop %v2128
    %v2130 = vmul.f32 1.0, %v2129
    %v2131 = vxor.u32 %v2080, 2147483648
    %v2132 = vmul.f32 %v2131, 1.442695
    %v2133 = vpow.pop %v2132
    %v2134 = vadd.f32 %v2133, 1.0
    %v2135 = vrcp.pop %v2134
    %v2136 = vmul.f32 1.0, %v2135
    %v2137 = vtanh.pop %v2119
    %v2138 = vxor.u32 %v2121, 2147483648
    %v2139 = vmul.f32 %v2138, 1.442695
    %v2140 = vpow.pop %v2139
    %v2141 = vadd.f32 %v2140, 1.0
    %v2142 = vrcp.pop %v2141
    %v2143 = vmul.f32 1.0, %v2142
    %v2144 = vmul.f32 %v2136, %v1645
    %v2145 = vmul.f32 %v2130, %v2137
    %v2146 = vadd.f32 %v2144, %v2145
    %v2147 = vtanh.pop %v2146
    %v2148 = vmul.f32 %v2143, %v2147
    %2149 = vst [vmem:[#allocation3 + $0x8] sm:$0xff] %v2148
    %v2150 = vld [vmem:[#allocation2 + $0x60] sm:$0xff]
    %v2151 = vld [vmem:[#allocation2 + $0x68] sm:$0xff]
    %v2152 = vld [vmem:[#allocation2 + $0x70] sm:$0xff]
    %v2153 = vld [vmem:[#allocation2 + $0x78] sm:$0xff]
    %v2154 = vpack.c.bf16 %v1955, %v1955
    %v2155 = vld [vmem:[#allocation12] sm:$0xff]
    %v2156 = vld [vmem:[#allocation12 + $0x8] sm:$0xff]
    %v2157 = vld [vmem:[#allocation12 + $0x10] sm:$0xff]
    %v2158 = vld [vmem:[#allocation12 + $0x18] sm:$0xff]
    %v2159 = vld [vmem:[#allocation12 + $0x20] sm:$0xff]
    %v2160 = vld [vmem:[#allocation12 + $0x28] sm:$0xff]
    %v2161 = vld [vmem:[#allocation12 + $0x30] sm:$0xff]
    %v2162 = vld [vmem:[#allocation12 + $0x38] sm:$0xff]
    %v2163 = vld [vmem:[#allocation12 + $0x40] sm:$0xff]
    %v2164 = vld [vmem:[#allocation12 + $0x48] sm:$0xff]
    %v2165 = vld [vmem:[#allocation12 + $0x50] sm:$0xff]
    %v2166 = vld [vmem:[#allocation12 + $0x58] sm:$0xff]
    %v2167 = vld [vmem:[#allocation12 + $0x60] sm:$0xff]
    %v2168 = vld [vmem:[#allocation12 + $0x68] sm:$0xff]
    %v2169 = vld [vmem:[#allocation12 + $0x70] sm:$0xff]
    %v2170 = vld [vmem:[#allocation12 + $0x78] sm:$0xff]
    %v2171 = vld [vmem:[#allocation12 + $0x80] sm:$0xff]
    %v2172 = vld [vmem:[#allocation12 + $0x88] sm:$0xff]
    %v2173 = vld [vmem:[#allocation12 + $0x90] sm:$0xff]
    %v2174 = vld [vmem:[#allocation12 + $0x98] sm:$0xff]
    %v2175 = vld [vmem:[#allocation12 + $0xa0] sm:$0xff]
    %v2176 = vld [vmem:[#allocation12 + $0xa8] sm:$0xff]
    %v2177 = vld [vmem:[#allocation12 + $0xb0] sm:$0xff]
    %v2178 = vld [vmem:[#allocation12 + $0xb8] sm:$0xff]
    %v2179 = vld [vmem:[#allocation12 + $0xc0] sm:$0xff]
    %v2180 = vld [vmem:[#allocation12 + $0xc8] sm:$0xff]
    %v2181 = vld [vmem:[#allocation12 + $0xd0] sm:$0xff]
    %v2182 = vld [vmem:[#allocation12 + $0xd8] sm:$0xff]
    %v2183 = vld [vmem:[#allocation12 + $0xe0] sm:$0xff]
    %v2184 = vld [vmem:[#allocation12 + $0xe8] sm:$0xff]
    %v2185 = vld [vmem:[#allocation12 + $0xf0] sm:$0xff]
    %v2186 = vld [vmem:[#allocation12 + $0xf8] sm:$0xff]
    %v2219 = vunpack.c.l.b16 %v2155
    %v2220 = vunpack.c.h.b16 %v2155
    %v2221 = vunpack.c.l.b16 %v2156
    %v2222 = vunpack.c.h.b16 %v2156
    %v2223 = vunpack.c.l.b16 %v2157
    %v2224 = vunpack.c.h.b16 %v2157
    %v2225 = vunpack.c.l.b16 %v2158
    %v2226 = vunpack.c.h.b16 %v2158
    %v2227 = vunpack.c.l.b16 %v2159
    %v2228 = vunpack.c.h.b16 %v2159
    %v2229 = vunpack.c.l.b16 %v2160
    %v2230 = vunpack.c.h.b16 %v2160
    %v2231 = vunpack.c.l.b16 %v2161
    %v2232 = vunpack.c.h.b16 %v2161
    %v2233 = vunpack.c.l.b16 %v2162
    %v2234 = vunpack.c.h.b16 %v2162
    %v2235 = vunpack.c.l.b16 %v2163
    %v2236 = vunpack.c.h.b16 %v2163
    %v2237 = vunpack.c.l.b16 %v2164
    %v2238 = vunpack.c.h.b16 %v2164
    %v2239 = vunpack.c.l.b16 %v2165
    %v2240 = vunpack.c.h.b16 %v2165
    %v2241 = vunpack.c.l.b16 %v2166
    %v2242 = vunpack.c.h.b16 %v2166
    %v2243 = vunpack.c.l.b16 %v2167
    %v2244 = vunpack.c.h.b16 %v2167
    %v2245 = vunpack.c.l.b16 %v2168
    %v2246 = vunpack.c.h.b16 %v2168
    %v2247 = vunpack.c.l.b16 %v2169
    %v2248 = vunpack.c.h.b16 %v2169
    %v2249 = vunpack.c.l.b16 %v2170
    %v2250 = vunpack.c.h.b16 %v2170
    %v2251 = vunpack.c.l.b16 %v2171
    %v2252 = vunpack.c.h.b16 %v2171
    %v2253 = vunpack.c.l.b16 %v2172
    %v2254 = vunpack.c.h.b16 %v2172
    %v2255 = vunpack.c.l.b16 %v2173
    %v2256 = vunpack.c.h.b16 %v2173
    %v2257 = vunpack.c.l.b16 %v2174
    %v2258 = vunpack.c.h.b16 %v2174
    %v2259 = vunpack.c.l.b16 %v2175
    %v2260 = vunpack.c.h.b16 %v2175
    %v2261 = vunpack.c.l.b16 %v2176
    %v2262 = vunpack.c.h.b16 %v2176
    %v2263 = vunpack.c.l.b16 %v2177
    %v2264 = vunpack.c.h.b16 %v2177
    %v2265 = vunpack.c.l.b16 %v2178
    %v2266 = vunpack.c.h.b16 %v2178
    %v2267 = vunpack.c.l.b16 %v2179
    %v2268 = vunpack.c.h.b16 %v2179
    %v2269 = vunpack.c.l.b16 %v2180
    %v2270 = vunpack.c.h.b16 %v2180
    %v2271 = vunpack.c.l.b16 %v2181
    %v2272 = vunpack.c.h.b16 %v2181
    %v2273 = vunpack.c.l.b16 %v2182
    %v2274 = vunpack.c.h.b16 %v2182
    %v2275 = vunpack.c.l.b16 %v2183
    %v2276 = vunpack.c.h.b16 %v2183
    %v2277 = vunpack.c.l.b16 %v2184
    %v2278 = vunpack.c.h.b16 %v2184
    %v2279 = vunpack.c.l.b16 %v2185
    %v2280 = vunpack.c.h.b16 %v2185
    %v2281 = vunpack.c.l.b16 %v2186
    %v2282 = vunpack.c.h.b16 %v2186
    %v2283 = vpack.c.b16 %v2223, %v2219
    %v2284 = vpack.c.b16 %v2224, %v2220
    %v2285 = vpack.c.b16 %v2225, %v2221
    %v2286 = vpack.c.b16 %v2226, %v2222
    %v2287 = vpack.c.b16 %v2231, %v2227
    %v2288 = vpack.c.b16 %v2232, %v2228
    %v2289 = vpack.c.b16 %v2233, %v2229
    %v2290 = vpack.c.b16 %v2234, %v2230
    %v2291 = vpack.c.b16 %v2239, %v2235
    %v2292 = vpack.c.b16 %v2240, %v2236
    %v2293 = vpack.c.b16 %v2241, %v2237
    %v2294 = vpack.c.b16 %v2242, %v2238
    %v2295 = vpack.c.b16 %v2247, %v2243
    %v2296 = vpack.c.b16 %v2248, %v2244
    %v2297 = vpack.c.b16 %v2249, %v2245
    %v2298 = vpack.c.b16 %v2250, %v2246
    %v2299 = vpack.c.b16 %v2255, %v2251
    %v2300 = vpack.c.b16 %v2256, %v2252
    %v2301 = vpack.c.b16 %v2257, %v2253
    %v2302 = vpack.c.b16 %v2258, %v2254
    %v2303 = vpack.c.b16 %v2263, %v2259
    %v2304 = vpack.c.b16 %v2264, %v2260
    %v2305 = vpack.c.b16 %v2265, %v2261
    %v2306 = vpack.c.b16 %v2266, %v2262
    %v2307 = vpack.c.b16 %v2271, %v2267
    %v2308 = vpack.c.b16 %v2272, %v2268
    %v2309 = vpack.c.b16 %v2273, %v2269
    %v2310 = vpack.c.b16 %v2274, %v2270
    %v2311 = vpack.c.b16 %v2279, %v2275
    %v2312 = vpack.c.b16 %v2280, %v2276
    %v2313 = vpack.c.b16 %v2281, %v2277
    %v2314 = vpack.c.b16 %v2282, %v2278
    %2347 = vmatprep.subr.bf16.mxu0 %v2284
    %2348 = vmatpush1.bf16.msra.mxu0 %v2283
    %2349 = vmatprep.subr.bf16.mxu0 %v2288
    %2350 = vmatpush1.bf16.msra.mxu0 %v2287
    %2351 = vmatprep.subr.bf16.mxu0 %v2292
    %2352 = vmatpush1.bf16.msra.mxu0 %v2291
    %2353 = vmatprep.subr.bf16.mxu0 %v2296
    %2354 = vmatpush1.bf16.msra.mxu0 %v2295
    %2355 = vmatprep.subr.bf16.mxu0 %v2300
    %2356 = vmatpush1.bf16.msra.mxu0 %v2299
    %2357 = vmatprep.subr.bf16.mxu0 %v2304
    %2358 = vmatpush1.bf16.msra.mxu0 %v2303
    %2359 = vmatprep.subr.bf16.mxu0 %v2308
    %2360 = vmatpush1.bf16.msra.mxu0 %v2307
    %2361 = vmatprep.subr.bf16.mxu0 %v2312
    %2362 = vmatpush1.bf16.msra.mxu0 %v2311
    %2363 = vmatprep.subr.bf16.mxu0 0
    %2364 = vmatpush1.bf16.msra.mxu0 0
    %2365 = vmatprep.subr.bf16.mxu0 0
    %2366 = vmatpush1.bf16.msra.mxu0 0
    %2367 = vmatprep.subr.bf16.mxu0 0
    %2368 = vmatpush1.bf16.msra.mxu0 0
    %2369 = vmatprep.subr.bf16.mxu0 0
    %2370 = vmatpush1.bf16.msra.mxu0 0
    %2371 = vmatprep.subr.bf16.mxu0 0
    %2372 = vmatpush1.bf16.msra.mxu0 0
    %2373 = vmatprep.subr.bf16.mxu0 0
    %2374 = vmatpush1.bf16.msra.mxu0 0
    %2375 = vmatprep.subr.bf16.mxu0 0
    %2376 = vmatpush1.bf16.msra.mxu0 0
    %2377 = vmatprep.subr.bf16.mxu0 0
    %2378 = vmatpush1.bf16.msra.mxu0 0
    %2379 = vmatprep.mubr.bf16.mxu0 0
    %2380 = vmatmul.mubr.bf16.gmra.mrb[0].mxu0 %v2154
    %v2381 = vpop.f32.mrb[0].mxu0
    %v2382 = vadd.f32 0.0, %v2381
    %v2383 = vpop.f32.mrb[0].mxu0
    %v2384 = vadd.f32 0.0, %v2383
    %v2385 = vpop.f32.mrb[0].mxu0
    %v2386 = vpop.f32.mrb[0].mxu0
    %2387 = vdwg.mxu0
    %2388 = vmatprep.subr.bf16.mxu0 %v2286
    %2389 = vmatpush1.bf16.msra.mxu0 %v2285
    %2390 = vmatprep.subr.bf16.mxu0 %v2290
    %2391 = vmatpush1.bf16.msra.mxu0 %v2289
    %2392 = vmatprep.subr.bf16.mxu0 %v2294
    %2393 = vmatpush1.bf16.msra.mxu0 %v2293
    %2394 = vmatprep.subr.bf16.mxu0 %v2298
    %2395 = vmatpush1.bf16.msra.mxu0 %v2297
    %2396 = vmatprep.subr.bf16.mxu0 %v2302
    %2397 = vmatpush1.bf16.msra.mxu0 %v2301
    %2398 = vmatprep.subr.bf16.mxu0 %v2306
    %2399 = vmatpush1.bf16.msra.mxu0 %v2305
    %2400 = vmatprep.subr.bf16.mxu0 %v2310
    %2401 = vmatpush1.bf16.msra.mxu0 %v2309
    %2402 = vmatprep.subr.bf16.mxu0 %v2314
    %2403 = vmatpush1.bf16.msra.mxu0 %v2313
    %2404 = vmatprep.subr.bf16.mxu0 0
    %2405 = vmatpush1.bf16.msra.mxu0 0
    %2406 = vmatprep.subr.bf16.mxu0 0
    %2407 = vmatpush1.bf16.msra.mxu0 0
    %2408 = vmatprep.subr.bf16.mxu0 0
    %2409 = vmatpush1.bf16.msra.mxu0 0
    %2410 = vmatprep.subr.bf16.mxu0 0
    %2411 = vmatpush1.bf16.msra.mxu0 0
    %2412 = vmatprep.subr.bf16.mxu0 0
    %2413 = vmatpush1.bf16.msra.mxu0 0
    %2414 = vmatprep.subr.bf16.mxu0 0
    %2415 = vmatpush1.bf16.msra.mxu0 0
    %2416 = vmatprep.subr.bf16.mxu0 0
    %2417 = vmatpush1.bf16.msra.mxu0 0
    %2418 = vmatprep.subr.bf16.mxu0 0
    %2419 = vmatpush1.bf16.msra.mxu0 0
    %2420 = vmatprep.mubr.bf16.mxu0 0
    %2421 = vmatmul.mubr.bf16.gmra.mrb[0].mxu0 %v2154
    %v2422 = vpop.f32.mrb[0].mxu0
    %v2423 = vadd.f32 0.0, %v2422
    %v2424 = vpop.f32.mrb[0].mxu0
    %v2425 = vadd.f32 0.0, %v2424
    %v2426 = vpop.f32.mrb[0].mxu0
    %v2427 = vpop.f32.mrb[0].mxu0
    %2428 = vdwg.mxu0
    %v2429 = vadd.f32 %v2150, %v2382
    %v2430 = vadd.f32 %v2151, %v2384
    %v2431 = vadd.f32 %v2152, %v2423
    %v2432 = vadd.f32 %v2153, %v2425
    %v2433 = vxor.u32 %v2429, 2147483648
    %v2434 = vmul.f32 %v2433, 1.442695
    %v2435 = vpow.pop %v2434
    %v2436 = vadd.f32 %v2435, 1.0
    %v2437 = vrcp.pop %v2436
    %v2438 = vmul.f32 1.0, %v2437
    %v2439 = vxor.u32 %v2430, 2147483648
    %v2440 = vmul.f32 %v2439, 1.442695
    %v2441 = vpow.pop %v2440
    %v2442 = vadd.f32 %v2441, 1.0
    %v2443 = vrcp.pop %v2442
    %v2444 = vmul.f32 1.0, %v2443
    %v2445 = vtanh.pop %v2431
    %v2446 = vxor.u32 %v2432, 2147483648
    %v2447 = vmul.f32 %v2446, 1.442695
    %v2448 = vpow.pop %v2447
    %v2449 = vadd.f32 %v2448, 1.0
    %v2450 = vrcp.pop %v2449
    %v2451 = vmul.f32 1.0, %v2450
    %v2452 = vmul.f32 %v2444, %v1953
    %v2453 = vmul.f32 %v2438, %v2445
    %v2454 = vadd.f32 %v2452, %v2453
    %v2455 = vtanh.pop %v2454
    %v2456 = vmul.f32 %v2451, %v2455
    %v2457 = vpack.c.bf16 %v2148, %v2148
    %v2458 = vld [vmem:[#allocation4] sm:$0xff]
    %v2459 = vld [vmem:[#allocation4 + $0x8] sm:$0xff]
    %v2460 = vld [vmem:[#allocation4 + $0x10] sm:$0xff]
    %v2461 = vld [vmem:[#allocation4 + $0x18] sm:$0xff]
    %v2462 = vld [vmem:[#allocation4 + $0x20] sm:$0xff]
    %v2463 = vld [vmem:[#allocation4 + $0x28] sm:$0xff]
    %v2464 = vld [vmem:[#allocation4 + $0x30] sm:$0xff]
    %v2465 = vld [vmem:[#allocation4 + $0x38] sm:$0xff]
    %v2466 = vld [vmem:[#allocation4 + $0x40] sm:$0xff]
    %v2467 = vld [vmem:[#allocation4 + $0x48] sm:$0xff]
    %v2468 = vld [vmem:[#allocation4 + $0x50] sm:$0xff]
    %v2469 = vld [vmem:[#allocation4 + $0x58] sm:$0xff]
    %v2470 = vld [vmem:[#allocation4 + $0x60] sm:$0xff]
    %v2471 = vld [vmem:[#allocation4 + $0x68] sm:$0xff]
    %v2472 = vld [vmem:[#allocation4 + $0x70] sm:$0xff]
    %v2473 = vld [vmem:[#allocation4 + $0x78] sm:$0xff]
    %v2474 = vld [vmem:[#allocation4 + $0x80] sm:$0xff]
    %v2475 = vld [vmem:[#allocation4 + $0x88] sm:$0xff]
    %v2476 = vld [vmem:[#allocation4 + $0x90] sm:$0xff]
    %v2477 = vld [vmem:[#allocation4 + $0x98] sm:$0xff]
    %v2478 = vld [vmem:[#allocation4 + $0xa0] sm:$0xff]
    %v2479 = vld [vmem:[#allocation4 + $0xa8] sm:$0xff]
    %v2480 = vld [vmem:[#allocation4 + $0xb0] sm:$0xff]
    %v2481 = vld [vmem:[#allocation4 + $0xb8] sm:$0xff]
    %v2482 = vld [vmem:[#allocation4 + $0xc0] sm:$0xff]
    %v2483 = vld [vmem:[#allocation4 + $0xc8] sm:$0xff]
    %v2484 = vld [vmem:[#allocation4 + $0xd0] sm:$0xff]
    %v2485 = vld [vmem:[#allocation4 + $0xd8] sm:$0xff]
    %v2486 = vld [vmem:[#allocation4 + $0xe0] sm:$0xff]
    %v2487 = vld [vmem:[#allocation4 + $0xe8] sm:$0xff]
    %v2488 = vld [vmem:[#allocation4 + $0xf0] sm:$0xff]
    %v2489 = vld [vmem:[#allocation4 + $0xf8] sm:$0xff]
    %v2490 = vld [vmem:[#allocation4 + $0x100] sm:$0xff]
    %v2491 = vld [vmem:[#allocation4 + $0x108] sm:$0xff]
    %v2492 = vld [vmem:[#allocation4 + $0x110] sm:$0xff]
    %v2493 = vld [vmem:[#allocation4 + $0x118] sm:$0xff]
    %v2494 = vld [vmem:[#allocation4 + $0x120] sm:$0xff]
    %v2495 = vld [vmem:[#allocation4 + $0x128] sm:$0xff]
    %v2496 = vld [vmem:[#allocation4 + $0x130] sm:$0xff]
    %v2497 = vld [vmem:[#allocation4 + $0x138] sm:$0xff]
    %v2498 = vld [vmem:[#allocation4 + $0x140] sm:$0xff]
    %v2499 = vld [vmem:[#allocation4 + $0x148] sm:$0xff]
    %v2500 = vld [vmem:[#allocation4 + $0x150] sm:$0xff]
    %v2501 = vld [vmem:[#allocation4 + $0x158] sm:$0xff]
    %v2502 = vld [vmem:[#allocation4 + $0x160] sm:$0xff]
    %v2503 = vld [vmem:[#allocation4 + $0x168] sm:$0xff]
    %v2504 = vld [vmem:[#allocation4 + $0x170] sm:$0xff]
    %v2505 = vld [vmem:[#allocation4 + $0x178] sm:$0xff]
    %v2506 = vld [vmem:[#allocation4 + $0x180] sm:$0xff]
    %v2507 = vld [vmem:[#allocation4 + $0x188] sm:$0xff]
    %v2508 = vld [vmem:[#allocation4 + $0x190] sm:$0xff]
    %v2509 = vld [vmem:[#allocation4 + $0x198] sm:$0xff]
    %v2510 = vld [vmem:[#allocation4 + $0x1a0] sm:$0xff]
    %v2511 = vld [vmem:[#allocation4 + $0x1a8] sm:$0xff]
    %v2512 = vld [vmem:[#allocation4 + $0x1b0] sm:$0xff]
    %v2513 = vld [vmem:[#allocation4 + $0x1b8] sm:$0xff]
    %v2514 = vld [vmem:[#allocation4 + $0x1c0] sm:$0xff]
    %v2515 = vld [vmem:[#allocation4 + $0x1c8] sm:$0xff]
    %v2516 = vld [vmem:[#allocation4 + $0x1d0] sm:$0xff]
    %v2517 = vld [vmem:[#allocation4 + $0x1d8] sm:$0xff]
    %v2518 = vld [vmem:[#allocation4 + $0x1e0] sm:$0xff]
    %v2519 = vld [vmem:[#allocation4 + $0x1e8] sm:$0xff]
    %v2520 = vld [vmem:[#allocation4 + $0x1f0] sm:$0xff]
    %v2521 = vld [vmem:[#allocation4 + $0x1f8] sm:$0xff]
    %v2522 = vld [vmem:[%s6] sm:$0xf]
    %v2524 = vlaneseq
    %v2525 = vshrl.u32 %v2524, 7
    %v2526 = vsub.s32 0, %v2525
    %v2527 = vrot.slane %v2522, %v2526
    %v2528 = vlaneseq
    %v2529 = vshrl.u32 %v2528, 7
    %v2530 = vsub.s32 1, %v2529
    %v2531 = vrot.slane %v2522, %v2530
    %v2532 = vlaneseq
    %v2533 = vshrl.u32 %v2532, 7
    %v2534 = vsub.s32 2, %v2533
    %v2535 = vrot.slane %v2522, %v2534
    %v2536 = vlaneseq
    %v2537 = vshrl.u32 %v2536, 7
    %v2538 = vsub.s32 3, %v2537
    %v2539 = vrot.slane %v2522, %v2538
    %2544 = vmatprep.subr.bf16.mxu0 %v2459
    %2545 = vmatpush1.bf16.msra.mxu0 %v2458
    %2546 = vmatprep.subr.bf16.mxu0 %v2463
    %2547 = vmatpush1.bf16.msra.mxu0 %v2462
    %2548 = vmatprep.subr.bf16.mxu0 %v2467
    %2549 = vmatpush1.bf16.msra.mxu0 %v2466
    %2550 = vmatprep.subr.bf16.mxu0 %v2471
    %2551 = vmatpush1.bf16.msra.mxu0 %v2470
    %2552 = vmatprep.subr.bf16.mxu0 %v2475
    %2553 = vmatpush1.bf16.msra.mxu0 %v2474
    %2554 = vmatprep.subr.bf16.mxu0 %v2479
    %2555 = vmatpush1.bf16.msra.mxu0 %v2478
    %2556 = vmatprep.subr.bf16.mxu0 %v2483
    %2557 = vmatpush1.bf16.msra.mxu0 %v2482
    %2558 = vmatprep.subr.bf16.mxu0 %v2487
    %2559 = vmatpush1.bf16.msra.mxu0 %v2486
    %2560 = vmatprep.subr.bf16.mxu0 %v2491
    %2561 = vmatpush1.bf16.msra.mxu0 %v2490
    %2562 = vmatprep.subr.bf16.mxu0 %v2495
    %2563 = vmatpush1.bf16.msra.mxu0 %v2494
    %2564 = vmatprep.subr.bf16.mxu0 %v2499
    %2565 = vmatpush1.bf16.msra.mxu0 %v2498
    %2566 = vmatprep.subr.bf16.mxu0 %v2503
    %2567 = vmatpush1.bf16.msra.mxu0 %v2502
    %2568 = vmatprep.subr.bf16.mxu0 %v2507
    %2569 = vmatpush1.bf16.msra.mxu0 %v2506
    %2570 = vmatprep.subr.bf16.mxu0 %v2511
    %2571 = vmatpush1.bf16.msra.mxu0 %v2510
    %2572 = vmatprep.subr.bf16.mxu0 %v2515
    %2573 = vmatpush1.bf16.msra.mxu0 %v2514
    %2574 = vmatprep.subr.bf16.mxu0 %v2519
    %2575 = vmatpush1.bf16.msra.mxu0 %v2518
    %2576 = vmatprep.mubr.bf16.mxu0 %v2457
    %2577 = vmatmul.mubr.bf16.gmra.mrb[0].mxu0 %v2154
    %v2578 = vpop.f32.mrb[0].mxu0
    %v2579 = vadd.f32 %v2527, %v2578
    %v2580 = vpop.f32.mrb[0].mxu0
    %v2581 = vadd.f32 %v2531, %v2580
    %v2582 = vpop.f32.mrb[0].mxu0
    %v2583 = vpop.f32.mrb[0].mxu0
    %2584 = vdwg.mxu0
    %2585 = vmatprep.subr.bf16.mxu0 %v2461
    %2586 = vmatpush1.bf16.msra.mxu0 %v2460
    %2587 = vmatprep.subr.bf16.mxu0 %v2465
    %2588 = vmatpush1.bf16.msra.mxu0 %v2464
    %2589 = vmatprep.subr.bf16.mxu0 %v2469
    %2590 = vmatpush1.bf16.msra.mxu0 %v2468
    %2591 = vmatprep.subr.bf16.mxu0 %v2473
    %2592 = vmatpush1.bf16.msra.mxu0 %v2472
    %2593 = vmatprep.subr.bf16.mxu0 %v2477
    %2594 = vmatpush1.bf16.msra.mxu0 %v2476
    %2595 = vmatprep.subr.bf16.mxu0 %v2481
    %2596 = vmatpush1.bf16.msra.mxu0 %v2480
    %2597 = vmatprep.subr.bf16.mxu0 %v2485
    %2598 = vmatpush1.bf16.msra.mxu0 %v2484
    %2599 = vmatprep.subr.bf16.mxu0 %v2489
    %2600 = vmatpush1.bf16.msra.mxu0 %v2488
    %2601 = vmatprep.subr.bf16.mxu0 %v2493
    %2602 = vmatpush1.bf16.msra.mxu0 %v2492
    %2603 = vmatprep.subr.bf16.mxu0 %v2497
    %2604 = vmatpush1.bf16.msra.mxu0 %v2496
    %2605 = vmatprep.subr.bf16.mxu0 %v2501
    %2606 = vmatpush1.bf16.msra.mxu0 %v2500
    %2607 = vmatprep.subr.bf16.mxu0 %v2505
    %2608 = vmatpush1.bf16.msra.mxu0 %v2504
    %2609 = vmatprep.subr.bf16.mxu0 %v2509
    %2610 = vmatpush1.bf16.msra.mxu0 %v2508
    %2611 = vmatprep.subr.bf16.mxu0 %v2513
    %2612 = vmatpush1.bf16.msra.mxu0 %v2512
    %2613 = vmatprep.subr.bf16.mxu0 %v2517
    %2614 = vmatpush1.bf16.msra.mxu0 %v2516
    %2615 = vmatprep.subr.bf16.mxu0 %v2521
    %2616 = vmatpush1.bf16.msra.mxu0 %v2520
    %2617 = vmatprep.mubr.bf16.mxu0 %v2457
    %2618 = vmatmul.mubr.bf16.gmra.mrb[0].mxu0 %v2154
    %v2619 = vpop.f32.mrb[0].mxu0
    %v2620 = vadd.f32 %v2535, %v2619
    %v2621 = vpop.f32.mrb[0].mxu0
    %v2622 = vadd.f32 %v2539, %v2621
    %v2623 = vpop.f32.mrb[0].mxu0
    %v2624 = vpop.f32.mrb[0].mxu0
    %2625 = vdwg.mxu0
    %v2626 = vxor.u32 %v2579, 2147483648
    %v2627 = vmul.f32 %v2626, 1.442695
    %v2628 = vpow.pop %v2627
    %v2629 = vadd.f32 %v2628, 1.0
    %v2630 = vrcp.pop %v2629
    %v2631 = vmul.f32 1.0, %v2630
    %v2632 = vxor.u32 %v2581, 2147483648
    %v2633 = vmul.f32 %v2632, 1.442695
    %v2634 = vpow.pop %v2633
    %v2635 = vadd.f32 %v2634, 1.0
    %v2636 = vrcp.pop %v2635
    %v2637 = vmul.f32 1.0, %v2636
    %v2638 = vtanh.pop %v2620
    %v2639 = vxor.u32 %v2622, 2147483648
    %v2640 = vmul.f32 %v2639, 1.442695
    %v2641 = vpow.pop %v2640
    %v2642 = vadd.f32 %v2641, 1.0
    %v2643 = vrcp.pop %v2642
    %v2644 = vmul.f32 1.0, %v2643
    %v2645 = vmul.f32 %v2637, %v2146
    %v2646 = vmul.f32 %v2631, %v2638
    %v2647 = vadd.f32 %v2645, %v2646
    %v2648 = vtanh.pop %v2647
    %v2649 = vmul.f32 %v2644, %v2648
    %2650 = vst [vmem:[#allocation3 + $0x10] sm:$0xff] %v2649
    %v2651 = vld [vmem:[#allocation2 + $0x80] sm:$0xff]
    %v2652 = vld [vmem:[#allocation2 + $0x88] sm:$0xff]
    %v2653 = vld [vmem:[#allocation2 + $0x90] sm:$0xff]
    %v2654 = vld [vmem:[#allocation2 + $0x98] sm:$0xff]
    %v2655 = vpack.c.bf16 %v2456, %v2456
    %v2656 = vld [vmem:[#allocation12] sm:$0xff]
    %v2657 = vld [vmem:[#allocation12 + $0x8] sm:$0xff]
    %v2658 = vld [vmem:[#allocation12 + $0x10] sm:$0xff]
    %v2659 = vld [vmem:[#allocation12 + $0x18] sm:$0xff]
    %v2660 = vld [vmem:[#allocation12 + $0x20] sm:$0xff]
    %v2661 = vld [vmem:[#allocation12 + $0x28] sm:$0xff]
    %v2662 = vld [vmem:[#allocation12 + $0x30] sm:$0xff]
    %v2663 = vld [vmem:[#allocation12 + $0x38] sm:$0xff]
    %v2664 = vld [vmem:[#allocation12 + $0x40] sm:$0xff]
    %v2665 = vld [vmem:[#allocation12 + $0x48] sm:$0xff]
    %v2666 = vld [vmem:[#allocation12 + $0x50] sm:$0xff]
    %v2667 = vld [vmem:[#allocation12 + $0x58] sm:$0xff]
    %v2668 = vld [vmem:[#allocation12 + $0x60] sm:$0xff]
    %v2669 = vld [vmem:[#allocation12 + $0x68] sm:$0xff]
    %v2670 = vld [vmem:[#allocation12 + $0x70] sm:$0xff]
    %v2671 = vld [vmem:[#allocation12 + $0x78] sm:$0xff]
    %v2672 = vld [vmem:[#allocation12 + $0x80] sm:$0xff]
    %v2673 = vld [vmem:[#allocation12 + $0x88] sm:$0xff]
    %v2674 = vld [vmem:[#allocation12 + $0x90] sm:$0xff]
    %v2675 = vld [vmem:[#allocation12 + $0x98] sm:$0xff]
    %v2676 = vld [vmem:[#allocation12 + $0xa0] sm:$0xff]
    %v2677 = vld [vmem:[#allocation12 + $0xa8] sm:$0xff]
    %v2678 = vld [vmem:[#allocation12 + $0xb0] sm:$0xff]
    %v2679 = vld [vmem:[#allocation12 + $0xb8] sm:$0xff]
    %v2680 = vld [vmem:[#allocation12 + $0xc0] sm:$0xff]
    %v2681 = vld [vmem:[#allocation12 + $0xc8] sm:$0xff]
    %v2682 = vld [vmem:[#allocation12 + $0xd0] sm:$0xff]
    %v2683 = vld [vmem:[#allocation12 + $0xd8] sm:$0xff]
    %v2684 = vld [vmem:[#allocation12 + $0xe0] sm:$0xff]
    %v2685 = vld [vmem:[#allocation12 + $0xe8] sm:$0xff]
    %v2686 = vld [vmem:[#allocation12 + $0xf0] sm:$0xff]
    %v2687 = vld [vmem:[#allocation12 + $0xf8] sm:$0xff]
    %v2720 = vunpack.c.l.b16 %v2656
    %v2721 = vunpack.c.h.b16 %v2656
    %v2722 = vunpack.c.l.b16 %v2657
    %v2723 = vunpack.c.h.b16 %v2657
    %v2724 = vunpack.c.l.b16 %v2658
    %v2725 = vunpack.c.h.b16 %v2658
    %v2726 = vunpack.c.l.b16 %v2659
    %v2727 = vunpack.c.h.b16 %v2659
    %v2728 = vunpack.c.l.b16 %v2660
    %v2729 = vunpack.c.h.b16 %v2660
    %v2730 = vunpack.c.l.b16 %v2661
    %v2731 = vunpack.c.h.b16 %v2661
    %v2732 = vunpack.c.l.b16 %v2662
    %v2733 = vunpack.c.h.b16 %v2662
    %v2734 = vunpack.c.l.b16 %v2663
    %v2735 = vunpack.c.h.b16 %v2663
    %v2736 = vunpack.c.l.b16 %v2664
    %v2737 = vunpack.c.h.b16 %v2664
    %v2738 = vunpack.c.l.b16 %v2665
    %v2739 = vunpack.c.h.b16 %v2665
    %v2740 = vunpack.c.l.b16 %v2666
    %v2741 = vunpack.c.h.b16 %v2666
    %v2742 = vunpack.c.l.b16 %v2667
    %v2743 = vunpack.c.h.b16 %v2667
    %v2744 = vunpack.c.l.b16 %v2668
    %v2745 = vunpack.c.h.b16 %v2668
    %v2746 = vunpack.c.l.b16 %v2669
    %v2747 = vunpack.c.h.b16 %v2669
    %v2748 = vunpack.c.l.b16 %v2670
    %v2749 = vunpack.c.h.b16 %v2670
    %v2750 = vunpack.c.l.b16 %v2671
    %v2751 = vunpack.c.h.b16 %v2671
    %v2752 = vunpack.c.l.b16 %v2672
    %v2753 = vunpack.c.h.b16 %v2672
    %v2754 = vunpack.c.l.b16 %v2673
    %v2755 = vunpack.c.h.b16 %v2673
    %v2756 = vunpack.c.l.b16 %v2674
    %v2757 = vunpack.c.h.b16 %v2674
    %v2758 = vunpack.c.l.b16 %v2675
    %v2759 = vunpack.c.h.b16 %v2675
    %v2760 = vunpack.c.l.b16 %v2676
    %v2761 = vunpack.c.h.b16 %v2676
    %v2762 = vunpack.c.l.b16 %v2677
    %v2763 = vunpack.c.h.b16 %v2677
    %v2764 = vunpack.c.l.b16 %v2678
    %v2765 = vunpack.c.h.b16 %v2678
    %v2766 = vunpack.c.l.b16 %v2679
    %v2767 = vunpack.c.h.b16 %v2679
    %v2768 = vunpack.c.l.b16 %v2680
    %v2769 = vunpack.c.h.b16 %v2680
    %v2770 = vunpack.c.l.b16 %v2681
    %v2771 = vunpack.c.h.b16 %v2681
    %v2772 = vunpack.c.l.b16 %v2682
    %v2773 = vunpack.c.h.b16 %v2682
    %v2774 = vunpack.c.l.b16 %v2683
    %v2775 = vunpack.c.h.b16 %v2683
    %v2776 = vunpack.c.l.b16 %v2684
    %v2777 = vunpack.c.h.b16 %v2684
    %v2778 = vunpack.c.l.b16 %v2685
    %v2779 = vunpack.c.h.b16 %v2685
    %v2780 = vunpack.c.l.b16 %v2686
    %v2781 = vunpack.c.h.b16 %v2686
    %v2782 = vunpack.c.l.b16 %v2687
    %v2783 = vunpack.c.h.b16 %v2687
    %v2784 = vpack.c.b16 %v2724, %v2720
    %v2785 = vpack.c.b16 %v2725, %v2721
    %v2786 = vpack.c.b16 %v2726, %v2722
    %v2787 = vpack.c.b16 %v2727, %v2723
    %v2788 = vpack.c.b16 %v2732, %v2728
    %v2789 = vpack.c.b16 %v2733, %v2729
    %v2790 = vpack.c.b16 %v2734, %v2730
    %v2791 = vpack.c.b16 %v2735, %v2731
    %v2792 = vpack.c.b16 %v2740, %v2736
    %v2793 = vpack.c.b16 %v2741, %v2737
    %v2794 = vpack.c.b16 %v2742, %v2738
    %v2795 = vpack.c.b16 %v2743, %v2739
    %v2796 = vpack.c.b16 %v2748, %v2744
    %v2797 = vpack.c.b16 %v2749, %v2745
    %v2798 = vpack.c.b16 %v2750, %v2746
    %v2799 = vpack.c.b16 %v2751, %v2747
    %v2800 = vpack.c.b16 %v2756, %v2752
    %v2801 = vpack.c.b16 %v2757, %v2753
    %v2802 = vpack.c.b16 %v2758, %v2754
    %v2803 = vpack.c.b16 %v2759, %v2755
    %v2804 = vpack.c.b16 %v2764, %v2760
    %v2805 = vpack.c.b16 %v2765, %v2761
    %v2806 = vpack.c.b16 %v2766, %v2762
    %v2807 = vpack.c.b16 %v2767, %v2763
    %v2808 = vpack.c.b16 %v2772, %v2768
    %v2809 = vpack.c.b16 %v2773, %v2769
    %v2810 = vpack.c.b16 %v2774, %v2770
    %v2811 = vpack.c.b16 %v2775, %v2771
    %v2812 = vpack.c.b16 %v2780, %v2776
    %v2813 = vpack.c.b16 %v2781, %v2777
    %v2814 = vpack.c.b16 %v2782, %v2778
    %v2815 = vpack.c.b16 %v2783, %v2779
    %2848 = vmatprep.subr.bf16.mxu0 %v2785
    %2849 = vmatpush1.bf16.msra.mxu0 %v2784
    %2850 = vmatprep.subr.bf16.mxu0 %v2789
    %2851 = vmatpush1.bf16.msra.mxu0 %v2788
    %2852 = vmatprep.subr.bf16.mxu0 %v2793
    %2853 = vmatpush1.bf16.msra.mxu0 %v2792
    %2854 = vmatprep.subr.bf16.mxu0 %v2797
    %2855 = vmatpush1.bf16.msra.mxu0 %v2796
    %2856 = vmatprep.subr.bf16.mxu0 %v2801
    %2857 = vmatpush1.bf16.msra.mxu0 %v2800
    %2858 = vmatprep.subr.bf16.mxu0 %v2805
    %2859 = vmatpush1.bf16.msra.mxu0 %v2804
    %2860 = vmatprep.subr.bf16.mxu0 %v2809
    %2861 = vmatpush1.bf16.msra.mxu0 %v2808
    %2862 = vmatprep.subr.bf16.mxu0 %v2813
    %2863 = vmatpush1.bf16.msra.mxu0 %v2812
    %2864 = vmatprep.subr.bf16.mxu0 0
    %2865 = vmatpush1.bf16.msra.mxu0 0
    %2866 = vmatprep.subr.bf16.mxu0 0
    %2867 = vmatpush1.bf16.msra.mxu0 0
    %2868 = vmatprep.subr.bf16.mxu0 0
    %2869 = vmatpush1.bf16.msra.mxu0 0
    %2870 = vmatprep.subr.bf16.mxu0 0
    %2871 = vmatpush1.bf16.msra.mxu0 0
    %2872 = vmatprep.subr.bf16.mxu0 0
    %2873 = vmatpush1.bf16.msra.mxu0 0
    %2874 = vmatprep.subr.bf16.mxu0 0
    %2875 = vmatpush1.bf16.msra.mxu0 0
    %2876 = vmatprep.subr.bf16.mxu0 0
    %2877 = vmatpush1.bf16.msra.mxu0 0
    %2878 = vmatprep.subr.bf16.mxu0 0
    %2879 = vmatpush1.bf16.msra.mxu0 0
    %2880 = vmatprep.mubr.bf16.mxu0 0
    %2881 = vmatmul.mubr.bf16.gmra.mrb[0].mxu0 %v2655
    %v2882 = vpop.f32.mrb[0].mxu0
    %v2883 = vadd.f32 0.0, %v2882
    %v2884 = vpop.f32.mrb[0].mxu0
    %v2885 = vadd.f32 0.0, %v2884
    %v2886 = vpop.f32.mrb[0].mxu0
    %v2887 = vpop.f32.mrb[0].mxu0
    %2888 = vdwg.mxu0
    %2889 = vmatprep.subr.bf16.mxu0 %v2787
    %2890 = vmatpush1.bf16.msra.mxu0 %v2786
    %2891 = vmatprep.subr.bf16.mxu0 %v2791
    %2892 = vmatpush1.bf16.msra.mxu0 %v2790
    %2893 = vmatprep.subr.bf16.mxu0 %v2795
    %2894 = vmatpush1.bf16.msra.mxu0 %v2794
    %2895 = vmatprep.subr.bf16.mxu0 %v2799
    %2896 = vmatpush1.bf16.msra.mxu0 %v2798
    %2897 = vmatprep.subr.bf16.mxu0 %v2803
    %2898 = vmatpush1.bf16.msra.mxu0 %v2802
    %2899 = vmatprep.subr.bf16.mxu0 %v2807
    %2900 = vmatpush1.bf16.msra.mxu0 %v2806
    %2901 = vmatprep.subr.bf16.mxu0 %v2811
    %2902 = vmatpush1.bf16.msra.mxu0 %v2810
    %2903 = vmatprep.subr.bf16.mxu0 %v2815
    %2904 = vmatpush1.bf16.msra.mxu0 %v2814
    %2905 = vmatprep.subr.bf16.mxu0 0
    %2906 = vmatpush1.bf16.msra.mxu0 0
    %2907 = vmatprep.subr.bf16.mxu0 0
    %2908 = vmatpush1.bf16.msra.mxu0 0
    %2909 = vmatprep.subr.bf16.mxu0 0
    %2910 = vmatpush1.bf16.msra.mxu0 0
    %2911 = vmatprep.subr.bf16.mxu0 0
    %2912 = vmatpush1.bf16.msra.mxu0 0
    %2913 = vmatprep.subr.bf16.mxu0 0
    %2914 = vmatpush1.bf16.msra.mxu0 0
    %2915 = vmatprep.subr.bf16.mxu0 0
    %2916 = vmatpush1.bf16.msra.mxu0 0
    %2917 = vmatprep.subr.bf16.mxu0 0
    %2918 = vmatpush1.bf16.msra.mxu0 0
    %2919 = vmatprep.subr.bf16.mxu0 0
    %2920 = vmatpush1.bf16.msra.mxu0 0
    %2921 = vmatprep.mubr.bf16.mxu0 0
    %2922 = vmatmul.mubr.bf16.gmra.mrb[0].mxu0 %v2655
    %v2923 = vpop.f32.mrb[0].mxu0
    %v2924 = vadd.f32 0.0, %v2923
    %v2925 = vpop.f32.mrb[0].mxu0
    %v2926 = vadd.f32 0.0, %v2925
    %v2927 = vpop.f32.mrb[0].mxu0
    %v2928 = vpop.f32.mrb[0].mxu0
    %2929 = vdwg.mxu0
    %v2930 = vadd.f32 %v2651, %v2883
    %v2931 = vadd.f32 %v2652, %v2885
    %v2932 = vadd.f32 %v2653, %v2924
    %v2933 = vadd.f32 %v2654, %v2926
    %v2934 = vxor.u32 %v2930, 2147483648
    %v2935 = vmul.f32 %v2934, 1.442695
    %v2936 = vpow.pop %v2935
    %v2937 = vadd.f32 %v2936, 1.0
    %v2938 = vrcp.pop %v2937
    %v2939 = vmul.f32 1.0, %v2938
    %v2940 = vxor.u32 %v2931, 2147483648
    %v2941 = vmul.f32 %v2940, 1.442695
    %v2942 = vpow.pop %v2941
    %v2943 = vadd.f32 %v2942, 1.0
    %v2944 = vrcp.pop %v2943
    %v2945 = vmul.f32 1.0, %v2944
    %v2946 = vtanh.pop %v2932
    %v2947 = vxor.u32 %v2933, 2147483648
    %v2948 = vmul.f32 %v2947, 1.442695
    %v2949 = vpow.pop %v2948
    %v2950 = vadd.f32 %v2949, 1.0
    %v2951 = vrcp.pop %v2950
    %v2952 = vmul.f32 1.0, %v2951
    %v2953 = vmul.f32 %v2945, %v2454
    %v2954 = vmul.f32 %v2939, %v2946
    %v2955 = vadd.f32 %v2953, %v2954
    %v2956 = vtanh.pop %v2955
    %v2957 = vmul.f32 %v2952, %v2956
    %v2958 = vpack.c.bf16 %v2649, %v2649
    %v2959 = vld [vmem:[#allocation4] sm:$0xff]
    %v2960 = vld [vmem:[#allocation4 + $0x8] sm:$0xff]
    %v2961 = vld [vmem:[#allocation4 + $0x10] sm:$0xff]
    %v2962 = vld [vmem:[#allocation4 + $0x18] sm:$0xff]
    %v2963 = vld [vmem:[#allocation4 + $0x20] sm:$0xff]
    %v2964 = vld [vmem:[#allocation4 + $0x28] sm:$0xff]
    %v2965 = vld [vmem:[#allocation4 + $0x30] sm:$0xff]
    %v2966 = vld [vmem:[#allocation4 + $0x38] sm:$0xff]
    %v2967 = vld [vmem:[#allocation4 + $0x40] sm:$0xff]
    %v2968 = vld [vmem:[#allocation4 + $0x48] sm:$0xff]
    %v2969 = vld [vmem:[#allocation4 + $0x50] sm:$0xff]
    %v2970 = vld [vmem:[#allocation4 + $0x58] sm:$0xff]
    %v2971 = vld [vmem:[#allocation4 + $0x60] sm:$0xff]
    %v2972 = vld [vmem:[#allocation4 + $0x68] sm:$0xff]
    %v2973 = vld [vmem:[#allocation4 + $0x70] sm:$0xff]
    %v2974 = vld [vmem:[#allocation4 + $0x78] sm:$0xff]
    %v2975 = vld [vmem:[#allocation4 + $0x80] sm:$0xff]
    %v2976 = vld [vmem:[#allocation4 + $0x88] sm:$0xff]
    %v2977 = vld [vmem:[#allocation4 + $0x90] sm:$0xff]
    %v2978 = vld [vmem:[#allocation4 + $0x98] sm:$0xff]
    %v2979 = vld [vmem:[#allocation4 + $0xa0] sm:$0xff]
    %v2980 = vld [vmem:[#allocation4 + $0xa8] sm:$0xff]
    %v2981 = vld [vmem:[#allocation4 + $0xb0] sm:$0xff]
    %v2982 = vld [vmem:[#allocation4 + $0xb8] sm:$0xff]
    %v2983 = vld [vmem:[#allocation4 + $0xc0] sm:$0xff]
    %v2984 = vld [vmem:[#allocation4 + $0xc8] sm:$0xff]
    %v2985 = vld [vmem:[#allocation4 + $0xd0] sm:$0xff]
    %v2986 = vld [vmem:[#allocation4 + $0xd8] sm:$0xff]
    %v2987 = vld [vmem:[#allocation4 + $0xe0] sm:$0xff]
    %v2988 = vld [vmem:[#allocation4 + $0xe8] sm:$0xff]
    %v2989 = vld [vmem:[#allocation4 + $0xf0] sm:$0xff]
    %v2990 = vld [vmem:[#allocation4 + $0xf8] sm:$0xff]
    %v2991 = vld [vmem:[#allocation4 + $0x100] sm:$0xff]
    %v2992 = vld [vmem:[#allocation4 + $0x108] sm:$0xff]
    %v2993 = vld [vmem:[#allocation4 + $0x110] sm:$0xff]
    %v2994 = vld [vmem:[#allocation4 + $0x118] sm:$0xff]
    %v2995 = vld [vmem:[#allocation4 + $0x120] sm:$0xff]
    %v2996 = vld [vmem:[#allocation4 + $0x128] sm:$0xff]
    %v2997 = vld [vmem:[#allocation4 + $0x130] sm:$0xff]
    %v2998 = vld [vmem:[#allocation4 + $0x138] sm:$0xff]
    %v2999 = vld [vmem:[#allocation4 + $0x140] sm:$0xff]
    %v3000 = vld [vmem:[#allocation4 + $0x148] sm:$0xff]
    %v3001 = vld [vmem:[#allocation4 + $0x150] sm:$0xff]
    %v3002 = vld [vmem:[#allocation4 + $0x158] sm:$0xff]
    %v3003 = vld [vmem:[#allocation4 + $0x160] sm:$0xff]
    %v3004 = vld [vmem:[#allocation4 + $0x168] sm:$0xff]
    %v3005 = vld [vmem:[#allocation4 + $0x170] sm:$0xff]
    %v3006 = vld [vmem:[#allocation4 + $0x178] sm:$0xff]
    %v3007 = vld [vmem:[#allocation4 + $0x180] sm:$0xff]
    %v3008 = vld [vmem:[#allocation4 + $0x188] sm:$0xff]
    %v3009 = vld [vmem:[#allocation4 + $0x190] sm:$0xff]
    %v3010 = vld [vmem:[#allocation4 + $0x198] sm:$0xff]
    %v3011 = vld [vmem:[#allocation4 + $0x1a0] sm:$0xff]
    %v3012 = vld [vmem:[#allocation4 + $0x1a8] sm:$0xff]
    %v3013 = vld [vmem:[#allocation4 + $0x1b0] sm:$0xff]
    %v3014 = vld [vmem:[#allocation4 + $0x1b8] sm:$0xff]
    %v3015 = vld [vmem:[#allocation4 + $0x1c0] sm:$0xff]
    %v3016 = vld [vmem:[#allocation4 + $0x1c8] sm:$0xff]
    %v3017 = vld [vmem:[#allocation4 + $0x1d0] sm:$0xff]
    %v3018 = vld [vmem:[#allocation4 + $0x1d8] sm:$0xff]
    %v3019 = vld [vmem:[#allocation4 + $0x1e0] sm:$0xff]
    %v3020 = vld [vmem:[#allocation4 + $0x1e8] sm:$0xff]
    %v3021 = vld [vmem:[#allocation4 + $0x1f0] sm:$0xff]
    %v3022 = vld [vmem:[#allocation4 + $0x1f8] sm:$0xff]
    %v3023 = vld [vmem:[%s6] sm:$0xf]
    %v3025 = vlaneseq
    %v3026 = vshrl.u32 %v3025, 7
    %v3027 = vsub.s32 0, %v3026
    %v3028 = vrot.slane %v3023, %v3027
    %v3029 = vlaneseq
    %v3030 = vshrl.u32 %v3029, 7
    %v3031 = vsub.s32 1, %v3030
    %v3032 = vrot.slane %v3023, %v3031
    %v3033 = vlaneseq
    %v3034 = vshrl.u32 %v3033, 7
    %v3035 = vsub.s32 2, %v3034
    %v3036 = vrot.slane %v3023, %v3035
    %v3037 = vlaneseq
    %v3038 = vshrl.u32 %v3037, 7
    %v3039 = vsub.s32 3, %v3038
    %v3040 = vrot.slane %v3023, %v3039
    %3045 = vmatprep.subr.bf16.mxu0 %v2960
    %3046 = vmatpush1.bf16.msra.mxu0 %v2959
    %3047 = vmatprep.subr.bf16.mxu0 %v2964
    %3048 = vmatpush1.bf16.msra.mxu0 %v2963
    %3049 = vmatprep.subr.bf16.mxu0 %v2968
    %3050 = vmatpush1.bf16.msra.mxu0 %v2967
    %3051 = vmatprep.subr.bf16.mxu0 %v2972
    %3052 = vmatpush1.bf16.msra.mxu0 %v2971
    %3053 = vmatprep.subr.bf16.mxu0 %v2976
    %3054 = vmatpush1.bf16.msra.mxu0 %v2975
    %3055 = vmatprep.subr.bf16.mxu0 %v2980
    %3056 = vmatpush1.bf16.msra.mxu0 %v2979
    %3057 = vmatprep.subr.bf16.mxu0 %v2984
    %3058 = vmatpush1.bf16.msra.mxu0 %v2983
    %3059 = vmatprep.subr.bf16.mxu0 %v2988
    %3060 = vmatpush1.bf16.msra.mxu0 %v2987
    %3061 = vmatprep.subr.bf16.mxu0 %v2992
    %3062 = vmatpush1.bf16.msra.mxu0 %v2991
    %3063 = vmatprep.subr.bf16.mxu0 %v2996
    %3064 = vmatpush1.bf16.msra.mxu0 %v2995
    %3065 = vmatprep.subr.bf16.mxu0 %v3000
    %3066 = vmatpush1.bf16.msra.mxu0 %v2999
    %3067 = vmatprep.subr.bf16.mxu0 %v3004
    %3068 = vmatpush1.bf16.msra.mxu0 %v3003
    %3069 = vmatprep.subr.bf16.mxu0 %v3008
    %3070 = vmatpush1.bf16.msra.mxu0 %v3007
    %3071 = vmatprep.subr.bf16.mxu0 %v3012
    %3072 = vmatpush1.bf16.msra.mxu0 %v3011
    %3073 = vmatprep.subr.bf16.mxu0 %v3016
    %3074 = vmatpush1.bf16.msra.mxu0 %v3015
    %3075 = vmatprep.subr.bf16.mxu0 %v3020
    %3076 = vmatpush1.bf16.msra.mxu0 %v3019
    %3077 = vmatprep.mubr.bf16.mxu0 %v2958
    %3078 = vmatmul.mubr.bf16.gmra.mrb[0].mxu0 %v2655
    %v3079 = vpop.f32.mrb[0].mxu0
    %v3080 = vadd.f32 %v3028, %v3079
    %v3081 = vpop.f32.mrb[0].mxu0
    %v3082 = vadd.f32 %v3032, %v3081
    %v3083 = vpop.f32.mrb[0].mxu0
    %v3084 = vpop.f32.mrb[0].mxu0
    %3085 = vdwg.mxu0
    %3086 = vmatprep.subr.bf16.mxu0 %v2962
    %3087 = vmatpush1.bf16.msra.mxu0 %v2961
    %3088 = vmatprep.subr.bf16.mxu0 %v2966
    %3089 = vmatpush1.bf16.msra.mxu0 %v2965
    %3090 = vmatprep.subr.bf16.mxu0 %v2970
    %3091 = vmatpush1.bf16.msra.mxu0 %v2969
    %3092 = vmatprep.subr.bf16.mxu0 %v2974
    %3093 = vmatpush1.bf16.msra.mxu0 %v2973
    %3094 = vmatprep.subr.bf16.mxu0 %v2978
    %3095 = vmatpush1.bf16.msra.mxu0 %v2977
    %3096 = vmatprep.subr.bf16.mxu0 %v2982
    %3097 = vmatpush1.bf16.msra.mxu0 %v2981
    %3098 = vmatprep.subr.bf16.mxu0 %v2986
    %3099 = vmatpush1.bf16.msra.mxu0 %v2985
    %3100 = vmatprep.subr.bf16.mxu0 %v2990
    %3101 = vmatpush1.bf16.msra.mxu0 %v2989
    %3102 = vmatprep.subr.bf16.mxu0 %v2994
    %3103 = vmatpush1.bf16.msra.mxu0 %v2993
    %3104 = vmatprep.subr.bf16.mxu0 %v2998
    %3105 = vmatpush1.bf16.msra.mxu0 %v2997
    %3106 = vmatprep.subr.bf16.mxu0 %v3002
    %3107 = vmatpush1.bf16.msra.mxu0 %v3001
    %3108 = vmatprep.subr.bf16.mxu0 %v3006
    %3109 = vmatpush1.bf16.msra.mxu0 %v3005
    %3110 = vmatprep.subr.bf16.mxu0 %v3010
    %3111 = vmatpush1.bf16.msra.mxu0 %v3009
    %3112 = vmatprep.subr.bf16.mxu0 %v3014
    %3113 = vmatpush1.bf16.msra.mxu0 %v3013
    %3114 = vmatprep.subr.bf16.mxu0 %v3018
    %3115 = vmatpush1.bf16.msra.mxu0 %v3017
    %3116 = vmatprep.subr.bf16.mxu0 %v3022
    %3117 = vmatpush1.bf16.msra.mxu0 %v3021
    %3118 = vmatprep.mubr.bf16.mxu0 %v2958
    %3119 = vmatmul.mubr.bf16.gmra.mrb[0].mxu0 %v2655
    %v3120 = vpop.f32.mrb[0].mxu0
    %v3121 = vadd.f32 %v3036, %v3120
    %v3122 = vpop.f32.mrb[0].mxu0
    %v3123 = vadd.f32 %v3040, %v3122
    %v3124 = vpop.f32.mrb[0].mxu0
    %v3125 = vpop.f32.mrb[0].mxu0
    %3126 = vdwg.mxu0
    %v3127 = vxor.u32 %v3080, 2147483648
    %v3128 = vmul.f32 %v3127, 1.442695
    %v3129 = vpow.pop %v3128
    %v3130 = vadd.f32 %v3129, 1.0
    %v3131 = vrcp.pop %v3130
    %v3132 = vmul.f32 1.0, %v3131
    %v3133 = vxor.u32 %v3082, 2147483648
    %v3134 = vmul.f32 %v3133, 1.442695
    %v3135 = vpow.pop %v3134
    %v3136 = vadd.f32 %v3135, 1.0
    %v3137 = vrcp.pop %v3136
    %v3138 = vmul.f32 1.0, %v3137
    %v3139 = vtanh.pop %v3121
    %v3140 = vxor.u32 %v3123, 2147483648
    %v3141 = vmul.f32 %v3140, 1.442695
    %v3142 = vpow.pop %v3141
    %v3143 = vadd.f32 %v3142, 1.0
    %v3144 = vrcp.pop %v3143
    %v3145 = vmul.f32 1.0, %v3144
    %v3146 = vmul.f32 %v3138, %v2647
    %v3147 = vmul.f32 %v3132, %v3139
    %v3148 = vadd.f32 %v3146, %v3147
    %v3149 = vtanh.pop %v3148
    %v3150 = vmul.f32 %v3145, %v3149
    %3151 = vst [vmem:[#allocation3 + $0x18] sm:$0xff] %v3150
    %v3152 = vld [vmem:[#allocation2 + $0xa0] sm:$0xff]
    %v3153 = vld [vmem:[#allocation2 + $0xa8] sm:$0xff]
    %v3154 = vld [vmem:[#allocation2 + $0xb0] sm:$0xff]
    %v3155 = vld [vmem:[#allocation2 + $0xb8] sm:$0xff]
    %v3156 = vpack.c.bf16 %v2957, %v2957
    %v3157 = vld [vmem:[#allocation12] sm:$0xff]
    %v3158 = vld [vmem:[#allocation12 + $0x8] sm:$0xff]
    %v3159 = vld [vmem:[#allocation12 + $0x10] sm:$0xff]
    %v3160 = vld [vmem:[#allocation12 + $0x18] sm:$0xff]
    %v3161 = vld [vmem:[#allocation12 + $0x20] sm:$0xff]
    %v3162 = vld [vmem:[#allocation12 + $0x28] sm:$0xff]
    %v3163 = vld [vmem:[#allocation12 + $0x30] sm:$0xff]
    %v3164 = vld [vmem:[#allocation12 + $0x38] sm:$0xff]
    %v3165 = vld [vmem:[#allocation12 + $0x40] sm:$0xff]
    %v3166 = vld [vmem:[#allocation12 + $0x48] sm:$0xff]
    %v3167 = vld [vmem:[#allocation12 + $0x50] sm:$0xff]
    %v3168 = vld [vmem:[#allocation12 + $0x58] sm:$0xff]
    %v3169 = vld [vmem:[#allocation12 + $0x60] sm:$0xff]
    %v3170 = vld [vmem:[#allocation12 + $0x68] sm:$0xff]
    %v3171 = vld [vmem:[#allocation12 + $0x70] sm:$0xff]
    %v3172 = vld [vmem:[#allocation12 + $0x78] sm:$0xff]
    %v3173 = vld [vmem:[#allocation12 + $0x80] sm:$0xff]
    %v3174 = vld [vmem:[#allocation12 + $0x88] sm:$0xff]
    %v3175 = vld [vmem:[#allocation12 + $0x90] sm:$0xff]
    %v3176 = vld [vmem:[#allocation12 + $0x98] sm:$0xff]
    %v3177 = vld [vmem:[#allocation12 + $0xa0] sm:$0xff]
    %v3178 = vld [vmem:[#allocation12 + $0xa8] sm:$0xff]
    %v3179 = vld [vmem:[#allocation12 + $0xb0] sm:$0xff]
    %v3180 = vld [vmem:[#allocation12 + $0xb8] sm:$0xff]
    %v3181 = vld [vmem:[#allocation12 + $0xc0] sm:$0xff]
    %v3182 = vld [vmem:[#allocation12 + $0xc8] sm:$0xff]
    %v3183 = vld [vmem:[#allocation12 + $0xd0] sm:$0xff]
    %v3184 = vld [vmem:[#allocation12 + $0xd8] sm:$0xff]
    %v3185 = vld [vmem:[#allocation12 + $0xe0] sm:$0xff]
    %v3186 = vld [vmem:[#allocation12 + $0xe8] sm:$0xff]
    %v3187 = vld [vmem:[#allocation12 + $0xf0] sm:$0xff]
    %v3188 = vld [vmem:[#allocation12 + $0xf8] sm:$0xff]
    %v3221 = vunpack.c.l.b16 %v3157
    %v3222 = vunpack.c.h.b16 %v3157
    %v3223 = vunpack.c.l.b16 %v3158
    %v3224 = vunpack.c.h.b16 %v3158
    %v3225 = vunpack.c.l.b16 %v3159
    %v3226 = vunpack.c.h.b16 %v3159
    %v3227 = vunpack.c.l.b16 %v3160
    %v3228 = vunpack.c.h.b16 %v3160
    %v3229 = vunpack.c.l.b16 %v3161
    %v3230 = vunpack.c.h.b16 %v3161
    %v3231 = vunpack.c.l.b16 %v3162
    %v3232 = vunpack.c.h.b16 %v3162
    %v3233 = vunpack.c.l.b16 %v3163
    %v3234 = vunpack.c.h.b16 %v3163
    %v3235 = vunpack.c.l.b16 %v3164
    %v3236 = vunpack.c.h.b16 %v3164
    %v3237 = vunpack.c.l.b16 %v3165
    %v3238 = vunpack.c.h.b16 %v3165
    %v3239 = vunpack.c.l.b16 %v3166
    %v3240 = vunpack.c.h.b16 %v3166
    %v3241 = vunpack.c.l.b16 %v3167
    %v3242 = vunpack.c.h.b16 %v3167
    %v3243 = vunpack.c.l.b16 %v3168
    %v3244 = vunpack.c.h.b16 %v3168
    %v3245 = vunpack.c.l.b16 %v3169
    %v3246 = vunpack.c.h.b16 %v3169
    %v3247 = vunpack.c.l.b16 %v3170
    %v3248 = vunpack.c.h.b16 %v3170
    %v3249 = vunpack.c.l.b16 %v3171
    %v3250 = vunpack.c.h.b16 %v3171
    %v3251 = vunpack.c.l.b16 %v3172
    %v3252 = vunpack.c.h.b16 %v3172
    %v3253 = vunpack.c.l.b16 %v3173
    %v3254 = vunpack.c.h.b16 %v3173
    %v3255 = vunpack.c.l.b16 %v3174
    %v3256 = vunpack.c.h.b16 %v3174
    %v3257 = vunpack.c.l.b16 %v3175
    %v3258 = vunpack.c.h.b16 %v3175
    %v3259 = vunpack.c.l.b16 %v3176
    %v3260 = vunpack.c.h.b16 %v3176
    %v3261 = vunpack.c.l.b16 %v3177
    %v3262 = vunpack.c.h.b16 %v3177
    %v3263 = vunpack.c.l.b16 %v3178
    %v3264 = vunpack.c.h.b16 %v3178
    %v3265 = vunpack.c.l.b16 %v3179
    %v3266 = vunpack.c.h.b16 %v3179
    %v3267 = vunpack.c.l.b16 %v3180
    %v3268 = vunpack.c.h.b16 %v3180
    %v3269 = vunpack.c.l.b16 %v3181
    %v3270 = vunpack.c.h.b16 %v3181
    %v3271 = vunpack.c.l.b16 %v3182
    %v3272 = vunpack.c.h.b16 %v3182
    %v3273 = vunpack.c.l.b16 %v3183
    %v3274 = vunpack.c.h.b16 %v3183
    %v3275 = vunpack.c.l.b16 %v3184
    %v3276 = vunpack.c.h.b16 %v3184
    %v3277 = vunpack.c.l.b16 %v3185
    %v3278 = vunpack.c.h.b16 %v3185
    %v3279 = vunpack.c.l.b16 %v3186
    %v3280 = vunpack.c.h.b16 %v3186
    %v3281 = vunpack.c.l.b16 %v3187
    %v3282 = vunpack.c.h.b16 %v3187
    %v3283 = vunpack.c.l.b16 %v3188
    %v3284 = vunpack.c.h.b16 %v3188
    %v3285 = vpack.c.b16 %v3225, %v3221
    %v3286 = vpack.c.b16 %v3226, %v3222
    %v3287 = vpack.c.b16 %v3227, %v3223
    %v3288 = vpack.c.b16 %v3228, %v3224
    %v3289 = vpack.c.b16 %v3233, %v3229
    %v3290 = vpack.c.b16 %v3234, %v3230
    %v3291 = vpack.c.b16 %v3235, %v3231
    %v3292 = vpack.c.b16 %v3236, %v3232
    %v3293 = vpack.c.b16 %v3241, %v3237
    %v3294 = vpack.c.b16 %v3242, %v3238
    %v3295 = vpack.c.b16 %v3243, %v3239
    %v3296 = vpack.c.b16 %v3244, %v3240
    %v3297 = vpack.c.b16 %v3249, %v3245
    %v3298 = vpack.c.b16 %v3250, %v3246
    %v3299 = vpack.c.b16 %v3251, %v3247
    %v3300 = vpack.c.b16 %v3252, %v3248
    %v3301 = vpack.c.b16 %v3257, %v3253
    %v3302 = vpack.c.b16 %v3258, %v3254
    %v3303 = vpack.c.b16 %v3259, %v3255
    %v3304 = vpack.c.b16 %v3260, %v3256
    %v3305 = vpack.c.b16 %v3265, %v3261
    %v3306 = vpack.c.b16 %v3266, %v3262
    %v3307 = vpack.c.b16 %v3267, %v3263
    %v3308 = vpack.c.b16 %v3268, %v3264
    %v3309 = vpack.c.b16 %v3273, %v3269
    %v3310 = vpack.c.b16 %v3274, %v3270
    %v3311 = vpack.c.b16 %v3275, %v3271
    %v3312 = vpack.c.b16 %v3276, %v3272
    %v3313 = vpack.c.b16 %v3281, %v3277
    %v3314 = vpack.c.b16 %v3282, %v3278
    %v3315 = vpack.c.b16 %v3283, %v3279
    %v3316 = vpack.c.b16 %v3284, %v3280
    %3349 = vmatprep.subr.bf16.mxu0 %v3286
    %3350 = vmatpush1.bf16.msra.mxu0 %v3285
    %3351 = vmatprep.subr.bf16.mxu0 %v3290
    %3352 = vmatpush1.bf16.msra.mxu0 %v3289
    %3353 = vmatprep.subr.bf16.mxu0 %v3294
    %3354 = vmatpush1.bf16.msra.mxu0 %v3293
    %3355 = vmatprep.subr.bf16.mxu0 %v3298
    %3356 = vmatpush1.bf16.msra.mxu0 %v3297
    %3357 = vmatprep.subr.bf16.mxu0 %v3302
    %3358 = vmatpush1.bf16.msra.mxu0 %v3301
    %3359 = vmatprep.subr.bf16.mxu0 %v3306
    %3360 = vmatpush1.bf16.msra.mxu0 %v3305
    %3361 = vmatprep.subr.bf16.mxu0 %v3310
    %3362 = vmatpush1.bf16.msra.mxu0 %v3309
    %3363 = vmatprep.subr.bf16.mxu0 %v3314
    %3364 = vmatpush1.bf16.msra.mxu0 %v3313
    %3365 = vmatprep.subr.bf16.mxu0 0
    %3366 = vmatpush1.bf16.msra.mxu0 0
    %3367 = vmatprep.subr.bf16.mxu0 0
    %3368 = vmatpush1.bf16.msra.mxu0 0
    %3369 = vmatprep.subr.bf16.mxu0 0
    %3370 = vmatpush1.bf16.msra.mxu0 0
    %3371 = vmatprep.subr.bf16.mxu0 0
    %3372 = vmatpush1.bf16.msra.mxu0 0
    %3373 = vmatprep.subr.bf16.mxu0 0
    %3374 = vmatpush1.bf16.msra.mxu0 0
    %3375 = vmatprep.subr.bf16.mxu0 0
    %3376 = vmatpush1.bf16.msra.mxu0 0
    %3377 = vmatprep.subr.bf16.mxu0 0
    %3378 = vmatpush1.bf16.msra.mxu0 0
    %3379 = vmatprep.subr.bf16.mxu0 0
    %3380 = vmatpush1.bf16.msra.mxu0 0
    %3381 = vmatprep.mubr.bf16.mxu0 0
    %3382 = vmatmul.mubr.bf16.gmra.mrb[0].mxu0 %v3156
    %v3383 = vpop.f32.mrb[0].mxu0
    %v3384 = vadd.f32 0.0, %v3383
    %v3385 = vpop.f32.mrb[0].mxu0
    %v3386 = vadd.f32 0.0, %v3385
    %v3387 = vpop.f32.mrb[0].mxu0
    %v3388 = vpop.f32.mrb[0].mxu0
    %3389 = vdwg.mxu0
    %3390 = vmatprep.subr.bf16.mxu0 %v3288
    %3391 = vmatpush1.bf16.msra.mxu0 %v3287
    %3392 = vmatprep.subr.bf16.mxu0 %v3292
    %3393 = vmatpush1.bf16.msra.mxu0 %v3291
    %3394 = vmatprep.subr.bf16.mxu0 %v3296
    %3395 = vmatpush1.bf16.msra.mxu0 %v3295
    %3396 = vmatprep.subr.bf16.mxu0 %v3300
    %3397 = vmatpush1.bf16.msra.mxu0 %v3299
    %3398 = vmatprep.subr.bf16.mxu0 %v3304
    %3399 = vmatpush1.bf16.msra.mxu0 %v3303
    %3400 = vmatprep.subr.bf16.mxu0 %v3308
    %3401 = vmatpush1.bf16.msra.mxu0 %v3307
    %3402 = vmatprep.subr.bf16.mxu0 %v3312
    %3403 = vmatpush1.bf16.msra.mxu0 %v3311
    %3404 = vmatprep.subr.bf16.mxu0 %v3316
    %3405 = vmatpush1.bf16.msra.mxu0 %v3315
    %3406 = vmatprep.subr.bf16.mxu0 0
    %3407 = vmatpush1.bf16.msra.mxu0 0
    %3408 = vmatprep.subr.bf16.mxu0 0
    %3409 = vmatpush1.bf16.msra.mxu0 0
    %3410 = vmatprep.subr.bf16.mxu0 0
    %3411 = vmatpush1.bf16.msra.mxu0 0
    %3412 = vmatprep.subr.bf16.mxu0 0
    %3413 = vmatpush1.bf16.msra.mxu0 0
    %3414 = vmatprep.subr.bf16.mxu0 0
    %3415 = vmatpush1.bf16.msra.mxu0 0
    %3416 = vmatprep.subr.bf16.mxu0 0
    %3417 = vmatpush1.bf16.msra.mxu0 0
    %3418 = vmatprep.subr.bf16.mxu0 0
    %3419 = vmatpush1.bf16.msra.mxu0 0
    %3420 = vmatprep.subr.bf16.mxu0 0
    %3421 = vmatpush1.bf16.msra.mxu0 0
    %3422 = vmatprep.mubr.bf16.mxu0 0
    %3423 = vmatmul.mubr.bf16.gmra.mrb[0].mxu0 %v3156
    %v3424 = vpop.f32.mrb[0].mxu0
    %v3425 = vadd.f32 0.0, %v3424
    %v3426 = vpop.f32.mrb[0].mxu0
    %v3427 = vadd.f32 0.0, %v3426
    %v3428 = vpop.f32.mrb[0].mxu0
    %v3429 = vpop.f32.mrb[0].mxu0
    %3430 = vdwg.mxu0
    %v3431 = vadd.f32 %v3152, %v3384
    %v3432 = vadd.f32 %v3153, %v3386
    %v3433 = vadd.f32 %v3154, %v3425
    %v3434 = vadd.f32 %v3155, %v3427
    %v3435 = vxor.u32 %v3431, 2147483648
    %v3436 = vmul.f32 %v3435, 1.442695
    %v3437 = vpow.pop %v3436
    %v3438 = vadd.f32 %v3437, 1.0
    %v3439 = vrcp.pop %v3438
    %v3440 = vmul.f32 1.0, %v3439
    %v3441 = vxor.u32 %v3432, 2147483648
    %v3442 = vmul.f32 %v3441, 1.442695
    %v3443 = vpow.pop %v3442
    %v3444 = vadd.f32 %v3443, 1.0
    %v3445 = vrcp.pop %v3444
    %v3446 = vmul.f32 1.0, %v3445
    %v3447 = vtanh.pop %v3433
    %v3448 = vxor.u32 %v3434, 2147483648
    %v3449 = vmul.f32 %v3448, 1.442695
    %v3450 = vpow.pop %v3449
    %v3451 = vadd.f32 %v3450, 1.0
    %v3452 = vrcp.pop %v3451
    %v3453 = vmul.f32 1.0, %v3452
    %v3454 = vmul.f32 %v3446, %v2955
    %v3455 = vmul.f32 %v3440, %v3447
    %v3456 = vadd.f32 %v3454, %v3455
    %v3457 = vtanh.pop %v3456
    %v3458 = vmul.f32 %v3453, %v3457
    %v3459 = vpack.c.bf16 %v3150, %v3150
    %v3460 = vld [vmem:[#allocation4] sm:$0xff]
    %v3461 = vld [vmem:[#allocation4 + $0x8] sm:$0xff]
    %v3462 = vld [vmem:[#allocation4 + $0x10] sm:$0xff]
    %v3463 = vld [vmem:[#allocation4 + $0x18] sm:$0xff]
    %v3464 = vld [vmem:[#allocation4 + $0x20] sm:$0xff]
    %v3465 = vld [vmem:[#allocation4 + $0x28] sm:$0xff]
    %v3466 = vld [vmem:[#allocation4 + $0x30] sm:$0xff]
    %v3467 = vld [vmem:[#allocation4 + $0x38] sm:$0xff]
    %v3468 = vld [vmem:[#allocation4 + $0x40] sm:$0xff]
    %v3469 = vld [vmem:[#allocation4 + $0x48] sm:$0xff]
    %v3470 = vld [vmem:[#allocation4 + $0x50] sm:$0xff]
    %v3471 = vld [vmem:[#allocation4 + $0x58] sm:$0xff]
    %v3472 = vld [vmem:[#allocation4 + $0x60] sm:$0xff]
    %v3473 = vld [vmem:[#allocation4 + $0x68] sm:$0xff]
    %v3474 = vld [vmem:[#allocation4 + $0x70] sm:$0xff]
    %v3475 = vld [vmem:[#allocation4 + $0x78] sm:$0xff]
    %v3476 = vld [vmem:[#allocation4 + $0x80] sm:$0xff]
    %v3477 = vld [vmem:[#allocation4 + $0x88] sm:$0xff]
    %v3478 = vld [vmem:[#allocation4 + $0x90] sm:$0xff]
    %v3479 = vld [vmem:[#allocation4 + $0x98] sm:$0xff]
    %v3480 = vld [vmem:[#allocation4 + $0xa0] sm:$0xff]
    %v3481 = vld [vmem:[#allocation4 + $0xa8] sm:$0xff]
    %v3482 = vld [vmem:[#allocation4 + $0xb0] sm:$0xff]
    %v3483 = vld [vmem:[#allocation4 + $0xb8] sm:$0xff]
    %v3484 = vld [vmem:[#allocation4 + $0xc0] sm:$0xff]
    %v3485 = vld [vmem:[#allocation4 + $0xc8] sm:$0xff]
    %v3486 = vld [vmem:[#allocation4 + $0xd0] sm:$0xff]
    %v3487 = vld [vmem:[#allocation4 + $0xd8] sm:$0xff]
    %v3488 = vld [vmem:[#allocation4 + $0xe0] sm:$0xff]
    %v3489 = vld [vmem:[#allocation4 + $0xe8] sm:$0xff]
    %v3490 = vld [vmem:[#allocation4 + $0xf0] sm:$0xff]
    %v3491 = vld [vmem:[#allocation4 + $0xf8] sm:$0xff]
    %v3492 = vld [vmem:[#allocation4 + $0x100] sm:$0xff]
    %v3493 = vld [vmem:[#allocation4 + $0x108] sm:$0xff]
    %v3494 = vld [vmem:[#allocation4 + $0x110] sm:$0xff]
    %v3495 = vld [vmem:[#allocation4 + $0x118] sm:$0xff]
    %v3496 = vld [vmem:[#allocation4 + $0x120] sm:$0xff]
    %v3497 = vld [vmem:[#allocation4 + $0x128] sm:$0xff]
    %v3498 = vld [vmem:[#allocation4 + $0x130] sm:$0xff]
    %v3499 = vld [vmem:[#allocation4 + $0x138] sm:$0xff]
    %v3500 = vld [vmem:[#allocation4 + $0x140] sm:$0xff]
    %v3501 = vld [vmem:[#allocation4 + $0x148] sm:$0xff]
    %v3502 = vld [vmem:[#allocation4 + $0x150] sm:$0xff]
    %v3503 = vld [vmem:[#allocation4 + $0x158] sm:$0xff]
    %v3504 = vld [vmem:[#allocation4 + $0x160] sm:$0xff]
    %v3505 = vld [vmem:[#allocation4 + $0x168] sm:$0xff]
    %v3506 = vld [vmem:[#allocation4 + $0x170] sm:$0xff]
    %v3507 = vld [vmem:[#allocation4 + $0x178] sm:$0xff]
    %v3508 = vld [vmem:[#allocation4 + $0x180] sm:$0xff]
    %v3509 = vld [vmem:[#allocation4 + $0x188] sm:$0xff]
    %v3510 = vld [vmem:[#allocation4 + $0x190] sm:$0xff]
    %v3511 = vld [vmem:[#allocation4 + $0x198] sm:$0xff]
    %v3512 = vld [vmem:[#allocation4 + $0x1a0] sm:$0xff]
    %v3513 = vld [vmem:[#allocation4 + $0x1a8] sm:$0xff]
    %v3514 = vld [vmem:[#allocation4 + $0x1b0] sm:$0xff]
    %v3515 = vld [vmem:[#allocation4 + $0x1b8] sm:$0xff]
    %v3516 = vld [vmem:[#allocation4 + $0x1c0] sm:$0xff]
    %v3517 = vld [vmem:[#allocation4 + $0x1c8] sm:$0xff]
    %v3518 = vld [vmem:[#allocation4 + $0x1d0] sm:$0xff]
    %v3519 = vld [vmem:[#allocation4 + $0x1d8] sm:$0xff]
    %v3520 = vld [vmem:[#allocation4 + $0x1e0] sm:$0xff]
    %v3521 = vld [vmem:[#allocation4 + $0x1e8] sm:$0xff]
    %v3522 = vld [vmem:[#allocation4 + $0x1f0] sm:$0xff]
    %v3523 = vld [vmem:[#allocation4 + $0x1f8] sm:$0xff]
    %v3524 = vld [vmem:[%s6] sm:$0xf]
    %v3526 = vlaneseq
    %v3527 = vshrl.u32 %v3526, 7
    %v3528 = vsub.s32 0, %v3527
    %v3529 = vrot.slane %v3524, %v3528
    %v3530 = vlaneseq
    %v3531 = vshrl.u32 %v3530, 7
    %v3532 = vsub.s32 1, %v3531
    %v3533 = vrot.slane %v3524, %v3532
    %v3534 = vlaneseq
    %v3535 = vshrl.u32 %v3534, 7
    %v3536 = vsub.s32 2, %v3535
    %v3537 = vrot.slane %v3524, %v3536
    %v3538 = vlaneseq
    %v3539 = vshrl.u32 %v3538, 7
    %v3540 = vsub.s32 3, %v3539
    %v3541 = vrot.slane %v3524, %v3540
    %3546 = vmatprep.subr.bf16.mxu0 %v3461
    %3547 = vmatpush1.bf16.msra.mxu0 %v3460
    %3548 = vmatprep.subr.bf16.mxu0 %v3465
    %3549 = vmatpush1.bf16.msra.mxu0 %v3464
    %3550 = vmatprep.subr.bf16.mxu0 %v3469
    %3551 = vmatpush1.bf16.msra.mxu0 %v3468
    %3552 = vmatprep.subr.bf16.mxu0 %v3473
    %3553 = vmatpush1.bf16.msra.mxu0 %v3472
    %3554 = vmatprep.subr.bf16.mxu0 %v3477
    %3555 = vmatpush1.bf16.msra.mxu0 %v3476
    %3556 = vmatprep.subr.bf16.mxu0 %v3481
    %3557 = vmatpush1.bf16.msra.mxu0 %v3480
    %3558 = vmatprep.subr.bf16.mxu0 %v3485
    %3559 = vmatpush1.bf16.msra.mxu0 %v3484
    %3560 = vmatprep.subr.bf16.mxu0 %v3489
    %3561 = vmatpush1.bf16.msra.mxu0 %v3488
    %3562 = vmatprep.subr.bf16.mxu0 %v3493
    %3563 = vmatpush1.bf16.msra.mxu0 %v3492
    %3564 = vmatprep.subr.bf16.mxu0 %v3497
    %3565 = vmatpush1.bf16.msra.mxu0 %v3496
    %3566 = vmatprep.subr.bf16.mxu0 %v3501
    %3567 = vmatpush1.bf16.msra.mxu0 %v3500
    %3568 = vmatprep.subr.bf16.mxu0 %v3505
    %3569 = vmatpush1.bf16.msra.mxu0 %v3504
    %3570 = vmatprep.subr.bf16.mxu0 %v3509
    %3571 = vmatpush1.bf16.msra.mxu0 %v3508
    %3572 = vmatprep.subr.bf16.mxu0 %v3513
    %3573 = vmatpush1.bf16.msra.mxu0 %v3512
    %3574 = vmatprep.subr.bf16.mxu0 %v3517
    %3575 = vmatpush1.bf16.msra.mxu0 %v3516
    %3576 = vmatprep.subr.bf16.mxu0 %v3521
    %3577 = vmatpush1.bf16.msra.mxu0 %v3520
    %3578 = vmatprep.mubr.bf16.mxu0 %v3459
    %3579 = vmatmul.mubr.bf16.gmra.mrb[0].mxu0 %v3156
    %v3580 = vpop.f32.mrb[0].mxu0
    %v3581 = vadd.f32 %v3529, %v3580
    %v3582 = vpop.f32.mrb[0].mxu0
    %v3583 = vadd.f32 %v3533, %v3582
    %v3584 = vpop.f32.mrb[0].mxu0
    %v3585 = vpop.f32.mrb[0].mxu0
    %3586 = vdwg.mxu0
    %3587 = vmatprep.subr.bf16.mxu0 %v3463
    %3588 = vmatpush1.bf16.msra.mxu0 %v3462
    %3589 = vmatprep.subr.bf16.mxu0 %v3467
    %3590 = vmatpush1.bf16.msra.mxu0 %v3466
    %3591 = vmatprep.subr.bf16.mxu0 %v3471
    %3592 = vmatpush1.bf16.msra.mxu0 %v3470
    %3593 = vmatprep.subr.bf16.mxu0 %v3475
    %3594 = vmatpush1.bf16.msra.mxu0 %v3474
    %3595 = vmatprep.subr.bf16.mxu0 %v3479
    %3596 = vmatpush1.bf16.msra.mxu0 %v3478
    %3597 = vmatprep.subr.bf16.mxu0 %v3483
    %3598 = vmatpush1.bf16.msra.mxu0 %v3482
    %3599 = vmatprep.subr.bf16.mxu0 %v3487
    %3600 = vmatpush1.bf16.msra.mxu0 %v3486
    %3601 = vmatprep.subr.bf16.mxu0 %v3491
    %3602 = vmatpush1.bf16.msra.mxu0 %v3490
    %3603 = vmatprep.subr.bf16.mxu0 %v3495
    %3604 = vmatpush1.bf16.msra.mxu0 %v3494
    %3605 = vmatprep.subr.bf16.mxu0 %v3499
    %3606 = vmatpush1.bf16.msra.mxu0 %v3498
    %3607 = vmatprep.subr.bf16.mxu0 %v3503
    %3608 = vmatpush1.bf16.msra.mxu0 %v3502
    %3609 = vmatprep.subr.bf16.mxu0 %v3507
    %3610 = vmatpush1.bf16.msra.mxu0 %v3506
    %3611 = vmatprep.subr.bf16.mxu0 %v3511
    %3612 = vmatpush1.bf16.msra.mxu0 %v3510
    %3613 = vmatprep.subr.bf16.mxu0 %v3515
    %3614 = vmatpush1.bf16.msra.mxu0 %v3514
    %3615 = vmatprep.subr.bf16.mxu0 %v3519
    %3616 = vmatpush1.bf16.msra.mxu0 %v3518
    %3617 = vmatprep.subr.bf16.mxu0 %v3523
    %3618 = vmatpush1.bf16.msra.mxu0 %v3522
    %3619 = vmatprep.mubr.bf16.mxu0 %v3459
    %3620 = vmatmul.mubr.bf16.gmra.mrb[0].mxu0 %v3156
    %v3621 = vpop.f32.mrb[0].mxu0
    %v3622 = vadd.f32 %v3537, %v3621
    %v3623 = vpop.f32.mrb[0].mxu0
    %v3624 = vadd.f32 %v3541, %v3623
    %v3625 = vpop.f32.mrb[0].mxu0
    %v3626 = vpop.f32.mrb[0].mxu0
    %3627 = vdwg.mxu0
    %v3628 = vxor.u32 %v3581, 2147483648
    %v3629 = vmul.f32 %v3628, 1.442695
    %v3630 = vpow.pop %v3629
    %v3631 = vadd.f32 %v3630, 1.0
    %v3632 = vrcp.pop %v3631
    %v3633 = vmul.f32 1.0, %v3632
    %v3634 = vxor.u32 %v3583, 2147483648
    %v3635 = vmul.f32 %v3634, 1.442695
    %v3636 = vpow.pop %v3635
    %v3637 = vadd.f32 %v3636, 1.0
    %v3638 = vrcp.pop %v3637
    %v3639 = vmul.f32 1.0, %v3638
    %v3640 = vtanh.pop %v3622
    %v3641 = vxor.u32 %v3624, 2147483648
    %v3642 = vmul.f32 %v3641, 1.442695
    %v3643 = vpow.pop %v3642
    %v3644 = vadd.f32 %v3643, 1.0
    %v3645 = vrcp.pop %v3644
    %v3646 = vmul.f32 1.0, %v3645
    %v3647 = vmul.f32 %v3639, %v3148
    %v3648 = vmul.f32 %v3633, %v3640
    %v3649 = vadd.f32 %v3647, %v3648
    %v3650 = vtanh.pop %v3649
    %v3651 = vmul.f32 %v3646, %v3650
    %3652 = vst [vmem:[#allocation3 + $0x20] sm:$0xff] %v3651
    %v3653 = vld [vmem:[#allocation2 + $0xc0] sm:$0xff]
    %v3654 = vld [vmem:[#allocation2 + $0xc8] sm:$0xff]
    %v3655 = vld [vmem:[#allocation2 + $0xd0] sm:$0xff]
    %v3656 = vld [vmem:[#allocation2 + $0xd8] sm:$0xff]
    %v3657 = vpack.c.bf16 %v3458, %v3458
    %v3658 = vld [vmem:[#allocation12] sm:$0xff]
    %v3659 = vld [vmem:[#allocation12 + $0x8] sm:$0xff]
    %v3660 = vld [vmem:[#allocation12 + $0x10] sm:$0xff]
    %v3661 = vld [vmem:[#allocation12 + $0x18] sm:$0xff]
    %v3662 = vld [vmem:[#allocation12 + $0x20] sm:$0xff]
    %v3663 = vld [vmem:[#allocation12 + $0x28] sm:$0xff]
    %v3664 = vld [vmem:[#allocation12 + $0x30] sm:$0xff]
    %v3665 = vld [vmem:[#allocation12 + $0x38] sm:$0xff]
    %v3666 = vld [vmem:[#allocation12 + $0x40] sm:$0xff]
    %v3667 = vld [vmem:[#allocation12 + $0x48] sm:$0xff]
    %v3668 = vld [vmem:[#allocation12 + $0x50] sm:$0xff]
    %v3669 = vld [vmem:[#allocation12 + $0x58] sm:$0xff]
    %v3670 = vld [vmem:[#allocation12 + $0x60] sm:$0xff]
    %v3671 = vld [vmem:[#allocation12 + $0x68] sm:$0xff]
    %v3672 = vld [vmem:[#allocation12 + $0x70] sm:$0xff]
    %v3673 = vld [vmem:[#allocation12 + $0x78] sm:$0xff]
    %v3674 = vld [vmem:[#allocation12 + $0x80] sm:$0xff]
    %v3675 = vld [vmem:[#allocation12 + $0x88] sm:$0xff]
    %v3676 = vld [vmem:[#allocation12 + $0x90] sm:$0xff]
    %v3677 = vld [vmem:[#allocation12 + $0x98] sm:$0xff]
    %v3678 = vld [vmem:[#allocation12 + $0xa0] sm:$0xff]
    %v3679 = vld [vmem:[#allocation12 + $0xa8] sm:$0xff]
    %v3680 = vld [vmem:[#allocation12 + $0xb0] sm:$0xff]
    %v3681 = vld [vmem:[#allocation12 + $0xb8] sm:$0xff]
    %v3682 = vld [vmem:[#allocation12 + $0xc0] sm:$0xff]
    %v3683 = vld [vmem:[#allocation12 + $0xc8] sm:$0xff]
    %v3684 = vld [vmem:[#allocation12 + $0xd0] sm:$0xff]
    %v3685 = vld [vmem:[#allocation12 + $0xd8] sm:$0xff]
    %v3686 = vld [vmem:[#allocation12 + $0xe0] sm:$0xff]
    %v3687 = vld [vmem:[#allocation12 + $0xe8] sm:$0xff]
    %v3688 = vld [vmem:[#allocation12 + $0xf0] sm:$0xff]
    %v3689 = vld [vmem:[#allocation12 + $0xf8] sm:$0xff]
    %v3722 = vunpack.c.l.b16 %v3658
    %v3723 = vunpack.c.h.b16 %v3658
    %v3724 = vunpack.c.l.b16 %v3659
    %v3725 = vunpack.c.h.b16 %v3659
    %v3726 = vunpack.c.l.b16 %v3660
    %v3727 = vunpack.c.h.b16 %v3660
    %v3728 = vunpack.c.l.b16 %v3661
    %v3729 = vunpack.c.h.b16 %v3661
    %v3730 = vunpack.c.l.b16 %v3662
    %v3731 = vunpack.c.h.b16 %v3662
    %v3732 = vunpack.c.l.b16 %v3663
    %v3733 = vunpack.c.h.b16 %v3663
    %v3734 = vunpack.c.l.b16 %v3664
    %v3735 = vunpack.c.h.b16 %v3664
    %v3736 = vunpack.c.l.b16 %v3665
    %v3737 = vunpack.c.h.b16 %v3665
    %v3738 = vunpack.c.l.b16 %v3666
    %v3739 = vunpack.c.h.b16 %v3666
    %v3740 = vunpack.c.l.b16 %v3667
    %v3741 = vunpack.c.h.b16 %v3667
    %v3742 = vunpack.c.l.b16 %v3668
    %v3743 = vunpack.c.h.b16 %v3668
    %v3744 = vunpack.c.l.b16 %v3669
    %v3745 = vunpack.c.h.b16 %v3669
    %v3746 = vunpack.c.l.b16 %v3670
    %v3747 = vunpack.c.h.b16 %v3670
    %v3748 = vunpack.c.l.b16 %v3671
    %v3749 = vunpack.c.h.b16 %v3671
    %v3750 = vunpack.c.l.b16 %v3672
    %v3751 = vunpack.c.h.b16 %v3672
    %v3752 = vunpack.c.l.b16 %v3673
    %v3753 = vunpack.c.h.b16 %v3673
    %v3754 = vunpack.c.l.b16 %v3674
    %v3755 = vunpack.c.h.b16 %v3674
    %v3756 = vunpack.c.l.b16 %v3675
    %v3757 = vunpack.c.h.b16 %v3675
    %v3758 = vunpack.c.l.b16 %v3676
    %v3759 = vunpack.c.h.b16 %v3676
    %v3760 = vunpack.c.l.b16 %v3677
    %v3761 = vunpack.c.h.b16 %v3677
    %v3762 = vunpack.c.l.b16 %v3678
    %v3763 = vunpack.c.h.b16 %v3678
    %v3764 = vunpack.c.l.b16 %v3679
    %v3765 = vunpack.c.h.b16 %v3679
    %v3766 = vunpack.c.l.b16 %v3680
    %v3767 = vunpack.c.h.b16 %v3680
    %v3768 = vunpack.c.l.b16 %v3681
    %v3769 = vunpack.c.h.b16 %v3681
    %v3770 = vunpack.c.l.b16 %v3682
    %v3771 = vunpack.c.h.b16 %v3682
    %v3772 = vunpack.c.l.b16 %v3683
    %v3773 = vunpack.c.h.b16 %v3683
    %v3774 = vunpack.c.l.b16 %v3684
    %v3775 = vunpack.c.h.b16 %v3684
    %v3776 = vunpack.c.l.b16 %v3685
    %v3777 = vunpack.c.h.b16 %v3685
    %v3778 = vunpack.c.l.b16 %v3686
    %v3779 = vunpack.c.h.b16 %v3686
    %v3780 = vunpack.c.l.b16 %v3687
    %v3781 = vunpack.c.h.b16 %v3687
    %v3782 = vunpack.c.l.b16 %v3688
    %v3783 = vunpack.c.h.b16 %v3688
    %v3784 = vunpack.c.l.b16 %v3689
    %v3785 = vunpack.c.h.b16 %v3689
    %v3786 = vpack.c.b16 %v3726, %v3722
    %v3787 = vpack.c.b16 %v3727, %v3723
    %v3788 = vpack.c.b16 %v3728, %v3724
    %v3789 = vpack.c.b16 %v3729, %v3725
    %v3790 = vpack.c.b16 %v3734, %v3730
    %v3791 = vpack.c.b16 %v3735, %v3731
    %v3792 = vpack.c.b16 %v3736, %v3732
    %v3793 = vpack.c.b16 %v3737, %v3733
    %v3794 = vpack.c.b16 %v3742, %v3738
    %v3795 = vpack.c.b16 %v3743, %v3739
    %v3796 = vpack.c.b16 %v3744, %v3740
    %v3797 = vpack.c.b16 %v3745, %v3741
    %v3798 = vpack.c.b16 %v3750, %v3746
    %v3799 = vpack.c.b16 %v3751, %v3747
    %v3800 = vpack.c.b16 %v3752, %v3748
    %v3801 = vpack.c.b16 %v3753, %v3749
    %v3802 = vpack.c.b16 %v3758, %v3754
    %v3803 = vpack.c.b16 %v3759, %v3755
    %v3804 = vpack.c.b16 %v3760, %v3756
    %v3805 = vpack.c.b16 %v3761, %v3757
    %v3806 = vpack.c.b16 %v3766, %v3762
    %v3807 = vpack.c.b16 %v3767, %v3763
    %v3808 = vpack.c.b16 %v3768, %v3764
    %v3809 = vpack.c.b16 %v3769, %v3765
    %v3810 = vpack.c.b16 %v3774, %v3770
    %v3811 = vpack.c.b16 %v3775, %v3771
    %v3812 = vpack.c.b16 %v3776, %v3772
    %v3813 = vpack.c.b16 %v3777, %v3773
    %v3814 = vpack.c.b16 %v3782, %v3778
    %v3815 = vpack.c.b16 %v3783, %v3779
    %v3816 = vpack.c.b16 %v3784, %v3780
    %v3817 = vpack.c.b16 %v3785, %v3781
    %3850 = vmatprep.subr.bf16.mxu0 %v3787
    %3851 = vmatpush1.bf16.msra.mxu0 %v3786
    %3852 = vmatprep.subr.bf16.mxu0 %v3791
    %3853 = vmatpush1.bf16.msra.mxu0 %v3790
    %3854 = vmatprep.subr.bf16.mxu0 %v3795
    %3855 = vmatpush1.bf16.msra.mxu0 %v3794
    %3856 = vmatprep.subr.bf16.mxu0 %v3799
    %3857 = vmatpush1.bf16.msra.mxu0 %v3798
    %3858 = vmatprep.subr.bf16.mxu0 %v3803
    %3859 = vmatpush1.bf16.msra.mxu0 %v3802
    %3860 = vmatprep.subr.bf16.mxu0 %v3807
    %3861 = vmatpush1.bf16.msra.mxu0 %v3806
    %3862 = vmatprep.subr.bf16.mxu0 %v3811
    %3863 = vmatpush1.bf16.msra.mxu0 %v3810
    %3864 = vmatprep.subr.bf16.mxu0 %v3815
    %3865 = vmatpush1.bf16.msra.mxu0 %v3814
    %3866 = vmatprep.subr.bf16.mxu0 0
    %3867 = vmatpush1.bf16.msra.mxu0 0
    %3868 = vmatprep.subr.bf16.mxu0 0
    %3869 = vmatpush1.bf16.msra.mxu0 0
    %3870 = vmatprep.subr.bf16.mxu0 0
    %3871 = vmatpush1.bf16.msra.mxu0 0
    %3872 = vmatprep.subr.bf16.mxu0 0
    %3873 = vmatpush1.bf16.msra.mxu0 0
    %3874 = vmatprep.subr.bf16.mxu0 0
    %3875 = vmatpush1.bf16.msra.mxu0 0
    %3876 = vmatprep.subr.bf16.mxu0 0
    %3877 = vmatpush1.bf16.msra.mxu0 0
    %3878 = vmatprep.subr.bf16.mxu0 0
    %3879 = vmatpush1.bf16.msra.mxu0 0
    %3880 = vmatprep.subr.bf16.mxu0 0
    %3881 = vmatpush1.bf16.msra.mxu0 0
    %3882 = vmatprep.mubr.bf16.mxu0 0
    %3883 = vmatmul.mubr.bf16.gmra.mrb[0].mxu0 %v3657
    %v3884 = vpop.f32.mrb[0].mxu0
    %v3885 = vadd.f32 0.0, %v3884
    %v3886 = vpop.f32.mrb[0].mxu0
    %v3887 = vadd.f32 0.0, %v3886
    %v3888 = vpop.f32.mrb[0].mxu0
    %v3889 = vpop.f32.mrb[0].mxu0
    %3890 = vdwg.mxu0
    %3891 = vmatprep.subr.bf16.mxu0 %v3789
    %3892 = vmatpush1.bf16.msra.mxu0 %v3788
    %3893 = vmatprep.subr.bf16.mxu0 %v3793
    %3894 = vmatpush1.bf16.msra.mxu0 %v3792
    %3895 = vmatprep.subr.bf16.mxu0 %v3797
    %3896 = vmatpush1.bf16.msra.mxu0 %v3796
    %3897 = vmatprep.subr.bf16.mxu0 %v3801
    %3898 = vmatpush1.bf16.msra.mxu0 %v3800
    %3899 = vmatprep.subr.bf16.mxu0 %v3805
    %3900 = vmatpush1.bf16.msra.mxu0 %v3804
    %3901 = vmatprep.subr.bf16.mxu0 %v3809
    %3902 = vmatpush1.bf16.msra.mxu0 %v3808
    %3903 = vmatprep.subr.bf16.mxu0 %v3813
    %3904 = vmatpush1.bf16.msra.mxu0 %v3812
    %3905 = vmatprep.subr.bf16.mxu0 %v3817
    %3906 = vmatpush1.bf16.msra.mxu0 %v3816
    %3907 = vmatprep.subr.bf16.mxu0 0
    %3908 = vmatpush1.bf16.msra.mxu0 0
    %3909 = vmatprep.subr.bf16.mxu0 0
    %3910 = vmatpush1.bf16.msra.mxu0 0
    %3911 = vmatprep.subr.bf16.mxu0 0
    %3912 = vmatpush1.bf16.msra.mxu0 0
    %3913 = vmatprep.subr.bf16.mxu0 0
    %3914 = vmatpush1.bf16.msra.mxu0 0
    %3915 = vmatprep.subr.bf16.mxu0 0
    %3916 = vmatpush1.bf16.msra.mxu0 0
    %3917 = vmatprep.subr.bf16.mxu0 0
    %3918 = vmatpush1.bf16.msra.mxu0 0
    %3919 = vmatprep.subr.bf16.mxu0 0
    %3920 = vmatpush1.bf16.msra.mxu0 0
    %3921 = vmatprep.subr.bf16.mxu0 0
    %3922 = vmatpush1.bf16.msra.mxu0 0
    %3923 = vmatprep.mubr.bf16.mxu0 0
    %3924 = vmatmul.mubr.bf16.gmra.mrb[0].mxu0 %v3657
    %v3925 = vpop.f32.mrb[0].mxu0
    %v3926 = vadd.f32 0.0, %v3925
    %v3927 = vpop.f32.mrb[0].mxu0
    %v3928 = vadd.f32 0.0, %v3927
    %v3929 = vpop.f32.mrb[0].mxu0
    %v3930 = vpop.f32.mrb[0].mxu0
    %3931 = vdwg.mxu0
    %v3932 = vadd.f32 %v3653, %v3885
    %v3933 = vadd.f32 %v3654, %v3887
    %v3934 = vadd.f32 %v3655, %v3926
    %v3935 = vadd.f32 %v3656, %v3928
    %v3936 = vxor.u32 %v3932, 2147483648
    %v3937 = vmul.f32 %v3936, 1.442695
    %v3938 = vpow.pop %v3937
    %v3939 = vadd.f32 %v3938, 1.0
    %v3940 = vrcp.pop %v3939
    %v3941 = vmul.f32 1.0, %v3940
    %v3942 = vxor.u32 %v3933, 2147483648
    %v3943 = vmul.f32 %v3942, 1.442695
    %v3944 = vpow.pop %v3943
    %v3945 = vadd.f32 %v3944, 1.0
    %v3946 = vrcp.pop %v3945
    %v3947 = vmul.f32 1.0, %v3946
    %v3948 = vtanh.pop %v3934
    %v3949 = vxor.u32 %v3935, 2147483648
    %v3950 = vmul.f32 %v3949, 1.442695
    %v3951 = vpow.pop %v3950
    %v3952 = vadd.f32 %v3951, 1.0
    %v3953 = vrcp.pop %v3952
    %v3954 = vmul.f32 1.0, %v3953
    %v3955 = vmul.f32 %v3947, %v3456
    %v3956 = vmul.f32 %v3941, %v3948
    %v3957 = vadd.f32 %v3955, %v3956
    %v3958 = vtanh.pop %v3957
    %v3959 = vmul.f32 %v3954, %v3958
    %v3960 = vpack.c.bf16 %v3651, %v3651
    %v3961 = vld [vmem:[#allocation4] sm:$0xff]
    %v3962 = vld [vmem:[#allocation4 + $0x8] sm:$0xff]
    %v3963 = vld [vmem:[#allocation4 + $0x10] sm:$0xff]
    %v3964 = vld [vmem:[#allocation4 + $0x18] sm:$0xff]
    %v3965 = vld [vmem:[#allocation4 + $0x20] sm:$0xff]
    %v3966 = vld [vmem:[#allocation4 + $0x28] sm:$0xff]
    %v3967 = vld [vmem:[#allocation4 + $0x30] sm:$0xff]
    %v3968 = vld [vmem:[#allocation4 + $0x38] sm:$0xff]
    %v3969 = vld [vmem:[#allocation4 + $0x40] sm:$0xff]
    %v3970 = vld [vmem:[#allocation4 + $0x48] sm:$0xff]
    %v3971 = vld [vmem:[#allocation4 + $0x50] sm:$0xff]
    %v3972 = vld [vmem:[#allocation4 + $0x58] sm:$0xff]
    %v3973 = vld [vmem:[#allocation4 + $0x60] sm:$0xff]
    %v3974 = vld [vmem:[#allocation4 + $0x68] sm:$0xff]
    %v3975 = vld [vmem:[#allocation4 + $0x70] sm:$0xff]
    %v3976 = vld [vmem:[#allocation4 + $0x78] sm:$0xff]
    %v3977 = vld [vmem:[#allocation4 + $0x80] sm:$0xff]
    %v3978 = vld [vmem:[#allocation4 + $0x88] sm:$0xff]
    %v3979 = vld [vmem:[#allocation4 + $0x90] sm:$0xff]
    %v3980 = vld [vmem:[#allocation4 + $0x98] sm:$0xff]
    %v3981 = vld [vmem:[#allocation4 + $0xa0] sm:$0xff]
    %v3982 = vld [vmem:[#allocation4 + $0xa8] sm:$0xff]
    %v3983 = vld [vmem:[#allocation4 + $0xb0] sm:$0xff]
    %v3984 = vld [vmem:[#allocation4 + $0xb8] sm:$0xff]
    %v3985 = vld [vmem:[#allocation4 + $0xc0] sm:$0xff]
    %v3986 = vld [vmem:[#allocation4 + $0xc8] sm:$0xff]
    %v3987 = vld [vmem:[#allocation4 + $0xd0] sm:$0xff]
    %v3988 = vld [vmem:[#allocation4 + $0xd8] sm:$0xff]
    %v3989 = vld [vmem:[#allocation4 + $0xe0] sm:$0xff]
    %v3990 = vld [vmem:[#allocation4 + $0xe8] sm:$0xff]
    %v3991 = vld [vmem:[#allocation4 + $0xf0] sm:$0xff]
    %v3992 = vld [vmem:[#allocation4 + $0xf8] sm:$0xff]
    %v3993 = vld [vmem:[#allocation4 + $0x100] sm:$0xff]
    %v3994 = vld [vmem:[#allocation4 + $0x108] sm:$0xff]
    %v3995 = vld [vmem:[#allocation4 + $0x110] sm:$0xff]
    %v3996 = vld [vmem:[#allocation4 + $0x118] sm:$0xff]
    %v3997 = vld [vmem:[#allocation4 + $0x120] sm:$0xff]
    %v3998 = vld [vmem:[#allocation4 + $0x128] sm:$0xff]
    %v3999 = vld [vmem:[#allocation4 + $0x130] sm:$0xff]
    %v4000 = vld [vmem:[#allocation4 + $0x138] sm:$0xff]
    %v4001 = vld [vmem:[#allocation4 + $0x140] sm:$0xff]
    %v4002 = vld [vmem:[#allocation4 + $0x148] sm:$0xff]
    %v4003 = vld [vmem:[#allocation4 + $0x150] sm:$0xff]
    %v4004 = vld [vmem:[#allocation4 + $0x158] sm:$0xff]
    %v4005 = vld [vmem:[#allocation4 + $0x160] sm:$0xff]
    %v4006 = vld [vmem:[#allocation4 + $0x168] sm:$0xff]
    %v4007 = vld [vmem:[#allocation4 + $0x170] sm:$0xff]
    %v4008 = vld [vmem:[#allocation4 + $0x178] sm:$0xff]
    %v4009 = vld [vmem:[#allocation4 + $0x180] sm:$0xff]
    %v4010 = vld [vmem:[#allocation4 + $0x188] sm:$0xff]
    %v4011 = vld [vmem:[#allocation4 + $0x190] sm:$0xff]
    %v4012 = vld [vmem:[#allocation4 + $0x198] sm:$0xff]
    %v4013 = vld [vmem:[#allocation4 + $0x1a0] sm:$0xff]
    %v4014 = vld [vmem:[#allocation4 + $0x1a8] sm:$0xff]
    %v4015 = vld [vmem:[#allocation4 + $0x1b0] sm:$0xff]
    %v4016 = vld [vmem:[#allocation4 + $0x1b8] sm:$0xff]
    %v4017 = vld [vmem:[#allocation4 + $0x1c0] sm:$0xff]
    %v4018 = vld [vmem:[#allocation4 + $0x1c8] sm:$0xff]
    %v4019 = vld [vmem:[#allocation4 + $0x1d0] sm:$0xff]
    %v4020 = vld [vmem:[#allocation4 + $0x1d8] sm:$0xff]
    %v4021 = vld [vmem:[#allocation4 + $0x1e0] sm:$0xff]
    %v4022 = vld [vmem:[#allocation4 + $0x1e8] sm:$0xff]
    %v4023 = vld [vmem:[#allocation4 + $0x1f0] sm:$0xff]
    %v4024 = vld [vmem:[#allocation4 + $0x1f8] sm:$0xff]
    %v4025 = vld [vmem:[%s6] sm:$0xf]
    %v4027 = vlaneseq
    %v4028 = vshrl.u32 %v4027, 7
    %v4029 = vsub.s32 0, %v4028
    %v4030 = vrot.slane %v4025, %v4029
    %v4031 = vlaneseq
    %v4032 = vshrl.u32 %v4031, 7
    %v4033 = vsub.s32 1, %v4032
    %v4034 = vrot.slane %v4025, %v4033
    %v4035 = vlaneseq
    %v4036 = vshrl.u32 %v4035, 7
    %v4037 = vsub.s32 2, %v4036
    %v4038 = vrot.slane %v4025, %v4037
    %v4039 = vlaneseq
    %v4040 = vshrl.u32 %v4039, 7
    %v4041 = vsub.s32 3, %v4040
    %v4042 = vrot.slane %v4025, %v4041
    %4047 = vmatprep.subr.bf16.mxu0 %v3962
    %4048 = vmatpush1.bf16.msra.mxu0 %v3961
    %4049 = vmatprep.subr.bf16.mxu0 %v3966
    %4050 = vmatpush1.bf16.msra.mxu0 %v3965
    %4051 = vmatprep.subr.bf16.mxu0 %v3970
    %4052 = vmatpush1.bf16.msra.mxu0 %v3969
    %4053 = vmatprep.subr.bf16.mxu0 %v3974
    %4054 = vmatpush1.bf16.msra.mxu0 %v3973
    %4055 = vmatprep.subr.bf16.mxu0 %v3978
    %4056 = vmatpush1.bf16.msra.mxu0 %v3977
    %4057 = vmatprep.subr.bf16.mxu0 %v3982
    %4058 = vmatpush1.bf16.msra.mxu0 %v3981
    %4059 = vmatprep.subr.bf16.mxu0 %v3986
    %4060 = vmatpush1.bf16.msra.mxu0 %v3985
    %4061 = vmatprep.subr.bf16.mxu0 %v3990
    %4062 = vmatpush1.bf16.msra.mxu0 %v3989
    %4063 = vmatprep.subr.bf16.mxu0 %v3994
    %4064 = vmatpush1.bf16.msra.mxu0 %v3993
    %4065 = vmatprep.subr.bf16.mxu0 %v3998
    %4066 = vmatpush1.bf16.msra.mxu0 %v3997
    %4067 = vmatprep.subr.bf16.mxu0 %v4002
    %4068 = vmatpush1.bf16.msra.mxu0 %v4001
    %4069 = vmatprep.subr.bf16.mxu0 %v4006
    %4070 = vmatpush1.bf16.msra.mxu0 %v4005
    %4071 = vmatprep.subr.bf16.mxu0 %v4010
    %4072 = vmatpush1.bf16.msra.mxu0 %v4009
    %4073 = vmatprep.subr.bf16.mxu0 %v4014
    %4074 = vmatpush1.bf16.msra.mxu0 %v4013
    %4075 = vmatprep.subr.bf16.mxu0 %v4018
    %4076 = vmatpush1.bf16.msra.mxu0 %v4017
    %4077 = vmatprep.subr.bf16.mxu0 %v4022
    %4078 = vmatpush1.bf16.msra.mxu0 %v4021
    %4079 = vmatprep.mubr.bf16.mxu0 %v3960
    %4080 = vmatmul.mubr.bf16.gmra.mrb[0].mxu0 %v3657
    %v4081 = vpop.f32.mrb[0].mxu0
    %v4082 = vadd.f32 %v4030, %v4081
    %v4083 = vpop.f32.mrb[0].mxu0
    %v4084 = vadd.f32 %v4034, %v4083
    %v4085 = vpop.f32.mrb[0].mxu0
    %v4086 = vpop.f32.mrb[0].mxu0
    %4087 = vdwg.mxu0
    %4088 = vmatprep.subr.bf16.mxu0 %v3964
    %4089 = vmatpush1.bf16.msra.mxu0 %v3963
    %4090 = vmatprep.subr.bf16.mxu0 %v3968
    %4091 = vmatpush1.bf16.msra.mxu0 %v3967
    %4092 = vmatprep.subr.bf16.mxu0 %v3972
    %4093 = vmatpush1.bf16.msra.mxu0 %v3971
    %4094 = vmatprep.subr.bf16.mxu0 %v3976
    %4095 = vmatpush1.bf16.msra.mxu0 %v3975
    %4096 = vmatprep.subr.bf16.mxu0 %v3980
    %4097 = vmatpush1.bf16.msra.mxu0 %v3979
    %4098 = vmatprep.subr.bf16.mxu0 %v3984
    %4099 = vmatpush1.bf16.msra.mxu0 %v3983
    %4100 = vmatprep.subr.bf16.mxu0 %v3988
    %4101 = vmatpush1.bf16.msra.mxu0 %v3987
    %4102 = vmatprep.subr.bf16.mxu0 %v3992
    %4103 = vmatpush1.bf16.msra.mxu0 %v3991
    %4104 = vmatprep.subr.bf16.mxu0 %v3996
    %4105 = vmatpush1.bf16.msra.mxu0 %v3995
    %4106 = vmatprep.subr.bf16.mxu0 %v4000
    %4107 = vmatpush1.bf16.msra.mxu0 %v3999
    %4108 = vmatprep.subr.bf16.mxu0 %v4004
    %4109 = vmatpush1.bf16.msra.mxu0 %v4003
    %4110 = vmatprep.subr.bf16.mxu0 %v4008
    %4111 = vmatpush1.bf16.msra.mxu0 %v4007
    %4112 = vmatprep.subr.bf16.mxu0 %v4012
    %4113 = vmatpush1.bf16.msra.mxu0 %v4011
    %4114 = vmatprep.subr.bf16.mxu0 %v4016
    %4115 = vmatpush1.bf16.msra.mxu0 %v4015
    %4116 = vmatprep.subr.bf16.mxu0 %v4020
    %4117 = vmatpush1.bf16.msra.mxu0 %v4019
    %4118 = vmatprep.subr.bf16.mxu0 %v4024
    %4119 = vmatpush1.bf16.msra.mxu0 %v4023
    %4120 = vmatprep.mubr.bf16.mxu0 %v3960
    %4121 = vmatmul.mubr.bf16.gmra.mrb[0].mxu0 %v3657
    %v4122 = vpop.f32.mrb[0].mxu0
    %v4123 = vadd.f32 %v4038, %v4122
    %v4124 = vpop.f32.mrb[0].mxu0
    %v4125 = vadd.f32 %v4042, %v4124
    %v4126 = vpop.f32.mrb[0].mxu0
    %v4127 = vpop.f32.mrb[0].mxu0
    %4128 = vdwg.mxu0
    %v4129 = vxor.u32 %v4082, 2147483648
    %v4130 = vmul.f32 %v4129, 1.442695
    %v4131 = vpow.pop %v4130
    %v4132 = vadd.f32 %v4131, 1.0
    %v4133 = vrcp.pop %v4132
    %v4134 = vmul.f32 1.0, %v4133
    %v4135 = vxor.u32 %v4084, 2147483648
    %v4136 = vmul.f32 %v4135, 1.442695
    %v4137 = vpow.pop %v4136
    %v4138 = vadd.f32 %v4137, 1.0
    %v4139 = vrcp.pop %v4138
    %v4140 = vmul.f32 1.0, %v4139
    %v4141 = vtanh.pop %v4123
    %v4142 = vxor.u32 %v4125, 2147483648
    %v4143 = vmul.f32 %v4142, 1.442695
    %v4144 = vpow.pop %v4143
    %v4145 = vadd.f32 %v4144, 1.0
    %v4146 = vrcp.pop %v4145
    %v4147 = vmul.f32 1.0, %v4146
    %v4148 = vmul.f32 %v4140, %v3649
    %v4149 = vmul.f32 %v4134, %v4141
    %v4150 = vadd.f32 %v4148, %v4149
    %v4151 = vtanh.pop %v4150
    %v4152 = vmul.f32 %v4147, %v4151
    %4153 = vst [vmem:[#allocation3 + $0x28] sm:$0xff] %v4152
    %v4154 = vld [vmem:[#allocation2 + $0xe0] sm:$0xff]
    %v4155 = vld [vmem:[#allocation2 + $0xe8] sm:$0xff]
    %v4156 = vld [vmem:[#allocation2 + $0xf0] sm:$0xff]
    %v4157 = vld [vmem:[#allocation2 + $0xf8] sm:$0xff]
    %v4158 = vpack.c.bf16 %v3959, %v3959
    %v4159 = vld [vmem:[#allocation12] sm:$0xff]
    %v4160 = vld [vmem:[#allocation12 + $0x8] sm:$0xff]
    %v4161 = vld [vmem:[#allocation12 + $0x10] sm:$0xff]
    %v4162 = vld [vmem:[#allocation12 + $0x18] sm:$0xff]
    %v4163 = vld [vmem:[#allocation12 + $0x20] sm:$0xff]
    %v4164 = vld [vmem:[#allocation12 + $0x28] sm:$0xff]
    %v4165 = vld [vmem:[#allocation12 + $0x30] sm:$0xff]
    %v4166 = vld [vmem:[#allocation12 + $0x38] sm:$0xff]
    %v4167 = vld [vmem:[#allocation12 + $0x40] sm:$0xff]
    %v4168 = vld [vmem:[#allocation12 + $0x48] sm:$0xff]
    %v4169 = vld [vmem:[#allocation12 + $0x50] sm:$0xff]
    %v4170 = vld [vmem:[#allocation12 + $0x58] sm:$0xff]
    %v4171 = vld [vmem:[#allocation12 + $0x60] sm:$0xff]
    %v4172 = vld [vmem:[#allocation12 + $0x68] sm:$0xff]
    %v4173 = vld [vmem:[#allocation12 + $0x70] sm:$0xff]
    %v4174 = vld [vmem:[#allocation12 + $0x78] sm:$0xff]
    %v4175 = vld [vmem:[#allocation12 + $0x80] sm:$0xff]
    %v4176 = vld [vmem:[#allocation12 + $0x88] sm:$0xff]
    %v4177 = vld [vmem:[#allocation12 + $0x90] sm:$0xff]
    %v4178 = vld [vmem:[#allocation12 + $0x98] sm:$0xff]
    %v4179 = vld [vmem:[#allocation12 + $0xa0] sm:$0xff]
    %v4180 = vld [vmem:[#allocation12 + $0xa8] sm:$0xff]
    %v4181 = vld [vmem:[#allocation12 + $0xb0] sm:$0xff]
    %v4182 = vld [vmem:[#allocation12 + $0xb8] sm:$0xff]
    %v4183 = vld [vmem:[#allocation12 + $0xc0] sm:$0xff]
    %v4184 = vld [vmem:[#allocation12 + $0xc8] sm:$0xff]
    %v4185 = vld [vmem:[#allocation12 + $0xd0] sm:$0xff]
    %v4186 = vld [vmem:[#allocation12 + $0xd8] sm:$0xff]
    %v4187 = vld [vmem:[#allocation12 + $0xe0] sm:$0xff]
    %v4188 = vld [vmem:[#allocation12 + $0xe8] sm:$0xff]
    %v4189 = vld [vmem:[#allocation12 + $0xf0] sm:$0xff]
    %v4190 = vld [vmem:[#allocation12 + $0xf8] sm:$0xff]
    %v4223 = vunpack.c.l.b16 %v4159
    %v4224 = vunpack.c.h.b16 %v4159
    %v4225 = vunpack.c.l.b16 %v4160
    %v4226 = vunpack.c.h.b16 %v4160
    %v4227 = vunpack.c.l.b16 %v4161
    %v4228 = vunpack.c.h.b16 %v4161
    %v4229 = vunpack.c.l.b16 %v4162
    %v4230 = vunpack.c.h.b16 %v4162
    %v4231 = vunpack.c.l.b16 %v4163
    %v4232 = vunpack.c.h.b16 %v4163
    %v4233 = vunpack.c.l.b16 %v4164
    %v4234 = vunpack.c.h.b16 %v4164
    %v4235 = vunpack.c.l.b16 %v4165
    %v4236 = vunpack.c.h.b16 %v4165
    %v4237 = vunpack.c.l.b16 %v4166
    %v4238 = vunpack.c.h.b16 %v4166
    %v4239 = vunpack.c.l.b16 %v4167
    %v4240 = vunpack.c.h.b16 %v4167
    %v4241 = vunpack.c.l.b16 %v4168
    %v4242 = vunpack.c.h.b16 %v4168
    %v4243 = vunpack.c.l.b16 %v4169
    %v4244 = vunpack.c.h.b16 %v4169
    %v4245 = vunpack.c.l.b16 %v4170
    %v4246 = vunpack.c.h.b16 %v4170
    %v4247 = vunpack.c.l.b16 %v4171
    %v4248 = vunpack.c.h.b16 %v4171
    %v4249 = vunpack.c.l.b16 %v4172
    %v4250 = vunpack.c.h.b16 %v4172
    %v4251 = vunpack.c.l.b16 %v4173
    %v4252 = vunpack.c.h.b16 %v4173
    %v4253 = vunpack.c.l.b16 %v4174
    %v4254 = vunpack.c.h.b16 %v4174
    %v4255 = vunpack.c.l.b16 %v4175
    %v4256 = vunpack.c.h.b16 %v4175
    %v4257 = vunpack.c.l.b16 %v4176
    %v4258 = vunpack.c.h.b16 %v4176
    %v4259 = vunpack.c.l.b16 %v4177
    %v4260 = vunpack.c.h.b16 %v4177
    %v4261 = vunpack.c.l.b16 %v4178
    %v4262 = vunpack.c.h.b16 %v4178
    %v4263 = vunpack.c.l.b16 %v4179
    %v4264 = vunpack.c.h.b16 %v4179
    %v4265 = vunpack.c.l.b16 %v4180
    %v4266 = vunpack.c.h.b16 %v4180
    %v4267 = vunpack.c.l.b16 %v4181
    %v4268 = vunpack.c.h.b16 %v4181
    %v4269 = vunpack.c.l.b16 %v4182
    %v4270 = vunpack.c.h.b16 %v4182
    %v4271 = vunpack.c.l.b16 %v4183
    %v4272 = vunpack.c.h.b16 %v4183
    %v4273 = vunpack.c.l.b16 %v4184
    %v4274 = vunpack.c.h.b16 %v4184
    %v4275 = vunpack.c.l.b16 %v4185
    %v4276 = vunpack.c.h.b16 %v4185
    %v4277 = vunpack.c.l.b16 %v4186
    %v4278 = vunpack.c.h.b16 %v4186
    %v4279 = vunpack.c.l.b16 %v4187
    %v4280 = vunpack.c.h.b16 %v4187
    %v4281 = vunpack.c.l.b16 %v4188
    %v4282 = vunpack.c.h.b16 %v4188
    %v4283 = vunpack.c.l.b16 %v4189
    %v4284 = vunpack.c.h.b16 %v4189
    %v4285 = vunpack.c.l.b16 %v4190
    %v4286 = vunpack.c.h.b16 %v4190
    %v4287 = vpack.c.b16 %v4227, %v4223
    %v4288 = vpack.c.b16 %v4228, %v4224
    %v4289 = vpack.c.b16 %v4229, %v4225
    %v4290 = vpack.c.b16 %v4230, %v4226
    %v4291 = vpack.c.b16 %v4235, %v4231
    %v4292 = vpack.c.b16 %v4236, %v4232
    %v4293 = vpack.c.b16 %v4237, %v4233
    %v4294 = vpack.c.b16 %v4238, %v4234
    %v4295 = vpack.c.b16 %v4243, %v4239
    %v4296 = vpack.c.b16 %v4244, %v4240
    %v4297 = vpack.c.b16 %v4245, %v4241
    %v4298 = vpack.c.b16 %v4246, %v4242
    %v4299 = vpack.c.b16 %v4251, %v4247
    %v4300 = vpack.c.b16 %v4252, %v4248
    %v4301 = vpack.c.b16 %v4253, %v4249
    %v4302 = vpack.c.b16 %v4254, %v4250
    %v4303 = vpack.c.b16 %v4259, %v4255
    %v4304 = vpack.c.b16 %v4260, %v4256
    %v4305 = vpack.c.b16 %v4261, %v4257
    %v4306 = vpack.c.b16 %v4262, %v4258
    %v4307 = vpack.c.b16 %v4267, %v4263
    %v4308 = vpack.c.b16 %v4268, %v4264
    %v4309 = vpack.c.b16 %v4269, %v4265
    %v4310 = vpack.c.b16 %v4270, %v4266
    %v4311 = vpack.c.b16 %v4275, %v4271
    %v4312 = vpack.c.b16 %v4276, %v4272
    %v4313 = vpack.c.b16 %v4277, %v4273
    %v4314 = vpack.c.b16 %v4278, %v4274
    %v4315 = vpack.c.b16 %v4283, %v4279
    %v4316 = vpack.c.b16 %v4284, %v4280
    %v4317 = vpack.c.b16 %v4285, %v4281
    %v4318 = vpack.c.b16 %v4286, %v4282
    %4351 = vmatprep.subr.bf16.mxu0 %v4288
    %4352 = vmatpush1.bf16.msra.mxu0 %v4287
    %4353 = vmatprep.subr.bf16.mxu0 %v4292
    %4354 = vmatpush1.bf16.msra.mxu0 %v4291
    %4355 = vmatprep.subr.bf16.mxu0 %v4296
    %4356 = vmatpush1.bf16.msra.mxu0 %v4295
    %4357 = vmatprep.subr.bf16.mxu0 %v4300
    %4358 = vmatpush1.bf16.msra.mxu0 %v4299
    %4359 = vmatprep.subr.bf16.mxu0 %v4304
    %4360 = vmatpush1.bf16.msra.mxu0 %v4303
    %4361 = vmatprep.subr.bf16.mxu0 %v4308
    %4362 = vmatpush1.bf16.msra.mxu0 %v4307
    %4363 = vmatprep.subr.bf16.mxu0 %v4312
    %4364 = vmatpush1.bf16.msra.mxu0 %v4311
    %4365 = vmatprep.subr.bf16.mxu0 %v4316
    %4366 = vmatpush1.bf16.msra.mxu0 %v4315
    %4367 = vmatprep.subr.bf16.mxu0 0
    %4368 = vmatpush1.bf16.msra.mxu0 0
    %4369 = vmatprep.subr.bf16.mxu0 0
    %4370 = vmatpush1.bf16.msra.mxu0 0
    %4371 = vmatprep.subr.bf16.mxu0 0
    %4372 = vmatpush1.bf16.msra.mxu0 0
    %4373 = vmatprep.subr.bf16.mxu0 0
    %4374 = vmatpush1.bf16.msra.mxu0 0
    %4375 = vmatprep.subr.bf16.mxu0 0
    %4376 = vmatpush1.bf16.msra.mxu0 0
    %4377 = vmatprep.subr.bf16.mxu0 0
    %4378 = vmatpush1.bf16.msra.mxu0 0
    %4379 = vmatprep.subr.bf16.mxu0 0
    %4380 = vmatpush1.bf16.msra.mxu0 0
    %4381 = vmatprep.subr.bf16.mxu0 0
    %4382 = vmatpush1.bf16.msra.mxu0 0
    %4383 = vmatprep.mubr.bf16.mxu0 0
    %4384 = vmatmul.mubr.bf16.gmra.mrb[0].mxu0 %v4158
    %v4385 = vpop.f32.mrb[0].mxu0
    %v4386 = vadd.f32 0.0, %v4385
    %v4387 = vpop.f32.mrb[0].mxu0
    %v4388 = vadd.f32 0.0, %v4387
    %v4389 = vpop.f32.mrb[0].mxu0
    %v4390 = vpop.f32.mrb[0].mxu0
    %4391 = vdwg.mxu0
    %4392 = vmatprep.subr.bf16.mxu0 %v4290
    %4393 = vmatpush1.bf16.msra.mxu0 %v4289
    %4394 = vmatprep.subr.bf16.mxu0 %v4294
    %4395 = vmatpush1.bf16.msra.mxu0 %v4293
    %4396 = vmatprep.subr.bf16.mxu0 %v4298
    %4397 = vmatpush1.bf16.msra.mxu0 %v4297
    %4398 = vmatprep.subr.bf16.mxu0 %v4302
    %4399 = vmatpush1.bf16.msra.mxu0 %v4301
    %4400 = vmatprep.subr.bf16.mxu0 %v4306
    %4401 = vmatpush1.bf16.msra.mxu0 %v4305
    %4402 = vmatprep.subr.bf16.mxu0 %v4310
    %4403 = vmatpush1.bf16.msra.mxu0 %v4309
    %4404 = vmatprep.subr.bf16.mxu0 %v4314
    %4405 = vmatpush1.bf16.msra.mxu0 %v4313
    %4406 = vmatprep.subr.bf16.mxu0 %v4318
    %4407 = vmatpush1.bf16.msra.mxu0 %v4317
    %4408 = vmatprep.subr.bf16.mxu0 0
    %4409 = vmatpush1.bf16.msra.mxu0 0
    %4410 = vmatprep.subr.bf16.mxu0 0
    %4411 = vmatpush1.bf16.msra.mxu0 0
    %4412 = vmatprep.subr.bf16.mxu0 0
    %4413 = vmatpush1.bf16.msra.mxu0 0
    %4414 = vmatprep.subr.bf16.mxu0 0
    %4415 = vmatpush1.bf16.msra.mxu0 0
    %4416 = vmatprep.subr.bf16.mxu0 0
    %4417 = vmatpush1.bf16.msra.mxu0 0
    %4418 = vmatprep.subr.bf16.mxu0 0
    %4419 = vmatpush1.bf16.msra.mxu0 0
    %4420 = vmatprep.subr.bf16.mxu0 0
    %4421 = vmatpush1.bf16.msra.mxu0 0
    %4422 = vmatprep.subr.bf16.mxu0 0
    %4423 = vmatpush1.bf16.msra.mxu0 0
    %4424 = vmatprep.mubr.bf16.mxu0 0
    %4425 = vmatmul.mubr.bf16.gmra.mrb[0].mxu0 %v4158
    %v4426 = vpop.f32.mrb[0].mxu0
    %v4427 = vadd.f32 0.0, %v4426
    %v4428 = vpop.f32.mrb[0].mxu0
    %v4429 = vadd.f32 0.0, %v4428
    %v4430 = vpop.f32.mrb[0].mxu0
    %v4431 = vpop.f32.mrb[0].mxu0
    %4432 = vdwg.mxu0
    %v4433 = vadd.f32 %v4154, %v4386
    %v4434 = vadd.f32 %v4155, %v4388
    %v4435 = vadd.f32 %v4156, %v4427
    %v4436 = vadd.f32 %v4157, %v4429
    %v4437 = vxor.u32 %v4433, 2147483648
    %v4438 = vmul.f32 %v4437, 1.442695
    %v4439 = vpow.pop %v4438
    %v4440 = vadd.f32 %v4439, 1.0
    %v4441 = vrcp.pop %v4440
    %v4442 = vmul.f32 1.0, %v4441
    %v4443 = vxor.u32 %v4434, 2147483648
    %v4444 = vmul.f32 %v4443, 1.442695
    %v4445 = vpow.pop %v4444
    %v4446 = vadd.f32 %v4445, 1.0
    %v4447 = vrcp.pop %v4446
    %v4448 = vmul.f32 1.0, %v4447
    %v4449 = vtanh.pop %v4435
    %v4450 = vxor.u32 %v4436, 2147483648
    %v4451 = vmul.f32 %v4450, 1.442695
    %v4452 = vpow.pop %v4451
    %v4453 = vadd.f32 %v4452, 1.0
    %v4454 = vrcp.pop %v4453
    %v4455 = vmul.f32 1.0, %v4454
    %v4456 = vmul.f32 %v4448, %v3957
    %v4457 = vmul.f32 %v4442, %v4449
    %v4458 = vadd.f32 %v4456, %v4457
    %v4459 = vtanh.pop %v4458
    %v4460 = vmul.f32 %v4455, %v4459
    %v4461 = vpack.c.bf16 %v4152, %v4152
    %v4462 = vld [vmem:[#allocation4] sm:$0xff]
    %v4463 = vld [vmem:[#allocation4 + $0x8] sm:$0xff]
    %v4464 = vld [vmem:[#allocation4 + $0x10] sm:$0xff]
    %v4465 = vld [vmem:[#allocation4 + $0x18] sm:$0xff]
    %v4466 = vld [vmem:[#allocation4 + $0x20] sm:$0xff]
    %v4467 = vld [vmem:[#allocation4 + $0x28] sm:$0xff]
    %v4468 = vld [vmem:[#allocation4 + $0x30] sm:$0xff]
    %v4469 = vld [vmem:[#allocation4 + $0x38] sm:$0xff]
    %v4470 = vld [vmem:[#allocation4 + $0x40] sm:$0xff]
    %v4471 = vld [vmem:[#allocation4 + $0x48] sm:$0xff]
    %v4472 = vld [vmem:[#allocation4 + $0x50] sm:$0xff]
    %v4473 = vld [vmem:[#allocation4 + $0x58] sm:$0xff]
    %v4474 = vld [vmem:[#allocation4 + $0x60] sm:$0xff]
    %v4475 = vld [vmem:[#allocation4 + $0x68] sm:$0xff]
    %v4476 = vld [vmem:[#allocation4 + $0x70] sm:$0xff]
    %v4477 = vld [vmem:[#allocation4 + $0x78] sm:$0xff]
    %v4478 = vld [vmem:[#allocation4 + $0x80] sm:$0xff]
    %v4479 = vld [vmem:[#allocation4 + $0x88] sm:$0xff]
    %v4480 = vld [vmem:[#allocation4 + $0x90] sm:$0xff]
    %v4481 = vld [vmem:[#allocation4 + $0x98] sm:$0xff]
    %v4482 = vld [vmem:[#allocation4 + $0xa0] sm:$0xff]
    %v4483 = vld [vmem:[#allocation4 + $0xa8] sm:$0xff]
    %v4484 = vld [vmem:[#allocation4 + $0xb0] sm:$0xff]
    %v4485 = vld [vmem:[#allocation4 + $0xb8] sm:$0xff]
    %v4486 = vld [vmem:[#allocation4 + $0xc0] sm:$0xff]
    %v4487 = vld [vmem:[#allocation4 + $0xc8] sm:$0xff]
    %v4488 = vld [vmem:[#allocation4 + $0xd0] sm:$0xff]
    %v4489 = vld [vmem:[#allocation4 + $0xd8] sm:$0xff]
    %v4490 = vld [vmem:[#allocation4 + $0xe0] sm:$0xff]
    %v4491 = vld [vmem:[#allocation4 + $0xe8] sm:$0xff]
    %v4492 = vld [vmem:[#allocation4 + $0xf0] sm:$0xff]
    %v4493 = vld [vmem:[#allocation4 + $0xf8] sm:$0xff]
    %v4494 = vld [vmem:[#allocation4 + $0x100] sm:$0xff]
    %v4495 = vld [vmem:[#allocation4 + $0x108] sm:$0xff]
    %v4496 = vld [vmem:[#allocation4 + $0x110] sm:$0xff]
    %v4497 = vld [vmem:[#allocation4 + $0x118] sm:$0xff]
    %v4498 = vld [vmem:[#allocation4 + $0x120] sm:$0xff]
    %v4499 = vld [vmem:[#allocation4 + $0x128] sm:$0xff]
    %v4500 = vld [vmem:[#allocation4 + $0x130] sm:$0xff]
    %v4501 = vld [vmem:[#allocation4 + $0x138] sm:$0xff]
    %v4502 = vld [vmem:[#allocation4 + $0x140] sm:$0xff]
    %v4503 = vld [vmem:[#allocation4 + $0x148] sm:$0xff]
    %v4504 = vld [vmem:[#allocation4 + $0x150] sm:$0xff]
    %v4505 = vld [vmem:[#allocation4 + $0x158] sm:$0xff]
    %v4506 = vld [vmem:[#allocation4 + $0x160] sm:$0xff]
    %v4507 = vld [vmem:[#allocation4 + $0x168] sm:$0xff]
    %v4508 = vld [vmem:[#allocation4 + $0x170] sm:$0xff]
    %v4509 = vld [vmem:[#allocation4 + $0x178] sm:$0xff]
    %v4510 = vld [vmem:[#allocation4 + $0x180] sm:$0xff]
    %v4511 = vld [vmem:[#allocation4 + $0x188] sm:$0xff]
    %v4512 = vld [vmem:[#allocation4 + $0x190] sm:$0xff]
    %v4513 = vld [vmem:[#allocation4 + $0x198] sm:$0xff]
    %v4514 = vld [vmem:[#allocation4 + $0x1a0] sm:$0xff]
    %v4515 = vld [vmem:[#allocation4 + $0x1a8] sm:$0xff]
    %v4516 = vld [vmem:[#allocation4 + $0x1b0] sm:$0xff]
    %v4517 = vld [vmem:[#allocation4 + $0x1b8] sm:$0xff]
    %v4518 = vld [vmem:[#allocation4 + $0x1c0] sm:$0xff]
    %v4519 = vld [vmem:[#allocation4 + $0x1c8] sm:$0xff]
    %v4520 = vld [vmem:[#allocation4 + $0x1d0] sm:$0xff]
    %v4521 = vld [vmem:[#allocation4 + $0x1d8] sm:$0xff]
    %v4522 = vld [vmem:[#allocation4 + $0x1e0] sm:$0xff]
    %v4523 = vld [vmem:[#allocation4 + $0x1e8] sm:$0xff]
    %v4524 = vld [vmem:[#allocation4 + $0x1f0] sm:$0xff]
    %v4525 = vld [vmem:[#allocation4 + $0x1f8] sm:$0xff]
    %v4526 = vld [vmem:[%s6] sm:$0xf]
    %v4528 = vlaneseq
    %v4529 = vshrl.u32 %v4528, 7
    %v4530 = vsub.s32 0, %v4529
    %v4531 = vrot.slane %v4526, %v4530
    %v4532 = vlaneseq
    %v4533 = vshrl.u32 %v4532, 7
    %v4534 = vsub.s32 1, %v4533
    %v4535 = vrot.slane %v4526, %v4534
    %v4536 = vlaneseq
    %v4537 = vshrl.u32 %v4536, 7
    %v4538 = vsub.s32 2, %v4537
    %v4539 = vrot.slane %v4526, %v4538
    %v4540 = vlaneseq
    %v4541 = vshrl.u32 %v4540, 7
    %v4542 = vsub.s32 3, %v4541
    %v4543 = vrot.slane %v4526, %v4542
    %4548 = vmatprep.subr.bf16.mxu0 %v4463
    %4549 = vmatpush1.bf16.msra.mxu0 %v4462
    %4550 = vmatprep.subr.bf16.mxu0 %v4467
    %4551 = vmatpush1.bf16.msra.mxu0 %v4466
    %4552 = vmatprep.subr.bf16.mxu0 %v4471
    %4553 = vmatpush1.bf16.msra.mxu0 %v4470
    %4554 = vmatprep.subr.bf16.mxu0 %v4475
    %4555 = vmatpush1.bf16.msra.mxu0 %v4474
    %4556 = vmatprep.subr.bf16.mxu0 %v4479
    %4557 = vmatpush1.bf16.msra.mxu0 %v4478
    %4558 = vmatprep.subr.bf16.mxu0 %v4483
    %4559 = vmatpush1.bf16.msra.mxu0 %v4482
    %4560 = vmatprep.subr.bf16.mxu0 %v4487
    %4561 = vmatpush1.bf16.msra.mxu0 %v4486
    %4562 = vmatprep.subr.bf16.mxu0 %v4491
    %4563 = vmatpush1.bf16.msra.mxu0 %v4490
    %4564 = vmatprep.subr.bf16.mxu0 %v4495
    %4565 = vmatpush1.bf16.msra.mxu0 %v4494
    %4566 = vmatprep.subr.bf16.mxu0 %v4499
    %4567 = vmatpush1.bf16.msra.mxu0 %v4498
    %4568 = vmatprep.subr.bf16.mxu0 %v4503
    %4569 = vmatpush1.bf16.msra.mxu0 %v4502
    %4570 = vmatprep.subr.bf16.mxu0 %v4507
    %4571 = vmatpush1.bf16.msra.mxu0 %v4506
    %4572 = vmatprep.subr.bf16.mxu0 %v4511
    %4573 = vmatpush1.bf16.msra.mxu0 %v4510
    %4574 = vmatprep.subr.bf16.mxu0 %v4515
    %4575 = vmatpush1.bf16.msra.mxu0 %v4514
    %4576 = vmatprep.subr.bf16.mxu0 %v4519
    %4577 = vmatpush1.bf16.msra.mxu0 %v4518
    %4578 = vmatprep.subr.bf16.mxu0 %v4523
    %4579 = vmatpush1.bf16.msra.mxu0 %v4522
    %4580 = vmatprep.mubr.bf16.mxu0 %v4461
    %4581 = vmatmul.mubr.bf16.gmra.mrb[0].mxu0 %v4158
    %v4582 = vpop.f32.mrb[0].mxu0
    %v4583 = vadd.f32 %v4531, %v4582
    %v4584 = vpop.f32.mrb[0].mxu0
    %v4585 = vadd.f32 %v4535, %v4584
    %v4586 = vpop.f32.mrb[0].mxu0
    %v4587 = vpop.f32.mrb[0].mxu0
    %4588 = vdwg.mxu0
    %4589 = vmatprep.subr.bf16.mxu0 %v4465
    %4590 = vmatpush1.bf16.msra.mxu0 %v4464
    %4591 = vmatprep.subr.bf16.mxu0 %v4469
    %4592 = vmatpush1.bf16.msra.mxu0 %v4468
    %4593 = vmatprep.subr.bf16.mxu0 %v4473
    %4594 = vmatpush1.bf16.msra.mxu0 %v4472
    %4595 = vmatprep.subr.bf16.mxu0 %v4477
    %4596 = vmatpush1.bf16.msra.mxu0 %v4476
    %4597 = vmatprep.subr.bf16.mxu0 %v4481
    %4598 = vmatpush1.bf16.msra.mxu0 %v4480
    %4599 = vmatprep.subr.bf16.mxu0 %v4485
    %4600 = vmatpush1.bf16.msra.mxu0 %v4484
    %4601 = vmatprep.subr.bf16.mxu0 %v4489
    %4602 = vmatpush1.bf16.msra.mxu0 %v4488
    %4603 = vmatprep.subr.bf16.mxu0 %v4493
    %4604 = vmatpush1.bf16.msra.mxu0 %v4492
    %4605 = vmatprep.subr.bf16.mxu0 %v4497
    %4606 = vmatpush1.bf16.msra.mxu0 %v4496
    %4607 = vmatprep.subr.bf16.mxu0 %v4501
    %4608 = vmatpush1.bf16.msra.mxu0 %v4500
    %4609 = vmatprep.subr.bf16.mxu0 %v4505
    %4610 = vmatpush1.bf16.msra.mxu0 %v4504
    %4611 = vmatprep.subr.bf16.mxu0 %v4509
    %4612 = vmatpush1.bf16.msra.mxu0 %v4508
    %4613 = vmatprep.subr.bf16.mxu0 %v4513
    %4614 = vmatpush1.bf16.msra.mxu0 %v4512
    %4615 = vmatprep.subr.bf16.mxu0 %v4517
    %4616 = vmatpush1.bf16.msra.mxu0 %v4516
    %4617 = vmatprep.subr.bf16.mxu0 %v4521
    %4618 = vmatpush1.bf16.msra.mxu0 %v4520
    %4619 = vmatprep.subr.bf16.mxu0 %v4525
    %4620 = vmatpush1.bf16.msra.mxu0 %v4524
    %4621 = vmatprep.mubr.bf16.mxu0 %v4461
    %4622 = vmatmul.mubr.bf16.gmra.mrb[0].mxu0 %v4158
    %v4623 = vpop.f32.mrb[0].mxu0
    %v4624 = vadd.f32 %v4539, %v4623
    %v4625 = vpop.f32.mrb[0].mxu0
    %v4626 = vadd.f32 %v4543, %v4625
    %v4627 = vpop.f32.mrb[0].mxu0
    %v4628 = vpop.f32.mrb[0].mxu0
    %4629 = vdwg.mxu0
    %v4630 = vxor.u32 %v4583, 2147483648
    %v4631 = vmul.f32 %v4630, 1.442695
    %v4632 = vpow.pop %v4631
    %v4633 = vadd.f32 %v4632, 1.0
    %v4634 = vrcp.pop %v4633
    %v4635 = vmul.f32 1.0, %v4634
    %v4636 = vxor.u32 %v4585, 2147483648
    %v4637 = vmul.f32 %v4636, 1.442695
    %v4638 = vpow.pop %v4637
    %v4639 = vadd.f32 %v4638, 1.0
    %v4640 = vrcp.pop %v4639
    %v4641 = vmul.f32 1.0, %v4640
    %v4642 = vtanh.pop %v4624
    %v4643 = vxor.u32 %v4626, 2147483648
    %v4644 = vmul.f32 %v4643, 1.442695
    %v4645 = vpow.pop %v4644
    %v4646 = vadd.f32 %v4645, 1.0
    %v4647 = vrcp.pop %v4646
    %v4648 = vmul.f32 1.0, %v4647
    %v4649 = vmul.f32 %v4641, %v4150
    %v4650 = vmul.f32 %v4635, %v4642
    %v4651 = vadd.f32 %v4649, %v4650
    %v4652 = vtanh.pop %v4651
    %v4653 = vmul.f32 %v4648, %v4652
    %4654 = vst [vmem:[#allocation3 + $0x30] sm:$0xff] %v4653
    %v4655 = vpack.c.bf16 %v4460, %v4460
    %v4656 = vpack.c.bf16 %v4653, %v4653
    %v4657 = vld [vmem:[#allocation4] sm:$0xff]
    %v4658 = vld [vmem:[#allocation4 + $0x8] sm:$0xff]
    %v4659 = vld [vmem:[#allocation4 + $0x10] sm:$0xff]
    %v4660 = vld [vmem:[#allocation4 + $0x18] sm:$0xff]
    %v4661 = vld [vmem:[#allocation4 + $0x20] sm:$0xff]
    %v4662 = vld [vmem:[#allocation4 + $0x28] sm:$0xff]
    %v4663 = vld [vmem:[#allocation4 + $0x30] sm:$0xff]
    %v4664 = vld [vmem:[#allocation4 + $0x38] sm:$0xff]
    %v4665 = vld [vmem:[#allocation4 + $0x40] sm:$0xff]
    %v4666 = vld [vmem:[#allocation4 + $0x48] sm:$0xff]
    %v4667 = vld [vmem:[#allocation4 + $0x50] sm:$0xff]
    %v4668 = vld [vmem:[#allocation4 + $0x58] sm:$0xff]
    %v4669 = vld [vmem:[#allocation4 + $0x60] sm:$0xff]
    %v4670 = vld [vmem:[#allocation4 + $0x68] sm:$0xff]
    %v4671 = vld [vmem:[#allocation4 + $0x70] sm:$0xff]
    %v4672 = vld [vmem:[#allocation4 + $0x78] sm:$0xff]
    %v4673 = vld [vmem:[#allocation4 + $0x80] sm:$0xff]
    %v4674 = vld [vmem:[#allocation4 + $0x88] sm:$0xff]
    %v4675 = vld [vmem:[#allocation4 + $0x90] sm:$0xff]
    %v4676 = vld [vmem:[#allocation4 + $0x98] sm:$0xff]
    %v4677 = vld [vmem:[#allocation4 + $0xa0] sm:$0xff]
    %v4678 = vld [vmem:[#allocation4 + $0xa8] sm:$0xff]
    %v4679 = vld [vmem:[#allocation4 + $0xb0] sm:$0xff]
    %v4680 = vld [vmem:[#allocation4 + $0xb8] sm:$0xff]
    %v4681 = vld [vmem:[#allocation4 + $0xc0] sm:$0xff]
    %v4682 = vld [vmem:[#allocation4 + $0xc8] sm:$0xff]
    %v4683 = vld [vmem:[#allocation4 + $0xd0] sm:$0xff]
    %v4684 = vld [vmem:[#allocation4 + $0xd8] sm:$0xff]
    %v4685 = vld [vmem:[#allocation4 + $0xe0] sm:$0xff]
    %v4686 = vld [vmem:[#allocation4 + $0xe8] sm:$0xff]
    %v4687 = vld [vmem:[#allocation4 + $0xf0] sm:$0xff]
    %v4688 = vld [vmem:[#allocation4 + $0xf8] sm:$0xff]
    %v4689 = vld [vmem:[#allocation4 + $0x100] sm:$0xff]
    %v4690 = vld [vmem:[#allocation4 + $0x108] sm:$0xff]
    %v4691 = vld [vmem:[#allocation4 + $0x110] sm:$0xff]
    %v4692 = vld [vmem:[#allocation4 + $0x118] sm:$0xff]
    %v4693 = vld [vmem:[#allocation4 + $0x120] sm:$0xff]
    %v4694 = vld [vmem:[#allocation4 + $0x128] sm:$0xff]
    %v4695 = vld [vmem:[#allocation4 + $0x130] sm:$0xff]
    %v4696 = vld [vmem:[#allocation4 + $0x138] sm:$0xff]
    %v4697 = vld [vmem:[#allocation4 + $0x140] sm:$0xff]
    %v4698 = vld [vmem:[#allocation4 + $0x148] sm:$0xff]
    %v4699 = vld [vmem:[#allocation4 + $0x150] sm:$0xff]
    %v4700 = vld [vmem:[#allocation4 + $0x158] sm:$0xff]
    %v4701 = vld [vmem:[#allocation4 + $0x160] sm:$0xff]
    %v4702 = vld [vmem:[#allocation4 + $0x168] sm:$0xff]
    %v4703 = vld [vmem:[#allocation4 + $0x170] sm:$0xff]
    %v4704 = vld [vmem:[#allocation4 + $0x178] sm:$0xff]
    %v4705 = vld [vmem:[#allocation4 + $0x180] sm:$0xff]
    %v4706 = vld [vmem:[#allocation4 + $0x188] sm:$0xff]
    %v4707 = vld [vmem:[#allocation4 + $0x190] sm:$0xff]
    %v4708 = vld [vmem:[#allocation4 + $0x198] sm:$0xff]
    %v4709 = vld [vmem:[#allocation4 + $0x1a0] sm:$0xff]
    %v4710 = vld [vmem:[#allocation4 + $0x1a8] sm:$0xff]
    %v4711 = vld [vmem:[#allocation4 + $0x1b0] sm:$0xff]
    %v4712 = vld [vmem:[#allocation4 + $0x1b8] sm:$0xff]
    %v4713 = vld [vmem:[#allocation4 + $0x1c0] sm:$0xff]
    %v4714 = vld [vmem:[#allocation4 + $0x1c8] sm:$0xff]
    %v4715 = vld [vmem:[#allocation4 + $0x1d0] sm:$0xff]
    %v4716 = vld [vmem:[#allocation4 + $0x1d8] sm:$0xff]
    %v4717 = vld [vmem:[#allocation4 + $0x1e0] sm:$0xff]
    %v4718 = vld [vmem:[#allocation4 + $0x1e8] sm:$0xff]
    %v4719 = vld [vmem:[#allocation4 + $0x1f0] sm:$0xff]
    %v4720 = vld [vmem:[#allocation4 + $0x1f8] sm:$0xff]
    %v4721 = vld [vmem:[%s6] sm:$0xf]
    %v4723 = vlaneseq
    %v4724 = vshrl.u32 %v4723, 7
    %v4725 = vsub.s32 0, %v4724
    %v4726 = vrot.slane %v4721, %v4725
    %v4727 = vlaneseq
    %v4728 = vshrl.u32 %v4727, 7
    %v4729 = vsub.s32 1, %v4728
    %v4730 = vrot.slane %v4721, %v4729
    %v4731 = vlaneseq
    %v4732 = vshrl.u32 %v4731, 7
    %v4733 = vsub.s32 2, %v4732
    %v4734 = vrot.slane %v4721, %v4733
    %v4735 = vlaneseq
    %v4736 = vshrl.u32 %v4735, 7
    %v4737 = vsub.s32 3, %v4736
    %v4738 = vrot.slane %v4721, %v4737
    %4743 = vmatprep.subr.bf16.mxu0 %v4658
    %4744 = vmatpush1.bf16.msra.mxu0 %v4657
    %4745 = vmatprep.subr.bf16.mxu0 %v4662
    %4746 = vmatpush1.bf16.msra.mxu0 %v4661
    %4747 = vmatprep.subr.bf16.mxu0 %v4666
    %4748 = vmatpush1.bf16.msra.mxu0 %v4665
    %4749 = vmatprep.subr.bf16.mxu0 %v4670
    %4750 = vmatpush1.bf16.msra.mxu0 %v4669
    %4751 = vmatprep.subr.bf16.mxu0 %v4674
    %4752 = vmatpush1.bf16.msra.mxu0 %v4673
    %4753 = vmatprep.subr.bf16.mxu0 %v4678
    %4754 = vmatpush1.bf16.msra.mxu0 %v4677
    %4755 = vmatprep.subr.bf16.mxu0 %v4682
    %4756 = vmatpush1.bf16.msra.mxu0 %v4681
    %4757 = vmatprep.subr.bf16.mxu0 %v4686
    %4758 = vmatpush1.bf16.msra.mxu0 %v4685
    %4759 = vmatprep.subr.bf16.mxu0 %v4690
    %4760 = vmatpush1.bf16.msra.mxu0 %v4689
    %4761 = vmatprep.subr.bf16.mxu0 %v4694
    %4762 = vmatpush1.bf16.msra.mxu0 %v4693
    %4763 = vmatprep.subr.bf16.mxu0 %v4698
    %4764 = vmatpush1.bf16.msra.mxu0 %v4697
    %4765 = vmatprep.subr.bf16.mxu0 %v4702
    %4766 = vmatpush1.bf16.msra.mxu0 %v4701
    %4767 = vmatprep.subr.bf16.mxu0 %v4706
    %4768 = vmatpush1.bf16.msra.mxu0 %v4705
    %4769 = vmatprep.subr.bf16.mxu0 %v4710
    %4770 = vmatpush1.bf16.msra.mxu0 %v4709
    %4771 = vmatprep.subr.bf16.mxu0 %v4714
    %4772 = vmatpush1.bf16.msra.mxu0 %v4713
    %4773 = vmatprep.subr.bf16.mxu0 %v4718
    %4774 = vmatpush1.bf16.msra.mxu0 %v4717
    %4775 = vmatprep.mubr.bf16.mxu0 %v4656
    %4776 = vmatmul.mubr.bf16.gmra.mrb[0].mxu0 %v4655
    %v4777 = vpop.f32.mrb[0].mxu0
    %v4778 = vadd.f32 %v4726, %v4777
    %v4779 = vpop.f32.mrb[0].mxu0
    %v4780 = vadd.f32 %v4730, %v4779
    %v4781 = vpop.f32.mrb[0].mxu0
    %v4782 = vpop.f32.mrb[0].mxu0
    %4783 = vdwg.mxu0
    %4784 = vmatprep.subr.bf16.mxu0 %v4660
    %4785 = vmatpush1.bf16.msra.mxu0 %v4659
    %4786 = vmatprep.subr.bf16.mxu0 %v4664
    %4787 = vmatpush1.bf16.msra.mxu0 %v4663
    %4788 = vmatprep.subr.bf16.mxu0 %v4668
    %4789 = vmatpush1.bf16.msra.mxu0 %v4667
    %4790 = vmatprep.subr.bf16.mxu0 %v4672
    %4791 = vmatpush1.bf16.msra.mxu0 %v4671
    %4792 = vmatprep.subr.bf16.mxu0 %v4676
    %4793 = vmatpush1.bf16.msra.mxu0 %v4675
    %4794 = vmatprep.subr.bf16.mxu0 %v4680
    %4795 = vmatpush1.bf16.msra.mxu0 %v4679
    %4796 = vmatprep.subr.bf16.mxu0 %v4684
    %4797 = vmatpush1.bf16.msra.mxu0 %v4683
    %4798 = vmatprep.subr.bf16.mxu0 %v4688
    %4799 = vmatpush1.bf16.msra.mxu0 %v4687
    %4800 = vmatprep.subr.bf16.mxu0 %v4692
    %4801 = vmatpush1.bf16.msra.mxu0 %v4691
    %4802 = vmatprep.subr.bf16.mxu0 %v4696
    %4803 = vmatpush1.bf16.msra.mxu0 %v4695
    %4804 = vmatprep.subr.bf16.mxu0 %v4700
    %4805 = vmatpush1.bf16.msra.mxu0 %v4699
    %4806 = vmatprep.subr.bf16.mxu0 %v4704
    %4807 = vmatpush1.bf16.msra.mxu0 %v4703
    %4808 = vmatprep.subr.bf16.mxu0 %v4708
    %4809 = vmatpush1.bf16.msra.mxu0 %v4707
    %4810 = vmatprep.subr.bf16.mxu0 %v4712
    %4811 = vmatpush1.bf16.msra.mxu0 %v4711
    %4812 = vmatprep.subr.bf16.mxu0 %v4716
    %4813 = vmatpush1.bf16.msra.mxu0 %v4715
    %4814 = vmatprep.subr.bf16.mxu0 %v4720
    %4815 = vmatpush1.bf16.msra.mxu0 %v4719
    %4816 = vmatprep.mubr.bf16.mxu0 %v4656
    %4817 = vmatmul.mubr.bf16.gmra.mrb[0].mxu0 %v4655
    %v4818 = vpop.f32.mrb[0].mxu0
    %v4819 = vadd.f32 %v4734, %v4818
    %v4820 = vpop.f32.mrb[0].mxu0
    %v4821 = vadd.f32 %v4738, %v4820
    %v4822 = vpop.f32.mrb[0].mxu0
    %v4823 = vpop.f32.mrb[0].mxu0
    %4824 = vdwg.mxu0
    %v4825 = vxor.u32 %v4778, 2147483648
    %v4826 = vmul.f32 %v4825, 1.442695
    %v4827 = vpow.pop %v4826
    %v4828 = vadd.f32 %v4827, 1.0
    %v4829 = vrcp.pop %v4828
    %v4830 = vmul.f32 1.0, %v4829
    %v4831 = vxor.u32 %v4780, 2147483648
    %v4832 = vmul.f32 %v4831, 1.442695
    %v4833 = vpow.pop %v4832
    %v4834 = vadd.f32 %v4833, 1.0
    %v4835 = vrcp.pop %v4834
    %v4836 = vmul.f32 1.0, %v4835
    %v4837 = vtanh.pop %v4819
    %v4838 = vxor.u32 %v4821, 2147483648
    %v4839 = vmul.f32 %v4838, 1.442695
    %v4840 = vpow.pop %v4839
    %v4841 = vadd.f32 %v4840, 1.0
    %v4842 = vrcp.pop %v4841
    %v4843 = vmul.f32 1.0, %v4842
    %v4844 = vmul.f32 %v4836, %v4651
    %v4845 = vmul.f32 %v4830, %v4837
    %v4846 = vadd.f32 %v4844, %v4845
    %v4847 = vtanh.pop %v4846
    %v4848 = vmul.f32 %v4843, %v4847
    %4849 = vst [vmem:[#allocation3 + $0x38] sm:$0xff] %v4848
    %4850 = vst [vmem:[#allocation14] sm:$0xff] %v4460
    %4851 = vst [vmem:[#allocation16] sm:$0xff] %v4458
    %s4852 = scalar_lea.vmem [#allocation14], 8
    %4853 = vst [vmem:[%s4852] sm:$0xff] %v4848
    %s4854 = scalar_lea.vmem [#allocation16], 8
    %4855 = vst [vmem:[%s4854] sm:$0xff] %v4846
    %s4856 = smul.u32 4, 16
    %s4857 = smul.u32 %s4856, 2
    %s4858 = sshll.u32 %s4857, 4
    %4859 = dma.done %s116, %s4858
    %v4860 = vld [vmem:[#allocation3] sm:$0xff]
    %v4861 = vld [vmem:[#allocation3 + $0x8] sm:$0xff]
    %v4862 = vld [vmem:[#allocation3 + $0x10] sm:$0xff]
    %v4863 = vld [vmem:[#allocation3 + $0x18] sm:$0xff]
    %v4864 = vld [vmem:[#allocation3 + $0x20] sm:$0xff]
    %v4865 = vld [vmem:[#allocation3 + $0x28] sm:$0xff]
    %v4866 = vld [vmem:[#allocation3 + $0x30] sm:$0xff]
    %v4867 = vld [vmem:[#allocation3 + $0x38] sm:$0xff]
    %v4868 = vpack.c.bf16 %v4861, %v4860
    %v4869 = vpack.c.bf16 %v4863, %v4862
    %v4870 = vpack.c.bf16 %v4865, %v4864
    %v4871 = vpack.c.bf16 %v4867, %v4866
    %v4872 = vld [vmem:[#allocation5] sm:$0xff]
    %v4873 = vld [vmem:[#allocation5 + $0x8] sm:$0xff]
    %v4874 = vld [vmem:[#allocation5 + $0x10] sm:$0xff]
    %v4875 = vld [vmem:[#allocation5 + $0x18] sm:$0xff]
    %v4876 = vld [vmem:[#allocation5 + $0x20] sm:$0xff]
    %v4877 = vld [vmem:[#allocation5 + $0x28] sm:$0xff]
    %v4878 = vld [vmem:[#allocation5 + $0x30] sm:$0xff]
    %v4879 = vld [vmem:[#allocation5 + $0x38] sm:$0xff]
    %v4880 = vld [vmem:[#allocation5 + $0x40] sm:$0xff]
    %v4881 = vld [vmem:[#allocation5 + $0x48] sm:$0xff]
    %v4882 = vld [vmem:[#allocation5 + $0x50] sm:$0xff]
    %v4883 = vld [vmem:[#allocation5 + $0x58] sm:$0xff]
    %v4884 = vld [vmem:[#allocation5 + $0x60] sm:$0xff]
    %v4885 = vld [vmem:[#allocation5 + $0x68] sm:$0xff]
    %v4886 = vld [vmem:[#allocation5 + $0x70] sm:$0xff]
    %v4887 = vld [vmem:[#allocation5 + $0x78] sm:$0xff]
    %v4888 = vld [vmem:[%s8] sm:$0x3]
    %v4890 = vlaneseq
    %v4891 = vshrl.u32 %v4890, 7
    %v4892 = vsub.s32 0, %v4891
    %v4893 = vrot.slane %v4888, %v4892
    %v4894 = vlaneseq
    %v4895 = vshrl.u32 %v4894, 7
    %v4896 = vsub.s32 1, %v4895
    %v4897 = vrot.slane %v4888, %v4896
    %4900 = vmatprep.subr.bf16.mxu0 %v4873
    %4901 = vmatpush1.bf16.msra.mxu0 %v4872
    %4902 = vmatprep.subr.bf16.mxu0 %v4875
    %4903 = vmatpush1.bf16.msra.mxu0 %v4874
    %4904 = vmatprep.subr.bf16.mxu0 %v4877
    %4905 = vmatpush1.bf16.msra.mxu0 %v4876
    %4906 = vmatprep.subr.bf16.mxu0 %v4879
    %4907 = vmatpush1.bf16.msra.mxu0 %v4878
    %4908 = vmatprep.subr.bf16.mxu0 %v4881
    %4909 = vmatpush1.bf16.msra.mxu0 %v4880
    %4910 = vmatprep.subr.bf16.mxu0 %v4883
    %4911 = vmatpush1.bf16.msra.mxu0 %v4882
    %4912 = vmatprep.subr.bf16.mxu0 %v4885
    %4913 = vmatpush1.bf16.msra.mxu0 %v4884
    %4914 = vmatprep.subr.bf16.mxu0 %v4887
    %4915 = vmatpush1.bf16.msra.mxu0 %v4886
    %4916 = vmatprep.subr.bf16.mxu0 0
    %4917 = vmatpush1.bf16.msra.mxu0 0
    %4918 = vmatprep.subr.bf16.mxu0 0
    %4919 = vmatpush1.bf16.msra.mxu0 0
    %4920 = vmatprep.subr.bf16.mxu0 0
    %4921 = vmatpush1.bf16.msra.mxu0 0
    %4922 = vmatprep.subr.bf16.mxu0 0
    %4923 = vmatpush1.bf16.msra.mxu0 0
    %4924 = vmatprep.subr.bf16.mxu0 0
    %4925 = vmatpush1.bf16.msra.mxu0 0
    %4926 = vmatprep.subr.bf16.mxu0 0
    %4927 = vmatpush1.bf16.msra.mxu0 0
    %4928 = vmatprep.subr.bf16.mxu0 0
    %4929 = vmatpush1.bf16.msra.mxu0 0
    %4930 = vmatprep.subr.bf16.mxu0 0
    %4931 = vmatpush1.bf16.msra.mxu0 0
    %4932 = vmatprep.mubr.bf16.mxu0 0
    %4933 = vmatmul.mubr.bf16.gmra.mrb[0].mxu0 %v4868
    %v4934 = vpop.f32.mrb[0].mxu0
    %v4935 = vadd.f32 %v4893, %v4934
    %v4936 = vpop.f32.mrb[0].mxu0
    %v4937 = vadd.f32 %v4897, %v4936
    %v4938 = vpop.f32.mrb[0].mxu0
    %v4939 = vadd.f32 %v4893, %v4938
    %v4940 = vpop.f32.mrb[0].mxu0
    %v4941 = vadd.f32 %v4897, %v4940
    %4942 = vmatprep.mubr.bf16.mxu0 0
    %4943 = vmatmul.mubr.bf16.gmra.mrb[0].mxu0 %v4869
    %v4944 = vpop.f32.mrb[0].mxu0
    %v4945 = vadd.f32 %v4893, %v4944
    %v4946 = vpop.f32.mrb[0].mxu0
    %v4947 = vadd.f32 %v4897, %v4946
    %v4948 = vpop.f32.mrb[0].mxu0
    %v4949 = vadd.f32 %v4893, %v4948
    %v4950 = vpop.f32.mrb[0].mxu0
    %v4951 = vadd.f32 %v4897, %v4950
    %4952 = vmatprep.mubr.bf16.mxu0 0
    %4953 = vmatmul.mubr.bf16.gmra.mrb[0].mxu0 %v4870
    %v4954 = vpop.f32.mrb[0].mxu0
    %v4955 = vadd.f32 %v4893, %v4954
    %v4956 = vpop.f32.mrb[0].mxu0
    %v4957 = vadd.f32 %v4897, %v4956
    %v4958 = vpop.f32.mrb[0].mxu0
    %v4959 = vadd.f32 %v4893, %v4958
    %v4960 = vpop.f32.mrb[0].mxu0
    %v4961 = vadd.f32 %v4897, %v4960
    %4962 = vmatprep.mubr.bf16.mxu0 0
    %4963 = vmatmul.mubr.bf16.gmra.mrb[0].mxu0 %v4871
    %v4964 = vpop.f32.mrb[0].mxu0
    %v4965 = vadd.f32 %v4893, %v4964
    %v4966 = vpop.f32.mrb[0].mxu0
    %v4967 = vadd.f32 %v4897, %v4966
    %v4968 = vpop.f32.mrb[0].mxu0
    %v4969 = vadd.f32 %v4893, %v4968
    %v4970 = vpop.f32.mrb[0].mxu0
    %v4971 = vadd.f32 %v4897, %v4970
    %4972 = vdwg.mxu0
    %4973 = vst [vmem:[#allocation13] sm:$0xff] %v4935
    %4974 = vst [vmem:[#allocation13 + $0x8] sm:$0xff] %v4937
    %4975 = vst [vmem:[#allocation13 + $0x10] sm:$0xff] %v4939
    %4976 = vst [vmem:[#allocation13 + $0x18] sm:$0xff] %v4941
    %4977 = vst [vmem:[#allocation13 + $0x20] sm:$0xff] %v4945
    %4978 = vst [vmem:[#allocation13 + $0x28] sm:$0xff] %v4947
    %4979 = vst [vmem:[#allocation13 + $0x30] sm:$0xff] %v4949
    %4980 = vst [vmem:[#allocation13 + $0x38] sm:$0xff] %v4951
    %4981 = vst [vmem:[#allocation13 + $0x40] sm:$0xff] %v4955
    %4982 = vst [vmem:[#allocation13 + $0x48] sm:$0xff] %v4957
    %4983 = vst [vmem:[#allocation13 + $0x50] sm:$0xff] %v4959
    %4984 = vst [vmem:[#allocation13 + $0x58] sm:$0xff] %v4961
    %4985 = vst [vmem:[#allocation13 + $0x60] sm:$0xff] %v4965
    %4986 = vst [vmem:[#allocation13 + $0x68] sm:$0xff] %v4967
    %4987 = vst [vmem:[#allocation13 + $0x70] sm:$0xff] %v4969
    %4988 = vst [vmem:[#allocation13 + $0x78] sm:$0xff] %v4971
    // Predicated region
    $region50: #{nlp_model_forward.1} parent=1 // pred_check
      _
    $region51: #{nlp_model_forward.1} parent=1 // pred_check_branch
      %4990 = sbr.rel (0) target = $region53
    $region52: #{nlp_model_forward.1} parent=1 // pred_region
      %s4992 = ssub.s32 2048, 2048
      %4993 = vsyncadd [#allocation9], %s4992
      %s4994 = sshll.u32 [#allocation13], 4
      %s4995 = int_to_ptr.vmem [resolvable:$true] %s4994
      %5000 = dma.vmem_to_hbm [thread:$0]  %s4995, 2048, %s11, [#allocation9], 256, 256, 16
    $region53: #{nlp_model_forward.1} parent=1 // pred_fallthru
      _
    // Predicated region
    $region54: #{nlp_model_forward.1} parent=1 // pred_check
      _
    $region55: #{nlp_model_forward.1} parent=1 // pred_check_branch
      %5002 = sbr.rel (0) target = $region57
    $region56: #{nlp_model_forward.1} parent=1 // pred_region
      %s5004 = ssub.s32 256, 256
      %5005 = vsyncadd [#allocation15], %s5004
      %s5006 = sshll.u32 [#allocation14], 4
      %s5007 = int_to_ptr.vmem [resolvable:$true] %s5006
      %5012 = dma.vmem_to_hbm [thread:$0]  %s5007, 256, %s12, [#allocation15], 128, 128, 8
    $region57: #{nlp_model_forward.1} parent=1 // pred_fallthru
      _
    // Predicated region
    $region58: #{nlp_model_forward.1} parent=1 // pred_check
      _
    $region59: #{nlp_model_forward.1} parent=1 // pred_check_branch
      %5014 = sbr.rel (0) target = $region61
    $region60: #{nlp_model_forward.1} parent=1 // pred_region
      %s5016 = ssub.s32 256, 256
      %5017 = vsyncadd [#allocation15], %s5016
      %s5018 = sshll.u32 [#allocation16], 4
      %s5019 = int_to_ptr.vmem [resolvable:$true] %s5018
      %5024 = dma.vmem_to_hbm [thread:$0]  %s5019, 256, %s13, [#allocation15], 128, 128, 8
    $region61: #{nlp_model_forward.1} parent=1 // pred_fallthru
      _
    // Predicated region
    $region62: #{nlp_model_forward.1} parent=1 // pred_check
      _
    $region63: #{nlp_model_forward.1} parent=1 // pred_check_branch
      %5026 = sbr.rel (0) target = $region65
    $region64: #{nlp_model_forward.1} parent=1 // pred_region
      %5027 = dma.done [#allocation9], 2048
    $region65: #{nlp_model_forward.1} parent=1 // pred_fallthru
      _
    // Predicated region
    $region66: #{nlp_model_forward.1} parent=1 // pred_check
      _
    $region67: #{nlp_model_forward.1} parent=1 // pred_check_branch
      %5029 = sbr.rel (0) target = $region69
    $region68: #{nlp_model_forward.1} parent=1 // pred_region
      %5030 = dma.done [#allocation15], 256
    $region69: #{nlp_model_forward.1} parent=1 // pred_fallthru
      _
    // Predicated region
    $region70: #{nlp_model_forward.1} parent=1 // pred_check
      _
    $region71: #{nlp_model_forward.1} parent=1 // pred_check_branch
      %5032 = sbr.rel (0) target = $region73
    $region72: #{nlp_model_forward.1} parent=1 // pred_region
      %5033 = dma.done [#allocation15], 256
    $region73: #{nlp_model_forward.1} parent=1 // pred_fallthru
      _
    %5034 = vsyncpa [#allocation8], 1
    %5035 = vsyncpa [#allocation11], 1
    %5036 = vsyncpa [#allocation9], 1
    %5037 = vsyncpa [#allocation15], 1
  %5038 = vsyncmov [#allocation6]
  %s5039 = vpop.sfrf %5038
  %p5040 = scmp.eq.s32.totalorder %s5039, 0
  %p5041 = pneg %p5040
  %5043 = shalt.err (%p5041)
  %s5044 = scalar_lea.sflag [#allocation6], 1
  %5045 = vsyncmov %s5044
  %s5046 = vpop.sfrf %5045
  %p5047 = scmp.eq.s32.totalorder %s5046, 0
  %p5048 = pneg %p5047
  %5050 = shalt.err (%p5048)

</llo_original>
